<compile_context>
chip_gen: v7x
topology: tpu7x:2x2x1
jax: 0.10.0
libtpu: 0.0.40
codegen_flags: <defaults>
</compile_context>

<pallas_src>
import math

import jax
import jax.numpy as jnp
from jax import lax
from jax.experimental import pallas as pl
from jax.experimental.pallas import tpu as pltpu

EPS = 1e-12
POWER_ITERATIONS = 1


def _make_kernel(O, KH, KW, Wp, HWp):
    """Fused spectral-norm + conv kernel; static shapes closed over."""

    def kernel(wm_ref, wtap_ref, u_ref, b_ref, x_ref, y_ref, uo_ref, vo_ref):
        # ---- spectral normalization (tiny: (O, K) = (8, 36)) -----------------
        # Recomputed each grid step so the batch axis can be "parallel"
        # (no persistent scratch); cost hides entirely under the x DMA.
        w = wm_ref[...].astype(jnp.float32)                       # (O, K)
        u = u_ref[...].astype(jnp.float32)                        # (1, O)
        v = jnp.zeros((1, w.shape[1]), jnp.float32)               # overwritten below
        for _ in range(POWER_ITERATIONS):
            v = jnp.dot(u, w, precision=lax.Precision.HIGHEST,
                        preferred_element_type=jnp.float32)       # (1, K)
            v = v * (1.0 / (jnp.sqrt(jnp.sum(v * v)) + EPS))
            u = lax.dot_general(v, w, (((1,), (1,)), ((), ())),
                                precision=lax.Precision.HIGHEST,
                                preferred_element_type=jnp.float32)  # (1, O)
            u = u * (1.0 / (jnp.sqrt(jnp.sum(u * u)) + EPS))
        wv = lax.dot_general(v, w, (((1,), (1,)), ((), ())),
                             precision=lax.Precision.HIGHEST,
                             preferred_element_type=jnp.float32)     # (1, O)
        sigma = jnp.sum(u * wv)
        inv_sigma = 1.0 / sigma          # folded into the conv epilogue below
        uo_ref[0] = u.astype(uo_ref.dtype)
        vo_ref[0] = v.astype(vo_ref.dtype)

        # ---- conv hot path ---------------------------------------------------
        # x_ref block: (1, L, C) flat padded image (spatial on sublanes,
        # channels on lanes).  The window for filter tap (kh, kw) is the
        # contiguous row range [kh*Wp + kw, kh*Wp + kw + H*Wp): a plain sublane
        # slice -- no in-kernel im2col / reshape needed.
        acc = jnp.zeros((O, HWp), jnp.float32)
        for kh in range(KH):
            for kw in range(KW):
                off = kh * Wp + kw
                xs = x_ref[0, pl.ds(off, HWp), :]                 # (HWp, C)
                wk = wtap_ref[kh * KW + kw]                       # (O, C)
                # default MXU precision (single pass); accumulate in f32
                acc = acc + lax.dot_general(
                    wk, xs, (((1,), (1,)), ((), ())),
                    preferred_element_type=jnp.float32)           # (O, HWp)
        # Channel-major, lane-dense output block (O, H*Wp); bias + 1/sigma fused.
        y_ref[0] = (acc * inv_sigma + b_ref[...]).astype(y_ref.dtype)

    return kernel


@jax.jit
def spectral_norm_conv2d(x, weight, bias, u):
    """Forward of SpectralNorm(nn.Conv2d(C, O, k, padding=k//2, stride=1)).

    Returns (y, u_new, v_new): y is NCHW; u_new / v_new are the updated
    power-iteration vectors (torch mutates them in place on the module).
    """
    N, C, H, W = x.shape
    O, Ci, KH, KW = weight.shape
    assert Ci == C
    K = C * KH * KW
    ph, pw = KH // 2, KW // 2
    Wp = W + 2 * pw
    HWp = H * Wp

    # Flat padded, channels-last input: (N, L, C), L = (H + 2*ph + 1) * Wp.
    # The one extra bottom row gives enough slack that every tap's window
    # rows [kh*Wp + kw, kh*Wp + kw + H*Wp) stays in bounds of the flat image.
    x_pad = jnp.pad(x, ((0, 0), (0, 0), (ph, ph + 1), (pw, pw)))
    L = x_pad.shape[2] * Wp
    assert (KH - 1) * Wp + (KW - 1) + HWp <= L
    x_flat = x_pad.transpose(0, 2, 3, 1).reshape(N, L, C)

    w_mat = weight.reshape(O, K)                                        # power iteration
    w_tap = jnp.transpose(weight, (2, 3, 0, 1)).reshape(KH * KW, O, C)  # per-tap (O, C)
    b_col = bias.reshape(O, 1)
    u_row = u.reshape(1, O)

    kernel = _make_kernel(O, KH, KW, Wp, HWp)

    y_flat, u_out, v_out = pl.pallas_call(
        kernel,
        out_shape=(jax.ShapeDtypeStruct((N, O, HWp), jnp.float32),
                   jax.ShapeDtypeStruct((N, 1, O), jnp.float32),
                   jax.ShapeDtypeStruct((N, 1, K), jnp.float32)),
        grid_spec=pltpu.PrefetchScalarGridSpec(
            num_scalar_prefetch=0,
            grid=(N,),
            in_specs=[
                pl.BlockSpec((O, K), lambda n: (0, 0)),              # W matrix (VMEM resident)
                pl.BlockSpec((KH * KW, O, C), lambda n: (0, 0, 0)),  # per-tap weights (resident)
                pl.BlockSpec((1, O), lambda n: (0, 0)),              # u (resident)
                pl.BlockSpec((O, 1), lambda n: (0, 0)),              # bias (resident)
                pl.BlockSpec((1, L, C), lambda n: (n, 0, 0)),        # x tile for image n
            ],
            out_specs=(
                pl.BlockSpec((1, O, HWp), lambda n: (n, 0, 0)),
                pl.BlockSpec((1, 1, O), lambda n: (n, 0, 0)),
                pl.BlockSpec((1, 1, K), lambda n: (n, 0, 0)),
            ),
        ),
        compiler_params=pltpu.CompilerParams(
            dimension_semantics=("parallel",)),
    )(w_mat, w_tap, u_row, b_col, x_flat)

    # Drop the SAME-padding columns; output is already channel-major (NCHW),
    # so no NHWC -> NCHW transpose is needed.
    y = y_flat.reshape(N, O, H, Wp)[:, :, :, :W]
    return y, u_out[0, 0], v_out[0, 0]


def _reference(x, weight, bias, u):
    """Pure-JAX replica of SpectralNorm(Conv2d).forward (HIGHEST precision)."""
    hp = lax.Precision.HIGHEST
    O = weight.shape[0]
    w_mat = weight.reshape(O, -1)
    v = jnp.dot(w_mat.T, u, precision=hp)
    v = v / (jnp.linalg.norm(v) + EPS)
    u2 = jnp.dot(w_mat, v, precision=hp)
    u2 = u2 / (jnp.linalg.norm(u2) + EPS)
    sigma = jnp.dot(u2, jnp.dot(w_mat, v, precision=hp), precision=hp)
    w_norm = weight / sigma
    y = lax.conv_general_dilated(x, w_norm, (1, 1), 'SAME',
                                 dimension_numbers=('NCHW', 'OIHW', 'NCHW'),
                                 precision=hp)
    return y + bias[None, :, None, None], u2, v


if __name__ == "__main__":
    # Wrapped module: nn.Conv2d(in_channels=4, out_channels=8, kernel_size=3, padding=1)
    N, C, H, W = 2, 4, 16, 16
    O, KH, KW = 8, 3, 3

    key = jax.random.PRNGKey(0)
    k1, k2, k3, k4 = jax.random.split(key, 4)

    x = jax.random.normal(k1, (N, C, H, W), jnp.float32)

    fan_in = C * KH * KW
    bound = 1.0 / math.sqrt(fan_in)
    weight = jax.random.uniform(k2, (O, C, KH, KW), jnp.float32, -bound, bound)
    bias = jax.random.uniform(k3, (O,), jnp.float32, -bound, bound)

    # u as in _make_params: normal(0, 1) then l2normalize.  The initial `v`
    # parameter is never read when power_iterations >= 1, so it is not needed.
    u0 = jax.random.normal(k4, (O,), jnp.float32)
    u0 = u0 / (jnp.linalg.norm(u0) + EPS)

    y, u_new, v_new = spectral_norm_conv2d(x, weight, bias, u0)
    jax.block_until_ready((y, u_new, v_new))

    y_ref, u_ref, v_ref = _reference(x, weight, bias, u0)
    assert y.shape == (N, O, H, W)
    # Power-iteration path runs at HIGHEST precision -> tight check.
    assert jnp.allclose(u_new, u_ref, atol=1e-5, rtol=1e-5), "u mismatch"
    assert jnp.allclose(v_new, v_ref, atol=1e-5, rtol=1e-5), "v mismatch"
    # Conv hot path uses default (single-pass) MXU precision -> bf16-level tol.
    assert jnp.allclose(y, y_ref, atol=3e-2, rtol=3e-2), "conv mismatch vs reference"

    print("KERNEL_OK")
</pallas_src>

<mosaic_0001>
module attributes {stable_mosaic.version = 11 : i64} {
  func.func @kernel(%arg0: i32, %arg1: memref<8x36xf32, #tpu.memory_space<vmem>>, %arg2: memref<9x8x4xf32, #tpu.memory_space<vmem>>, %arg3: memref<1x8xf32, #tpu.memory_space<vmem>>, %arg4: memref<8x1xf32, #tpu.memory_space<vmem>>, %arg5: memref<1x342x4xf32, #tpu.memory_space<vmem>>, %arg6: memref<1x8x288xf32, #tpu.memory_space<vmem>>, %arg7: memref<1x1x8xf32, #tpu.memory_space<vmem>>, %arg8: memref<1x1x36xf32, #tpu.memory_space<vmem>>) attributes {dimension_semantics = [#tpu.dimension_semantics<parallel>], iteration_bounds = array<i64: 2>, scalar_prefetch = 0 : i64, scratch_operands = 0 : i64, tpu.core_type = #tpu.core_type<tc>, window_params = [{pipeline_mode = #tpu.pipeline_mode<synchronous>, transform_indices = @transform_0, window_bounds = array<i64: 8, 36>}, {pipeline_mode = #tpu.pipeline_mode<synchronous>, transform_indices = @transform_1, window_bounds = array<i64: 9, 8, 4>}, {pipeline_mode = #tpu.pipeline_mode<synchronous>, transform_indices = @transform_2, window_bounds = array<i64: 1, 8>}, {pipeline_mode = #tpu.pipeline_mode<synchronous>, transform_indices = @transform_3, window_bounds = array<i64: 8, 1>}, {transform_indices = @transform_4, window_bounds = array<i64: 1, 342, 4>}, {transform_indices = @transform_5, window_bounds = array<i64: 1, 8, 288>}, {transform_indices = @transform_6, window_bounds = array<i64: 1, 1, 8>}, {transform_indices = @transform_7, window_bounds = array<i64: 1, 1, 36>}]} {
    %c0 = arith.constant 0 : index
    %c0_0 = arith.constant 0 : index
    %0 = vector.load %arg1[%c0, %c0_0] : memref<8x36xf32, #tpu.memory_space<vmem>>, vector<8x36xf32>
    %c0_1 = arith.constant 0 : index
    %c0_2 = arith.constant 0 : index
    %1 = vector.load %arg3[%c0_1, %c0_2] : memref<1x8xf32, #tpu.memory_space<vmem>>, vector<1x8xf32>
    %cst = arith.constant dense<0.000000e+00> : vector<1x36xf32>
    %2 = tpu.matmul %1, %0, %cst {dimension_numbers = #tpu.dot_dimension_numbers<[1], [0], [0], [1], [0, 0, 1, 1], [], []>, precision = #tpu.contract_precision<fp32>} : vector<1x8xf32>, vector<8x36xf32>, vector<1x36xf32> -> vector<1x36xf32>
    %3 = arith.mulf %2, %2 : vector<1x36xf32>
    %4 = vector.shape_cast %3 : vector<1x36xf32> to vector<1x1x36xf32>
    %cst_3 = arith.constant dense<0.000000e+00> : vector<1xf32>
    %5 = vector.multi_reduction <add>, %4, %cst_3 [1, 2] : vector<1x1x36xf32> to vector<1xf32>
    %6 = vector.shape_cast %5 : vector<1xf32> to vector<1x1x1xf32>
    %7 = vector.extract %6[0, 0, 0] : f32 from vector<1x1x1xf32>
    %8 = math.sqrt %7 : f32
    %cst_4 = arith.constant 9.99999996E-13 : f32
    %9 = arith.addf %8, %cst_4 : f32
    %cst_5 = arith.constant 1.000000e+00 : f32
    %10 = arith.divf %cst_5, %9 : f32
    %11 = vector.broadcast %10 : f32 to vector<1x36xf32>
    %12 = arith.mulf %2, %11 : vector<1x36xf32>
    %cst_6 = arith.constant dense<0.000000e+00> : vector<1x8xf32>
    %13 = tpu.matmul %12, %0, %cst_6 {dimension_numbers = #tpu.dot_dimension_numbers<[1], [1], [0], [0], [0, 0, 1, 0], [], []>, precision = #tpu.contract_precision<fp32>} : vector<1x36xf32>, vector<8x36xf32>, vector<1x8xf32> -> vector<1x8xf32>
    %14 = arith.mulf %13, %13 : vector<1x8xf32>
    %15 = vector.shape_cast %14 : vector<1x8xf32> to vector<1x1x8xf32>
    %cst_7 = arith.constant dense<0.000000e+00> : vector<1xf32>
    %16 = vector.multi_reduction <add>, %15, %cst_7 [1, 2] : vector<1x1x8xf32> to vector<1xf32>
    %17 = vector.shape_cast %16 : vector<1xf32> to vector<1x1x1xf32>
    %18 = vector.extract %17[0, 0, 0] : f32 from vector<1x1x1xf32>
    %19 = math.sqrt %18 : f32
    %cst_8 = arith.constant 9.99999996E-13 : f32
    %20 = arith.addf %19, %cst_8 : f32
    %cst_9 = arith.constant 1.000000e+00 : f32
    %21 = arith.divf %cst_9, %20 : f32
    %22 = vector.broadcast %21 : f32 to vector<1x8xf32>
    %23 = arith.mulf %13, %22 : vector<1x8xf32>
    %cst_10 = arith.constant dense<0.000000e+00> : vector<1x8xf32>
    %24 = tpu.matmul %12, %0, %cst_10 {dimension_numbers = #tpu.dot_dimension_numbers<[1], [1], [0], [0], [0, 0, 1, 0], [], []>, precision = #tpu.contract_precision<fp32>} : vector<1x36xf32>, vector<8x36xf32>, vector<1x8xf32> -> vector<1x8xf32>
    %25 = arith.mulf %23, %24 : vector<1x8xf32>
    %26 = vector.shape_cast %25 : vector<1x8xf32> to vector<1x1x8xf32>
    %cst_11 = arith.constant dense<0.000000e+00> : vector<1xf32>
    %27 = vector.multi_reduction <add>, %26, %cst_11 [1, 2] : vector<1x1x8xf32> to vector<1xf32>
    %28 = vector.shape_cast %27 : vector<1xf32> to vector<1x1x1xf32>
    %29 = vector.extract %28[0, 0, 0] : f32 from vector<1x1x1xf32>
    %cst_12 = arith.constant 1.000000e+00 : f32
    %30 = arith.divf %cst_12, %29 : f32
    %c0_13 = arith.constant 0 : index
    %c0_14 = arith.constant 0 : index
    %c0_15 = arith.constant 0 : index
    %31 = vector.load %arg7[%c0_13, %c0_14, %c0_15] : memref<1x1x8xf32, #tpu.memory_space<vmem>>, vector<1x1x8xf32>
    %32 = vector.shape_cast %31 : vector<1x1x8xf32> to vector<1x8xf32>
    %33 = vector.shape_cast %23 : vector<1x8xf32> to vector<1x1x8xf32>
    tpu.vector_store %arg7[%c0_13, %c0_14, %c0_15], %33 {strides = array<i32>} : memref<1x1x8xf32, #tpu.memory_space<vmem>>, vector<1x1x8xf32>,
    %c0_16 = arith.constant 0 : index
    %c0_17 = arith.constant 0 : index
    %c0_18 = arith.constant 0 : index
    %34 = vector.load %arg8[%c0_16, %c0_17, %c0_18] : memref<1x1x36xf32, #tpu.memory_space<vmem>>, vector<1x1x36xf32>
    %35 = vector.shape_cast %34 : vector<1x1x36xf32> to vector<1x36xf32>
    %36 = vector.shape_cast %12 : vector<1x36xf32> to vector<1x1x36xf32>
    tpu.vector_store %arg8[%c0_16, %c0_17, %c0_18], %36 {strides = array<i32>} : memref<1x1x36xf32, #tpu.memory_space<vmem>>, vector<1x1x36xf32>,
    %cst_19 = arith.constant 0.000000e+00 : f32
    %37 = vector.broadcast %cst_19 : f32 to vector<8x288xf32>
    %c0_20 = arith.constant 0 : index
    %c0_21 = arith.constant 0 : index
    %c0_22 = arith.constant 0 : index
    %38 = vector.load %arg5[%c0_20, %c0_21, %c0_22] : memref<1x342x4xf32, #tpu.memory_space<vmem>>, vector<1x288x4xf32>
    %39 = vector.shape_cast %38 : vector<1x288x4xf32> to vector<288x4xf32>
    %c0_23 = arith.constant 0 : index
    %c0_24 = arith.constant 0 : index
    %c0_25 = arith.constant 0 : index
    %40 = vector.load %arg2[%c0_23, %c0_24, %c0_25] : memref<9x8x4xf32, #tpu.memory_space<vmem>>, vector<1x8x4xf32>
    %41 = vector.shape_cast %40 : vector<1x8x4xf32> to vector<8x4xf32>
    %cst_26 = arith.constant dense<0.000000e+00> : vector<8x288xf32>
    %42 = tpu.matmul %41, %39, %cst_26 {dimension_numbers = #tpu.dot_dimension_numbers<[1], [1], [0], [0], [0, 0, 1, 0], [], []>} : vector<8x4xf32>, vector<288x4xf32>, vector<8x288xf32> -> vector<8x288xf32>
    %43 = arith.addf %37, %42 : vector<8x288xf32>
    %c0_27 = arith.constant 0 : index
    %c1 = arith.constant 1 : index
    %c0_28 = arith.constant 0 : index
    %44 = vector.load %arg5[%c0_27, %c1, %c0_28] : memref<1x342x4xf32, #tpu.memory_space<vmem>>, vector<1x288x4xf32>
    %45 = vector.shape_cast %44 : vector<1x288x4xf32> to vector<288x4xf32>
    %c1_29 = arith.constant 1 : index
    %c0_30 = arith.constant 0 : index
    %c0_31 = arith.constant 0 : index
    %46 = vector.load %arg2[%c1_29, %c0_30, %c0_31] : memref<9x8x4xf32, #tpu.memory_space<vmem>>, vector<1x8x4xf32>
    %47 = vector.shape_cast %46 : vector<1x8x4xf32> to vector<8x4xf32>
    %cst_32 = arith.constant dense<0.000000e+00> : vector<8x288xf32>
    %48 = tpu.matmul %47, %45, %cst_32 {dimension_numbers = #tpu.dot_dimension_numbers<[1], [1], [0], [0], [0, 0, 1, 0], [], []>} : vector<8x4xf32>, vector<288x4xf32>, vector<8x288xf32> -> vector<8x288xf32>
    %49 = arith.addf %43, %48 : vector<8x288xf32>
    %c0_33 = arith.constant 0 : index
    %c2 = arith.constant 2 : index
    %c0_34 = arith.constant 0 : index
    %50 = vector.load %arg5[%c0_33, %c2, %c0_34] : memref<1x342x4xf32, #tpu.memory_space<vmem>>, vector<1x288x4xf32>
    %51 = vector.shape_cast %50 : vector<1x288x4xf32> to vector<288x4xf32>
    %c2_35 = arith.constant 2 : index
    %c0_36 = arith.constant 0 : index
    %c0_37 = arith.constant 0 : index
    %52 = vector.load %arg2[%c2_35, %c0_36, %c0_37] : memref<9x8x4xf32, #tpu.memory_space<vmem>>, vector<1x8x4xf32>
    %53 = vector.shape_cast %52 : vector<1x8x4xf32> to vector<8x4xf32>
    %cst_38 = arith.constant dense<0.000000e+00> : vector<8x288xf32>
    %54 = tpu.matmul %53, %51, %cst_38 {dimension_numbers = #tpu.dot_dimension_numbers<[1], [1], [0], [0], [0, 0, 1, 0], [], []>} : vector<8x4xf32>, vector<288x4xf32>, vector<8x288xf32> -> vector<8x288xf32>
    %55 = arith.addf %49, %54 : vector<8x288xf32>
    %c0_39 = arith.constant 0 : index
    %c18 = arith.constant 18 : index
    %c0_40 = arith.constant 0 : index
    %56 = vector.load %arg5[%c0_39, %c18, %c0_40] : memref<1x342x4xf32, #tpu.memory_space<vmem>>, vector<1x288x4xf32>
    %57 = vector.shape_cast %56 : vector<1x288x4xf32> to vector<288x4xf32>
    %c3 = arith.constant 3 : index
    %c0_41 = arith.constant 0 : index
    %c0_42 = arith.constant 0 : index
    %58 = vector.load %arg2[%c3, %c0_41, %c0_42] : memref<9x8x4xf32, #tpu.memory_space<vmem>>, vector<1x8x4xf32>
    %59 = vector.shape_cast %58 : vector<1x8x4xf32> to vector<8x4xf32>
    %cst_43 = arith.constant dense<0.000000e+00> : vector<8x288xf32>
    %60 = tpu.matmul %59, %57, %cst_43 {dimension_numbers = #tpu.dot_dimension_numbers<[1], [1], [0], [0], [0, 0, 1, 0], [], []>} : vector<8x4xf32>, vector<288x4xf32>, vector<8x288xf32> -> vector<8x288xf32>
    %61 = arith.addf %55, %60 : vector<8x288xf32>
    %c0_44 = arith.constant 0 : index
    %c19 = arith.constant 19 : index
    %c0_45 = arith.constant 0 : index
    %62 = vector.load %arg5[%c0_44, %c19, %c0_45] : memref<1x342x4xf32, #tpu.memory_space<vmem>>, vector<1x288x4xf32>
    %63 = vector.shape_cast %62 : vector<1x288x4xf32> to vector<288x4xf32>
    %c4 = arith.constant 4 : index
    %c0_46 = arith.constant 0 : index
    %c0_47 = arith.constant 0 : index
    %64 = vector.load %arg2[%c4, %c0_46, %c0_47] : memref<9x8x4xf32, #tpu.memory_space<vmem>>, vector<1x8x4xf32>
    %65 = vector.shape_cast %64 : vector<1x8x4xf32> to vector<8x4xf32>
    %cst_48 = arith.constant dense<0.000000e+00> : vector<8x288xf32>
    %66 = tpu.matmul %65, %63, %cst_48 {dimension_numbers = #tpu.dot_dimension_numbers<[1], [1], [0], [0], [0, 0, 1, 0], [], []>} : vector<8x4xf32>, vector<288x4xf32>, vector<8x288xf32> -> vector<8x288xf32>
    %67 = arith.addf %61, %66 : vector<8x288xf32>
    %c0_49 = arith.constant 0 : index
    %c20 = arith.constant 20 : index
    %c0_50 = arith.constant 0 : index
    %68 = vector.load %arg5[%c0_49, %c20, %c0_50] : memref<1x342x4xf32, #tpu.memory_space<vmem>>, vector<1x288x4xf32>
    %69 = vector.shape_cast %68 : vector<1x288x4xf32> to vector<288x4xf32>
    %c5 = arith.constant 5 : index
    %c0_51 = arith.constant 0 : index
    %c0_52 = arith.constant 0 : index
    %70 = vector.load %arg2[%c5, %c0_51, %c0_52] : memref<9x8x4xf32, #tpu.memory_space<vmem>>, vector<1x8x4xf32>
    %71 = vector.shape_cast %70 : vector<1x8x4xf32> to vector<8x4xf32>
    %cst_53 = arith.constant dense<0.000000e+00> : vector<8x288xf32>
    %72 = tpu.matmul %71, %69, %cst_53 {dimension_numbers = #tpu.dot_dimension_numbers<[1], [1], [0], [0], [0, 0, 1, 0], [], []>} : vector<8x4xf32>, vector<288x4xf32>, vector<8x288xf32> -> vector<8x288xf32>
    %73 = arith.addf %67, %72 : vector<8x288xf32>
    %c0_54 = arith.constant 0 : index
    %c36 = arith.constant 36 : index
    %c0_55 = arith.constant 0 : index
    %74 = vector.load %arg5[%c0_54, %c36, %c0_55] : memref<1x342x4xf32, #tpu.memory_space<vmem>>, vector<1x288x4xf32>
    %75 = vector.shape_cast %74 : vector<1x288x4xf32> to vector<288x4xf32>
    %c6 = arith.constant 6 : index
    %c0_56 = arith.constant 0 : index
    %c0_57 = arith.constant 0 : index
    %76 = vector.load %arg2[%c6, %c0_56, %c0_57] : memref<9x8x4xf32, #tpu.memory_space<vmem>>, vector<1x8x4xf32>
    %77 = vector.shape_cast %76 : vector<1x8x4xf32> to vector<8x4xf32>
    %cst_58 = arith.constant dense<0.000000e+00> : vector<8x288xf32>
    %78 = tpu.matmul %77, %75, %cst_58 {dimension_numbers = #tpu.dot_dimension_numbers<[1], [1], [0], [0], [0, 0, 1, 0], [], []>} : vector<8x4xf32>, vector<288x4xf32>, vector<8x288xf32> -> vector<8x288xf32>
    %79 = arith.addf %73, %78 : vector<8x288xf32>
    %c0_59 = arith.constant 0 : index
    %c37 = arith.constant 37 : index
    %c0_60 = arith.constant 0 : index
    %80 = vector.load %arg5[%c0_59, %c37, %c0_60] : memref<1x342x4xf32, #tpu.memory_space<vmem>>, vector<1x288x4xf32>
    %81 = vector.shape_cast %80 : vector<1x288x4xf32> to vector<288x4xf32>
    %c7 = arith.constant 7 : index
    %c0_61 = arith.constant 0 : index
    %c0_62 = arith.constant 0 : index
    %82 = vector.load %arg2[%c7, %c0_61, %c0_62] : memref<9x8x4xf32, #tpu.memory_space<vmem>>, vector<1x8x4xf32>
    %83 = vector.shape_cast %82 : vector<1x8x4xf32> to vector<8x4xf32>
    %cst_63 = arith.constant dense<0.000000e+00> : vector<8x288xf32>
    %84 = tpu.matmul %83, %81, %cst_63 {dimension_numbers = #tpu.dot_dimension_numbers<[1], [1], [0], [0], [0, 0, 1, 0], [], []>} : vector<8x4xf32>, vector<288x4xf32>, vector<8x288xf32> -> vector<8x288xf32>
    %85 = arith.addf %79, %84 : vector<8x288xf32>
    %c0_64 = arith.constant 0 : index
    %c38 = arith.constant 38 : index
    %c0_65 = arith.constant 0 : index
    %86 = vector.load %arg5[%c0_64, %c38, %c0_65] : memref<1x342x4xf32, #tpu.memory_space<vmem>>, vector<1x288x4xf32>
    %87 = vector.shape_cast %86 : vector<1x288x4xf32> to vector<288x4xf32>
    %c8 = arith.constant 8 : index
    %c0_66 = arith.constant 0 : index
    %c0_67 = arith.constant 0 : index
    %88 = vector.load %arg2[%c8, %c0_66, %c0_67] : memref<9x8x4xf32, #tpu.memory_space<vmem>>, vector<1x8x4xf32>
    %89 = vector.shape_cast %88 : vector<1x8x4xf32> to vector<8x4xf32>
    %cst_68 = arith.constant dense<0.000000e+00> : vector<8x288xf32>
    %90 = tpu.matmul %89, %87, %cst_68 {dimension_numbers = #tpu.dot_dimension_numbers<[1], [1], [0], [0], [0, 0, 1, 0], [], []>} : vector<8x4xf32>, vector<288x4xf32>, vector<8x288xf32> -> vector<8x288xf32>
    %91 = arith.addf %85, %90 : vector<8x288xf32>
    %92 = vector.broadcast %30 : f32 to vector<8x288xf32>
    %93 = arith.mulf %91, %92 : vector<8x288xf32>
    %c0_69 = arith.constant 0 : index
    %c0_70 = arith.constant 0 : index
    %94 = vector.load %arg4[%c0_69, %c0_70] : memref<8x1xf32, #tpu.memory_space<vmem>>, vector<8x1xf32>
    %95 = vector.broadcast %94 : vector<8x1xf32> to vector<8x288xf32>
    %96 = arith.addf %93, %95 : vector<8x288xf32>
    %c0_71 = arith.constant 0 : index
    %c0_72 = arith.constant 0 : index
    %c0_73 = arith.constant 0 : index
    %97 = vector.load %arg6[%c0_71, %c0_72, %c0_73] : memref<1x8x288xf32, #tpu.memory_space<vmem>>, vector<1x8x288xf32>
    %98 = vector.shape_cast %97 : vector<1x8x288xf32> to vector<8x288xf32>
    %99 = vector.shape_cast %96 : vector<8x288xf32> to vector<1x8x288xf32>
    tpu.vector_store %arg6[%c0_71, %c0_72, %c0_73], %99 {strides = array<i32>} : memref<1x8x288xf32, #tpu.memory_space<vmem>>, vector<1x8x288xf32>,
    return
  }
  func.func @transform_0(%arg0: i32) -> (i32, i32) {
    %c0_i32 = arith.constant 0 : i32
    %c0_i32_0 = arith.constant 0 : i32
    %c0_i32_1 = arith.constant 0 : i32
    return %c0_i32, %c0_i32_0 : i32, i32
  }
  func.func @transform_1(%arg0: i32) -> (i32, i32, i32) {
    %c0_i32 = arith.constant 0 : i32
    %c0_i32_0 = arith.constant 0 : i32
    %c0_i32_1 = arith.constant 0 : i32
    %c0_i32_2 = arith.constant 0 : i32
    return %c0_i32, %c0_i32_0, %c0_i32_1 : i32, i32, i32
  }
  func.func @transform_2(%arg0: i32) -> (i32, i32) {
    %c0_i32 = arith.constant 0 : i32
    %c0_i32_0 = arith.constant 0 : i32
    %c0_i32_1 = arith.constant 0 : i32
    return %c0_i32, %c0_i32_0 : i32, i32
  }
  func.func @transform_3(%arg0: i32) -> (i32, i32) {
    %c0_i32 = arith.constant 0 : i32
    %c0_i32_0 = arith.constant 0 : i32
    %c0_i32_1 = arith.constant 0 : i32
    return %c0_i32, %c0_i32_0 : i32, i32
  }
  func.func @transform_4(%arg0: i32) -> (i32, i32, i32) {
    %c0_i32 = arith.constant 0 : i32
    %c0_i32_0 = arith.constant 0 : i32
    %c0_i32_1 = arith.constant 0 : i32
    return %arg0, %c0_i32, %c0_i32_0 : i32, i32, i32
  }
  func.func @transform_5(%arg0: i32) -> (i32, i32, i32) {
    %c0_i32 = arith.constant 0 : i32
    %c0_i32_0 = arith.constant 0 : i32
    %c0_i32_1 = arith.constant 0 : i32
    return %arg0, %c0_i32, %c0_i32_0 : i32, i32, i32
  }
  func.func @transform_6(%arg0: i32) -> (i32, i32, i32) {
    %c0_i32 = arith.constant 0 : i32
    %c0_i32_0 = arith.constant 0 : i32
    %c0_i32_1 = arith.constant 0 : i32
    return %arg0, %c0_i32, %c0_i32_0 : i32, i32, i32
  }
  func.func @transform_7(%arg0: i32) -> (i32, i32, i32) {
    %c0_i32 = arith.constant 0 : i32
    %c0_i32_0 = arith.constant 0 : i32
    %c0_i32_1 = arith.constant 0 : i32
    return %arg0, %c0_i32, %c0_i32_0 : i32, i32, i32
  }
}

</mosaic_0001>

<llo_original>
// kernel: spectral_norm_conv2d.1
$region0: #{spectral_norm_conv2d.1}
  #allocation0 [shape = 'u32[]', space=smem, size = 0x4, offset = 0x4, fixed_abs, tag = 'smem constant byte address 0x4 - core index']
  #allocation1 [shape = 'u32[144,128]{1,0:T(1,128)}', space=vmem, size = 0x12000, scoped, tag = 'internal scratch']
  %s0 = inlined_call_operand.vmem [shape: f32[8,36], index: 0, kind: input, shape index: {}]
  %s1 = inlined_call_operand.vmem [shape: f32[9,8,4], index: 1, kind: input, shape index: {}]
  %s2 = inlined_call_operand.vmem [shape: f32[1,8], index: 2, kind: input, shape index: {}]
  %s3 = inlined_call_operand.vmem [shape: f32[8,1], index: 3, kind: input, shape index: {}]
  %s4 = inlined_call_operand.vmem [shape: f32[2,342,4], index: 4, kind: input, shape index: {}]
  %s5 = inlined_call_operand.vmem [shape: f32[2,8,288], index: 5, kind: output, shape index: {0}]
  %s6 = inlined_call_operand.vmem [shape: f32[2,1,8], index: 6, kind: output, shape index: {1}]
  %s7 = inlined_call_operand.vmem [shape: f32[2,1,36], index: 7, kind: output, shape index: {2}]
  %8 = xla_tuple %s5, %s6, %s7
  %s9 = sld [smem:[#allocation0]]
  $region69: #{spectral_norm_conv2d.1} parent=0
    _
  %s11 = ssub.s32 1, %s9
  %s12 = scalar_select 0, %s11, %s9
  loop: start=0, step=1, limit=4
  $region2: #{spectral_norm_conv2d.1} parent=0 // loop_pre_header
    _
  $region3: #{spectral_norm_conv2d.1} parent=0 // loop_header
    %s14 = sphi 0, %s18
    %p15 = scmp.ge.s32.totalorder %s14, 4
    %s22 = sphi 0, %s22
    %s24 = sphi 0, %s22
    %s25 = sphi 0, %s24
    %s39 = sphi 0, %s25
    %s43 = sphi 0, %s43
    %s45 = sphi 0, %s43
    %s46 = sphi 0, %s45
    %s60 = sphi 0, %s46
    %s64 = sphi 0, %s64
    %s66 = sphi 0, %s64
    %s67 = sphi 0, %s66
    %s81 = sphi 0, %s67
    %s85 = sphi 0, %s85
    %s87 = sphi 0, %s85
    %s88 = sphi 0, %s87
    %s102 = sphi 0, %s88
    %s108 = sphi 0, %s110
    %s111 = sphi 0, %s108
    %s112 = sphi 0, %s111
    %s128 = sphi 0, %s112
    %s134 = sphi 0, %s136
    %s137 = sphi 0, %s134
    %s138 = sphi 0, %s137
    %s154 = sphi 0, %s138
    %s160 = sphi 0, %s162
    %s163 = sphi 0, %s160
    %s164 = sphi 0, %s163
    %s180 = sphi 0, %s164
    %s186 = sphi 0, %s188
    %s189 = sphi 0, %s186
    %s190 = sphi 0, %s189
    %s206 = sphi 0, %s190
  $region4: #{spectral_norm_conv2d.1} parent=0 // loop_header_branch
    %17 = sbr.rel (%p15) target = $region8
  $region5: #{spectral_norm_conv2d.1} parent=0 // loop_body
    %s19 = ssub.s32 %s14, 1
    %s20 = ssub.s32 %s14, 2
    %s21 = sadd.s32 %s14, 1
    %s23 = sadd.s32 %s22, 1
    %p26 = scmp.eq.s32.totalorder %s14, 1
    %p27 = scmp.ne.s32.totalorder %s22, %s24
    %p28 = scmp.eq.s32.totalorder %s14, 0
    %p29 = por %p27, %p28
    %p30 = scmp.ne.s32.totalorder %s22, %s24
    %p31 = scmp.eq.s32.totalorder %s19, 1
    %p32 = por %p30, %p31
    %p33 = scmp.ne.s32.totalorder %s24, %s25
    %p34 = scmp.eq.s32.totalorder %s19, 0
    %p35 = por %p33, %p34
    %p36 = scmp.ne.s32.totalorder %s24, %s25
    %p37 = scmp.eq.s32.totalorder %s20, 1
    %p38 = por %p36, %p37
    %p40 = scmp.ne.s32.totalorder %s25, %s39
    %p41 = scmp.eq.s32.totalorder %s20, 0
    %p42 = por %p40, %p41
    %s44 = sadd.s32 %s43, 1
    %p47 = scmp.eq.s32.totalorder %s14, 1
    %p48 = scmp.ne.s32.totalorder %s43, %s45
    %p49 = scmp.eq.s32.totalorder %s14, 0
    %p50 = por %p48, %p49
    %p51 = scmp.ne.s32.totalorder %s43, %s45
    %p52 = scmp.eq.s32.totalorder %s19, 1
    %p53 = por %p51, %p52
    %p54 = scmp.ne.s32.totalorder %s45, %s46
    %p55 = scmp.eq.s32.totalorder %s19, 0
    %p56 = por %p54, %p55
    %p57 = scmp.ne.s32.totalorder %s45, %s46
    %p58 = scmp.eq.s32.totalorder %s20, 1
    %p59 = por %p57, %p58
    %p61 = scmp.ne.s32.totalorder %s46, %s60
    %p62 = scmp.eq.s32.totalorder %s20, 0
    %p63 = por %p61, %p62
    %s65 = sadd.s32 %s64, 1
    %p68 = scmp.eq.s32.totalorder %s14, 1
    %p69 = scmp.ne.s32.totalorder %s64, %s66
    %p70 = scmp.eq.s32.totalorder %s14, 0
    %p71 = por %p69, %p70
    %p72 = scmp.ne.s32.totalorder %s64, %s66
    %p73 = scmp.eq.s32.totalorder %s19, 1
    %p74 = por %p72, %p73
    %p75 = scmp.ne.s32.totalorder %s66, %s67
    %p76 = scmp.eq.s32.totalorder %s19, 0
    %p77 = por %p75, %p76
    %p78 = scmp.ne.s32.totalorder %s66, %s67
    %p79 = scmp.eq.s32.totalorder %s20, 1
    %p80 = por %p78, %p79
    %p82 = scmp.ne.s32.totalorder %s67, %s81
    %p83 = scmp.eq.s32.totalorder %s20, 0
    %p84 = por %p82, %p83
    %s86 = sadd.s32 %s85, 1
    %p89 = scmp.eq.s32.totalorder %s14, 1
    %p90 = scmp.ne.s32.totalorder %s85, %s87
    %p91 = scmp.eq.s32.totalorder %s14, 0
    %p92 = por %p90, %p91
    %p93 = scmp.ne.s32.totalorder %s85, %s87
    %p94 = scmp.eq.s32.totalorder %s19, 1
    %p95 = por %p93, %p94
    %p96 = scmp.ne.s32.totalorder %s87, %s88
    %p97 = scmp.eq.s32.totalorder %s19, 0
    %p98 = por %p96, %p97
    %p99 = scmp.ne.s32.totalorder %s87, %s88
    %p100 = scmp.eq.s32.totalorder %s20, 1
    %p101 = por %p99, %p100
    %p103 = scmp.ne.s32.totalorder %s88, %s102
    %p104 = scmp.eq.s32.totalorder %s20, 0
    %p105 = por %p103, %p104
    %s106 = ssub.s32 %s14, %s21
    %p107 = scmp.eq.s32.totalorder %s106, 0
    %s109 = sadd.s32 %s108, 1
    %s110 = scalar_select %p107, %s108, %s109
    %p113 = pneg %p107
    %p114 = scmp.eq.s32.totalorder %s14, 1
    %p115 = por %p113, %p114
    %p116 = scmp.ne.s32.totalorder %s108, %s111
    %p117 = scmp.eq.s32.totalorder %s14, 0
    %p118 = por %p116, %p117
    %p119 = scmp.ne.s32.totalorder %s108, %s111
    %p120 = scmp.eq.s32.totalorder %s19, 1
    %p121 = por %p119, %p120
    %p122 = scmp.ne.s32.totalorder %s111, %s112
    %p123 = scmp.eq.s32.totalorder %s19, 0
    %p124 = por %p122, %p123
    %p125 = scmp.ne.s32.totalorder %s111, %s112
    %p126 = scmp.eq.s32.totalorder %s20, 1
    %p127 = por %p125, %p126
    %p129 = scmp.ne.s32.totalorder %s112, %s128
    %p130 = scmp.eq.s32.totalorder %s20, 0
    %p131 = por %p129, %p130
    %s132 = ssub.s32 %s14, %s21
    %p133 = scmp.eq.s32.totalorder %s132, 0
    %s135 = sadd.s32 %s134, 1
    %s136 = scalar_select %p133, %s134, %s135
    %p139 = pneg %p133
    %p140 = scmp.eq.s32.totalorder %s14, 1
    %p141 = por %p139, %p140
    %p142 = scmp.ne.s32.totalorder %s134, %s137
    %p143 = scmp.eq.s32.totalorder %s14, 0
    %p144 = por %p142, %p143
    %p145 = scmp.ne.s32.totalorder %s134, %s137
    %p146 = scmp.eq.s32.totalorder %s19, 1
    %p147 = por %p145, %p146
    %p148 = scmp.ne.s32.totalorder %s137, %s138
    %p149 = scmp.eq.s32.totalorder %s19, 0
    %p150 = por %p148, %p149
    %p151 = scmp.ne.s32.totalorder %s137, %s138
    %p152 = scmp.eq.s32.totalorder %s20, 1
    %p153 = por %p151, %p152
    %p155 = scmp.ne.s32.totalorder %s138, %s154
    %p156 = scmp.eq.s32.totalorder %s20, 0
    %p157 = por %p155, %p156
    %s158 = ssub.s32 %s14, %s21
    %p159 = scmp.eq.s32.totalorder %s158, 0
    %s161 = sadd.s32 %s160, 1
    %s162 = scalar_select %p159, %s160, %s161
    %p165 = pneg %p159
    %p166 = scmp.eq.s32.totalorder %s14, 1
    %p167 = por %p165, %p166
    %p168 = scmp.ne.s32.totalorder %s160, %s163
    %p169 = scmp.eq.s32.totalorder %s14, 0
    %p170 = por %p168, %p169
    %p171 = scmp.ne.s32.totalorder %s160, %s163
    %p172 = scmp.eq.s32.totalorder %s19, 1
    %p173 = por %p171, %p172
    %p174 = scmp.ne.s32.totalorder %s163, %s164
    %p175 = scmp.eq.s32.totalorder %s19, 0
    %p176 = por %p174, %p175
    %p177 = scmp.ne.s32.totalorder %s163, %s164
    %p178 = scmp.eq.s32.totalorder %s20, 1
    %p179 = por %p177, %p178
    %p181 = scmp.ne.s32.totalorder %s164, %s180
    %p182 = scmp.eq.s32.totalorder %s20, 0
    %p183 = por %p181, %p182
    %s184 = ssub.s32 %s14, %s21
    %p185 = scmp.eq.s32.totalorder %s184, 0
    %s187 = sadd.s32 %s186, 1
    %s188 = scalar_select %p185, %s186, %s187
    %p191 = pneg %p185
    %p192 = scmp.eq.s32.totalorder %s14, 1
    %p193 = por %p191, %p192
    %p194 = scmp.ne.s32.totalorder %s186, %s189
    %p195 = scmp.eq.s32.totalorder %s14, 0
    %p196 = por %p194, %p195
    %p197 = scmp.ne.s32.totalorder %s186, %s189
    %p198 = scmp.eq.s32.totalorder %s19, 1
    %p199 = por %p197, %p198
    %p200 = scmp.ne.s32.totalorder %s189, %s190
    %p201 = scmp.eq.s32.totalorder %s19, 0
    %p202 = por %p200, %p201
    %p203 = scmp.ne.s32.totalorder %s189, %s190
    %p204 = scmp.eq.s32.totalorder %s20, 1
    %p205 = por %p203, %p204
    %p207 = scmp.ne.s32.totalorder %s190, %s206
    %p208 = scmp.eq.s32.totalorder %s20, 0
    %p209 = por %p207, %p208
    %p210 = scmp.le.s32.totalorder 1, %s14
    %p211 = scmp.lt.s32.totalorder %s14, 3
    %p212 = pnand %p210, %p211
    %p213 = pneg %p212
    // Predicated region
    $region9: #{spectral_norm_conv2d.1} parent=5 // pred_check
      _
    $region10: #{spectral_norm_conv2d.1} parent=5 // pred_check_branch
      %215 = sbr.rel (%p212) target = $region12
    $region11: #{spectral_norm_conv2d.1} parent=5 // pred_region
      %s216 = ssub.s32 %s14, 1
      // Predicated region
      $region13: #{spectral_norm_conv2d.1} parent=11 // pred_check
        %p217 = pneg %p35
      $region14: #{spectral_norm_conv2d.1} parent=11 // pred_check_branch
        %219 = sbr.rel (%p217) target = $region16
      $region15: #{spectral_norm_conv2d.1} parent=11 // pred_region
        _
      $region16: #{spectral_norm_conv2d.1} parent=11 // pred_fallthru
        _
      // Predicated region
      $region17: #{spectral_norm_conv2d.1} parent=11 // pred_check
        %p220 = pneg %p56
      $region18: #{spectral_norm_conv2d.1} parent=11 // pred_check_branch
        %222 = sbr.rel (%p220) target = $region20
      $region19: #{spectral_norm_conv2d.1} parent=11 // pred_region
        _
      $region20: #{spectral_norm_conv2d.1} parent=11 // pred_fallthru
        _
      // Predicated region
      $region21: #{spectral_norm_conv2d.1} parent=11 // pred_check
        %p223 = pneg %p77
      $region22: #{spectral_norm_conv2d.1} parent=11 // pred_check_branch
        %225 = sbr.rel (%p223) target = $region24
      $region23: #{spectral_norm_conv2d.1} parent=11 // pred_region
        _
      $region24: #{spectral_norm_conv2d.1} parent=11 // pred_fallthru
        _
      // Predicated region
      $region25: #{spectral_norm_conv2d.1} parent=11 // pred_check
        %p226 = pneg %p98
      $region26: #{spectral_norm_conv2d.1} parent=11 // pred_check_branch
        %228 = sbr.rel (%p226) target = $region28
      $region27: #{spectral_norm_conv2d.1} parent=11 // pred_region
        _
      $region28: #{spectral_norm_conv2d.1} parent=11 // pred_fallthru
        _
    $region12: #{spectral_norm_conv2d.1} parent=5 // pred_fallthru
      _
    %p229 = scmp.lt.s32.totalorder %s14, 2
    // Predicated region
    $region29: #{spectral_norm_conv2d.1} parent=5 // pred_check
      %p230 = pneg %p229
    $region30: #{spectral_norm_conv2d.1} parent=5 // pred_check_branch
      %232 = sbr.rel (%p230) target = $region32
    $region31: #{spectral_norm_conv2d.1} parent=5 // pred_region
      // Predicated region
      $region33: #{spectral_norm_conv2d.1} parent=31 // pred_check
        %p233 = pneg %p118
      $region34: #{spectral_norm_conv2d.1} parent=31 // pred_check_branch
        %235 = sbr.rel (%p233) target = $region36
      $region35: #{spectral_norm_conv2d.1} parent=31 // pred_region
        %p236 = scmp.lt.s32.totalorder %s14, 1
        %s237 = scalar_select %p236, %s14, 1
        %s238 = smul.addr %s237, 43
        %s239 = smul.addr %s238, 8
        %s240 = scalar_lea.vmem %s4, %s239
      $region36: #{spectral_norm_conv2d.1} parent=31 // pred_fallthru
        _
    $region32: #{spectral_norm_conv2d.1} parent=5 // pred_fallthru
      _
    %p241 = scmp.le.s32.totalorder 1, %s14
    %p242 = scmp.lt.s32.totalorder %s14, 3
    %p243 = pnand %p241, %p242
    %p244 = pneg %p243
    // Predicated region
    $region37: #{spectral_norm_conv2d.1} parent=5 // pred_check
      _
    $region38: #{spectral_norm_conv2d.1} parent=5 // pred_check_branch
      %246 = sbr.rel (%p243) target = $region40
    $region39: #{spectral_norm_conv2d.1} parent=5 // pred_region
      %s247 = ssub.s32 %s14, 1
      %p248 = pneg %p35
      %p249 = pneg %p32
      %p250 = pneg %p56
      %p251 = pneg %p53
      %p252 = pneg %p77
      %p253 = pneg %p74
      %p254 = pneg %p98
      %p255 = pneg %p95
      %p256 = scmp.lt.s32.totalorder %s19, 1
      %s257 = scalar_select %p256, %s19, 1
      %s258 = smul.addr %s257, 43
      %s259 = smul.addr %s258, 8
      %s260 = scalar_lea.vmem %s4, %s259
      %p261 = pneg %p124
      %p262 = pneg %p121
      %p263 = pneg %p150
      %p264 = pneg %p147
      %p265 = scmp.lt.s32.totalorder %s19, 1
      %s266 = scalar_select %p265, %s19, 1
      %s267 = smul.addr %s266, 3
      %s268 = smul.addr %s267, 8
      %s269 = scalar_lea.vmem %s5, %s268
      %p270 = pneg %p176
      %p271 = pneg %p173
      %p272 = scmp.lt.s32.totalorder %s19, 1
      %s273 = scalar_select %p272, %s19, 1
      %s274 = scalar_lea.vmem %s6, %s273
      %p275 = pneg %p202
      %p276 = pneg %p199
      %p277 = scmp.lt.s32.totalorder %s19, 1
      %s278 = scalar_select %p277, %s19, 1
      %s279 = scalar_lea.vmem %s7, %s278
      %p280 = scmp.lt.s32.totalorder %s19, 1
      %s281 = scalar_select %p280, %s19, 1
      %s282 = smul.addr %s281, 43
      %s283 = smul.addr %s282, 8
      %s284 = scalar_lea.vmem %s4, %s283
      %p285 = scmp.lt.s32.totalorder %s19, 1
      %s286 = scalar_select %p285, %s19, 1
      %s287 = smul.addr %s286, 3
      %s288 = smul.addr %s287, 8
      %s289 = scalar_lea.vmem %s5, %s288
      %p290 = scmp.lt.s32.totalorder %s19, 1
      %s291 = scalar_select %p290, %s19, 1
      %s292 = scalar_lea.vmem %s6, %s291
      %p293 = scmp.lt.s32.totalorder %s19, 1
      %s294 = scalar_select %p293, %s19, 1
      %s295 = scalar_lea.vmem %s7, %s294
      %v296 = vld [vmem:[%s0] sm:$0xff]
      %v297 = vld [vmem:[%s2] sm:$0x1]
      %vm298 = vcmask 64512
      %v300 = vsel %vm298, %v297, 0
      %302 = vmatprep.subr.mxu0 0.0
      %v303 = vand.u32 %v296, 4294901760
      %304 = vmatpush1.msra.mxu0 %v303
      %305 = vmatprep.subr.mxu0 0.0
      %306 = vmatpush1.msra.mxu0 0.0
      %307 = vmatprep.subr.mxu0 0.0
      %308 = vmatpush1.msra.mxu0 0.0
      %309 = vmatprep.subr.mxu0 0.0
      %310 = vmatpush1.msra.mxu0 0.0
      %311 = vmatprep.subr.mxu0 0.0
      %312 = vmatpush1.msra.mxu0 0.0
      %313 = vmatprep.subr.mxu0 0.0
      %314 = vmatpush1.msra.mxu0 0.0
      %315 = vmatprep.subr.mxu0 0.0
      %316 = vmatpush1.msra.mxu0 0.0
      %317 = vmatprep.subr.mxu0 0.0
      %318 = vmatpush1.msra.mxu0 0.0
      %319 = vmatprep.subr.mxu0 0.0
      %320 = vmatpush1.msra.mxu0 0.0
      %321 = vmatprep.subr.mxu0 0.0
      %322 = vmatpush1.msra.mxu0 0.0
      %323 = vmatprep.subr.mxu0 0.0
      %324 = vmatpush1.msra.mxu0 0.0
      %325 = vmatprep.subr.mxu0 0.0
      %326 = vmatpush1.msra.mxu0 0.0
      %327 = vmatprep.subr.mxu0 0.0
      %328 = vmatpush1.msra.mxu0 0.0
      %329 = vmatprep.subr.mxu0 0.0
      %330 = vmatpush1.msra.mxu0 0.0
      %331 = vmatprep.subr.mxu0 0.0
      %332 = vmatpush1.msra.mxu0 0.0
      %333 = vmatprep.subr.mxu0 0.0
      %334 = vmatpush1.msra.mxu0 0.0
      %335 = vmatprep.subr.mxu0 0.0
      %336 = vmatpush1.msra.mxu0 0.0
      %337 = vmatprep.subr.mxu0 0.0
      %338 = vmatpush1.msra.mxu0 0.0
      %339 = vmatprep.subr.mxu0 0.0
      %340 = vmatpush1.msra.mxu0 0.0
      %341 = vmatprep.subr.mxu0 0.0
      %342 = vmatpush1.msra.mxu0 0.0
      %343 = vmatprep.subr.mxu0 0.0
      %344 = vmatpush1.msra.mxu0 0.0
      %345 = vmatprep.subr.mxu0 0.0
      %346 = vmatpush1.msra.mxu0 0.0
      %347 = vmatprep.subr.mxu0 0.0
      %348 = vmatpush1.msra.mxu0 0.0
      %349 = vmatprep.subr.mxu0 0.0
      %350 = vmatpush1.msra.mxu0 0.0
      %351 = vmatprep.subr.mxu0 0.0
      %352 = vmatpush1.msra.mxu0 0.0
      %353 = vmatprep.subr.mxu0 0.0
      %354 = vmatpush1.msra.mxu0 0.0
      %355 = vmatprep.subr.mxu0 0.0
      %356 = vmatpush1.msra.mxu0 0.0
      %357 = vmatprep.subr.mxu0 0.0
      %358 = vmatpush1.msra.mxu0 0.0
      %359 = vmatprep.subr.mxu0 0.0
      %360 = vmatpush1.msra.mxu0 0.0
      %361 = vmatprep.subr.mxu0 0.0
      %362 = vmatpush1.msra.mxu0 0.0
      %363 = vmatprep.subr.mxu0 0.0
      %364 = vmatpush1.msra.mxu0 0.0
      %365 = vmatprep.subr.mxu0 0.0
      %366 = vmatpush1.msra.mxu0 0.0
      %367 = vmatprep.mubr.f32.mxu0 0.0
      %v368 = vand.u32 %v300, 4294901760
      %v369 = vsub.f32 %v300, %v368
      %v370 = vand.u32 %v369, 4294901760
      %v371 = vsub.f32 %v369, %v370
      %v372 = vand.u32 %v371, 4294901760
      %373 = vmatmul.mubr.f32.gmra.mrb[0].mxu0 %v372
      %v374 = vpop.f32.mrb[0].mxu0
      %v375 = vadd.f32 0.0, %v374
      %v376 = vpop.f32.mrb[0].mxu0
      %377 = vdwg.mxu0
      %378 = vmatprep.subr.mxu0 0.0
      %v379 = vand.u32 %v296, 4294901760
      %v380 = vsub.f32 %v296, %v379
      %v381 = vand.u32 %v380, 4294901760
      %v382 = vsub.f32 %v380, %v381
      %v383 = vand.u32 %v382, 4294901760
      %384 = vmatpush1.msra.mxu0 %v383
      %385 = vmatprep.subr.mxu0 0.0
      %386 = vmatpush1.msra.mxu0 0.0
      %387 = vmatprep.subr.mxu0 0.0
      %388 = vmatpush1.msra.mxu0 0.0
      %389 = vmatprep.subr.mxu0 0.0
      %390 = vmatpush1.msra.mxu0 0.0
      %391 = vmatprep.subr.mxu0 0.0
      %392 = vmatpush1.msra.mxu0 0.0
      %393 = vmatprep.subr.mxu0 0.0
      %394 = vmatpush1.msra.mxu0 0.0
      %395 = vmatprep.subr.mxu0 0.0
      %396 = vmatpush1.msra.mxu0 0.0
      %397 = vmatprep.subr.mxu0 0.0
      %398 = vmatpush1.msra.mxu0 0.0
      %399 = vmatprep.subr.mxu0 0.0
      %400 = vmatpush1.msra.mxu0 0.0
      %401 = vmatprep.subr.mxu0 0.0
      %402 = vmatpush1.msra.mxu0 0.0
      %403 = vmatprep.subr.mxu0 0.0
      %404 = vmatpush1.msra.mxu0 0.0
      %405 = vmatprep.subr.mxu0 0.0
      %406 = vmatpush1.msra.mxu0 0.0
      %407 = vmatprep.subr.mxu0 0.0
      %408 = vmatpush1.msra.mxu0 0.0
      %409 = vmatprep.subr.mxu0 0.0
      %410 = vmatpush1.msra.mxu0 0.0
      %411 = vmatprep.subr.mxu0 0.0
      %412 = vmatpush1.msra.mxu0 0.0
      %413 = vmatprep.subr.mxu0 0.0
      %414 = vmatpush1.msra.mxu0 0.0
      %415 = vmatprep.subr.mxu0 0.0
      %416 = vmatpush1.msra.mxu0 0.0
      %417 = vmatprep.subr.mxu0 0.0
      %418 = vmatpush1.msra.mxu0 0.0
      %419 = vmatprep.subr.mxu0 0.0
      %420 = vmatpush1.msra.mxu0 0.0
      %421 = vmatprep.subr.mxu0 0.0
      %422 = vmatpush1.msra.mxu0 0.0
      %423 = vmatprep.subr.mxu0 0.0
      %424 = vmatpush1.msra.mxu0 0.0
      %425 = vmatprep.subr.mxu0 0.0
      %426 = vmatpush1.msra.mxu0 0.0
      %427 = vmatprep.subr.mxu0 0.0
      %428 = vmatpush1.msra.mxu0 0.0
      %429 = vmatprep.subr.mxu0 0.0
      %430 = vmatpush1.msra.mxu0 0.0
      %431 = vmatprep.subr.mxu0 0.0
      %432 = vmatpush1.msra.mxu0 0.0
      %433 = vmatprep.subr.mxu0 0.0
      %434 = vmatpush1.msra.mxu0 0.0
      %435 = vmatprep.subr.mxu0 0.0
      %436 = vmatpush1.msra.mxu0 0.0
      %437 = vmatprep.subr.mxu0 0.0
      %438 = vmatpush1.msra.mxu0 0.0
      %439 = vmatprep.subr.mxu0 0.0
      %440 = vmatpush1.msra.mxu0 0.0
      %441 = vmatprep.subr.mxu0 0.0
      %442 = vmatpush1.msra.mxu0 0.0
      %443 = vmatprep.subr.mxu0 0.0
      %444 = vmatpush1.msra.mxu0 0.0
      %445 = vmatprep.subr.mxu0 0.0
      %446 = vmatpush1.msra.mxu0 0.0
      %447 = vmatprep.mubr.f32.mxu0 0.0
      %v448 = vand.u32 %v300, 4294901760
      %449 = vmatmul.mubr.f32.gmra.mrb[0].mxu0 %v448
      %v450 = vpop.f32.mrb[0].mxu0
      %v451 = vadd.f32 %v375, %v450
      %v452 = vpop.f32.mrb[0].mxu0
      %453 = vdwg.mxu0
      %454 = vmatprep.subr.mxu0 0.0
      %v455 = vand.u32 %v296, 4294901760
      %v456 = vsub.f32 %v296, %v455
      %457 = vmatpush1.msra.mxu0 %v456
      %458 = vmatprep.subr.mxu0 0.0
      %459 = vmatpush1.msra.mxu0 0.0
      %460 = vmatprep.subr.mxu0 0.0
      %461 = vmatpush1.msra.mxu0 0.0
      %462 = vmatprep.subr.mxu0 0.0
      %463 = vmatpush1.msra.mxu0 0.0
      %464 = vmatprep.subr.mxu0 0.0
      %465 = vmatpush1.msra.mxu0 0.0
      %466 = vmatprep.subr.mxu0 0.0
      %467 = vmatpush1.msra.mxu0 0.0
      %468 = vmatprep.subr.mxu0 0.0
      %469 = vmatpush1.msra.mxu0 0.0
      %470 = vmatprep.subr.mxu0 0.0
      %471 = vmatpush1.msra.mxu0 0.0
      %472 = vmatprep.subr.mxu0 0.0
      %473 = vmatpush1.msra.mxu0 0.0
      %474 = vmatprep.subr.mxu0 0.0
      %475 = vmatpush1.msra.mxu0 0.0
      %476 = vmatprep.subr.mxu0 0.0
      %477 = vmatpush1.msra.mxu0 0.0
      %478 = vmatprep.subr.mxu0 0.0
      %479 = vmatpush1.msra.mxu0 0.0
      %480 = vmatprep.subr.mxu0 0.0
      %481 = vmatpush1.msra.mxu0 0.0
      %482 = vmatprep.subr.mxu0 0.0
      %483 = vmatpush1.msra.mxu0 0.0
      %484 = vmatprep.subr.mxu0 0.0
      %485 = vmatpush1.msra.mxu0 0.0
      %486 = vmatprep.subr.mxu0 0.0
      %487 = vmatpush1.msra.mxu0 0.0
      %488 = vmatprep.subr.mxu0 0.0
      %489 = vmatpush1.msra.mxu0 0.0
      %490 = vmatprep.subr.mxu0 0.0
      %491 = vmatpush1.msra.mxu0 0.0
      %492 = vmatprep.subr.mxu0 0.0
      %493 = vmatpush1.msra.mxu0 0.0
      %494 = vmatprep.subr.mxu0 0.0
      %495 = vmatpush1.msra.mxu0 0.0
      %496 = vmatprep.subr.mxu0 0.0
      %497 = vmatpush1.msra.mxu0 0.0
      %498 = vmatprep.subr.mxu0 0.0
      %499 = vmatpush1.msra.mxu0 0.0
      %500 = vmatprep.subr.mxu0 0.0
      %501 = vmatpush1.msra.mxu0 0.0
      %502 = vmatprep.subr.mxu0 0.0
      %503 = vmatpush1.msra.mxu0 0.0
      %504 = vmatprep.subr.mxu0 0.0
      %505 = vmatpush1.msra.mxu0 0.0
      %506 = vmatprep.subr.mxu0 0.0
      %507 = vmatpush1.msra.mxu0 0.0
      %508 = vmatprep.subr.mxu0 0.0
      %509 = vmatpush1.msra.mxu0 0.0
      %510 = vmatprep.subr.mxu0 0.0
      %511 = vmatpush1.msra.mxu0 0.0
      %512 = vmatprep.subr.mxu0 0.0
      %513 = vmatpush1.msra.mxu0 0.0
      %514 = vmatprep.subr.mxu0 0.0
      %515 = vmatpush1.msra.mxu0 0.0
      %516 = vmatprep.subr.mxu0 0.0
      %517 = vmatpush1.msra.mxu0 0.0
      %518 = vmatprep.subr.mxu0 0.0
      %519 = vmatpush1.msra.mxu0 0.0
      %520 = vmatprep.mubr.f32.mxu0 0.0
      %v521 = vand.u32 %v300, 4294901760
      %v522 = vsub.f32 %v300, %v521
      %523 = vmatmul.mubr.f32.gmra.mrb[0].mxu0 %v522
      %v524 = vpop.f32.mrb[0].mxu0
      %v525 = vadd.f32 %v451, %v524
      %v526 = vpop.f32.mrb[0].mxu0
      %527 = vdwg.mxu0
      %528 = vmatprep.subr.mxu0 0.0
      %v529 = vand.u32 %v296, 4294901760
      %530 = vmatpush1.msra.mxu0 %v529
      %531 = vmatprep.subr.mxu0 0.0
      %532 = vmatpush1.msra.mxu0 0.0
      %533 = vmatprep.subr.mxu0 0.0
      %534 = vmatpush1.msra.mxu0 0.0
      %535 = vmatprep.subr.mxu0 0.0
      %536 = vmatpush1.msra.mxu0 0.0
      %537 = vmatprep.subr.mxu0 0.0
      %538 = vmatpush1.msra.mxu0 0.0
      %539 = vmatprep.subr.mxu0 0.0
      %540 = vmatpush1.msra.mxu0 0.0
      %541 = vmatprep.subr.mxu0 0.0
      %542 = vmatpush1.msra.mxu0 0.0
      %543 = vmatprep.subr.mxu0 0.0
      %544 = vmatpush1.msra.mxu0 0.0
      %545 = vmatprep.subr.mxu0 0.0
      %546 = vmatpush1.msra.mxu0 0.0
      %547 = vmatprep.subr.mxu0 0.0
      %548 = vmatpush1.msra.mxu0 0.0
      %549 = vmatprep.subr.mxu0 0.0
      %550 = vmatpush1.msra.mxu0 0.0
      %551 = vmatprep.subr.mxu0 0.0
      %552 = vmatpush1.msra.mxu0 0.0
      %553 = vmatprep.subr.mxu0 0.0
      %554 = vmatpush1.msra.mxu0 0.0
      %555 = vmatprep.subr.mxu0 0.0
      %556 = vmatpush1.msra.mxu0 0.0
      %557 = vmatprep.subr.mxu0 0.0
      %558 = vmatpush1.msra.mxu0 0.0
      %559 = vmatprep.subr.mxu0 0.0
      %560 = vmatpush1.msra.mxu0 0.0
      %561 = vmatprep.subr.mxu0 0.0
      %562 = vmatpush1.msra.mxu0 0.0
      %563 = vmatprep.subr.mxu0 0.0
      %564 = vmatpush1.msra.mxu0 0.0
      %565 = vmatprep.subr.mxu0 0.0
      %566 = vmatpush1.msra.mxu0 0.0
      %567 = vmatprep.subr.mxu0 0.0
      %568 = vmatpush1.msra.mxu0 0.0
      %569 = vmatprep.subr.mxu0 0.0
      %570 = vmatpush1.msra.mxu0 0.0
      %571 = vmatprep.subr.mxu0 0.0
      %572 = vmatpush1.msra.mxu0 0.0
      %573 = vmatprep.subr.mxu0 0.0
      %574 = vmatpush1.msra.mxu0 0.0
      %575 = vmatprep.subr.mxu0 0.0
      %576 = vmatpush1.msra.mxu0 0.0
      %577 = vmatprep.subr.mxu0 0.0
      %578 = vmatpush1.msra.mxu0 0.0
      %579 = vmatprep.subr.mxu0 0.0
      %580 = vmatpush1.msra.mxu0 0.0
      %581 = vmatprep.subr.mxu0 0.0
      %582 = vmatpush1.msra.mxu0 0.0
      %583 = vmatprep.subr.mxu0 0.0
      %584 = vmatpush1.msra.mxu0 0.0
      %585 = vmatprep.subr.mxu0 0.0
      %586 = vmatpush1.msra.mxu0 0.0
      %587 = vmatprep.subr.mxu0 0.0
      %588 = vmatpush1.msra.mxu0 0.0
      %589 = vmatprep.subr.mxu0 0.0
      %590 = vmatpush1.msra.mxu0 0.0
      %591 = vmatprep.subr.mxu0 0.0
      %592 = vmatpush1.msra.mxu0 0.0
      %593 = vmatprep.mubr.f32.mxu0 0.0
      %v594 = vand.u32 %v300, 4294901760
      %v595 = vsub.f32 %v300, %v594
      %v596 = vand.u32 %v595, 4294901760
      %597 = vmatmul.mubr.f32.gmra.mrb[0].mxu0 %v596
      %v598 = vpop.f32.mrb[0].mxu0
      %v599 = vadd.f32 %v525, %v598
      %v600 = vpop.f32.mrb[0].mxu0
      %601 = vdwg.mxu0
      %602 = vmatprep.subr.mxu0 0.0
      %v603 = vand.u32 %v296, 4294901760
      %v604 = vsub.f32 %v296, %v603
      %v605 = vand.u32 %v604, 4294901760
      %606 = vmatpush1.msra.mxu0 %v605
      %607 = vmatprep.subr.mxu0 0.0
      %608 = vmatpush1.msra.mxu0 0.0
      %609 = vmatprep.subr.mxu0 0.0
      %610 = vmatpush1.msra.mxu0 0.0
      %611 = vmatprep.subr.mxu0 0.0
      %612 = vmatpush1.msra.mxu0 0.0
      %613 = vmatprep.subr.mxu0 0.0
      %614 = vmatpush1.msra.mxu0 0.0
      %615 = vmatprep.subr.mxu0 0.0
      %616 = vmatpush1.msra.mxu0 0.0
      %617 = vmatprep.subr.mxu0 0.0
      %618 = vmatpush1.msra.mxu0 0.0
      %619 = vmatprep.subr.mxu0 0.0
      %620 = vmatpush1.msra.mxu0 0.0
      %621 = vmatprep.subr.mxu0 0.0
      %622 = vmatpush1.msra.mxu0 0.0
      %623 = vmatprep.subr.mxu0 0.0
      %624 = vmatpush1.msra.mxu0 0.0
      %625 = vmatprep.subr.mxu0 0.0
      %626 = vmatpush1.msra.mxu0 0.0
      %627 = vmatprep.subr.mxu0 0.0
      %628 = vmatpush1.msra.mxu0 0.0
      %629 = vmatprep.subr.mxu0 0.0
      %630 = vmatpush1.msra.mxu0 0.0
      %631 = vmatprep.subr.mxu0 0.0
      %632 = vmatpush1.msra.mxu0 0.0
      %633 = vmatprep.subr.mxu0 0.0
      %634 = vmatpush1.msra.mxu0 0.0
      %635 = vmatprep.subr.mxu0 0.0
      %636 = vmatpush1.msra.mxu0 0.0
      %637 = vmatprep.subr.mxu0 0.0
      %638 = vmatpush1.msra.mxu0 0.0
      %639 = vmatprep.subr.mxu0 0.0
      %640 = vmatpush1.msra.mxu0 0.0
      %641 = vmatprep.subr.mxu0 0.0
      %642 = vmatpush1.msra.mxu0 0.0
      %643 = vmatprep.subr.mxu0 0.0
      %644 = vmatpush1.msra.mxu0 0.0
      %645 = vmatprep.subr.mxu0 0.0
      %646 = vmatpush1.msra.mxu0 0.0
      %647 = vmatprep.subr.mxu0 0.0
      %648 = vmatpush1.msra.mxu0 0.0
      %649 = vmatprep.subr.mxu0 0.0
      %650 = vmatpush1.msra.mxu0 0.0
      %651 = vmatprep.subr.mxu0 0.0
      %652 = vmatpush1.msra.mxu0 0.0
      %653 = vmatprep.subr.mxu0 0.0
      %654 = vmatpush1.msra.mxu0 0.0
      %655 = vmatprep.subr.mxu0 0.0
      %656 = vmatpush1.msra.mxu0 0.0
      %657 = vmatprep.subr.mxu0 0.0
      %658 = vmatpush1.msra.mxu0 0.0
      %659 = vmatprep.subr.mxu0 0.0
      %660 = vmatpush1.msra.mxu0 0.0
      %661 = vmatprep.subr.mxu0 0.0
      %662 = vmatpush1.msra.mxu0 0.0
      %663 = vmatprep.subr.mxu0 0.0
      %664 = vmatpush1.msra.mxu0 0.0
      %665 = vmatprep.subr.mxu0 0.0
      %666 = vmatpush1.msra.mxu0 0.0
      %667 = vmatprep.subr.mxu0 0.0
      %668 = vmatpush1.msra.mxu0 0.0
      %669 = vmatprep.mubr.f32.mxu0 0.0
      %v670 = vand.u32 %v300, 4294901760
      %671 = vmatmul.mubr.f32.gmra.mrb[0].mxu0 %v670
      %v672 = vpop.f32.mrb[0].mxu0
      %v673 = vadd.f32 %v599, %v672
      %v674 = vpop.f32.mrb[0].mxu0
      %675 = vdwg.mxu0
      %676 = vmatprep.subr.mxu0 0.0
      %v677 = vand.u32 %v296, 4294901760
      %678 = vmatpush1.msra.mxu0 %v677
      %679 = vmatprep.subr.mxu0 0.0
      %680 = vmatpush1.msra.mxu0 0.0
      %681 = vmatprep.subr.mxu0 0.0
      %682 = vmatpush1.msra.mxu0 0.0
      %683 = vmatprep.subr.mxu0 0.0
      %684 = vmatpush1.msra.mxu0 0.0
      %685 = vmatprep.subr.mxu0 0.0
      %686 = vmatpush1.msra.mxu0 0.0
      %687 = vmatprep.subr.mxu0 0.0
      %688 = vmatpush1.msra.mxu0 0.0
      %689 = vmatprep.subr.mxu0 0.0
      %690 = vmatpush1.msra.mxu0 0.0
      %691 = vmatprep.subr.mxu0 0.0
      %692 = vmatpush1.msra.mxu0 0.0
      %693 = vmatprep.subr.mxu0 0.0
      %694 = vmatpush1.msra.mxu0 0.0
      %695 = vmatprep.subr.mxu0 0.0
      %696 = vmatpush1.msra.mxu0 0.0
      %697 = vmatprep.subr.mxu0 0.0
      %698 = vmatpush1.msra.mxu0 0.0
      %699 = vmatprep.subr.mxu0 0.0
      %700 = vmatpush1.msra.mxu0 0.0
      %701 = vmatprep.subr.mxu0 0.0
      %702 = vmatpush1.msra.mxu0 0.0
      %703 = vmatprep.subr.mxu0 0.0
      %704 = vmatpush1.msra.mxu0 0.0
      %705 = vmatprep.subr.mxu0 0.0
      %706 = vmatpush1.msra.mxu0 0.0
      %707 = vmatprep.subr.mxu0 0.0
      %708 = vmatpush1.msra.mxu0 0.0
      %709 = vmatprep.subr.mxu0 0.0
      %710 = vmatpush1.msra.mxu0 0.0
      %711 = vmatprep.subr.mxu0 0.0
      %712 = vmatpush1.msra.mxu0 0.0
      %713 = vmatprep.subr.mxu0 0.0
      %714 = vmatpush1.msra.mxu0 0.0
      %715 = vmatprep.subr.mxu0 0.0
      %716 = vmatpush1.msra.mxu0 0.0
      %717 = vmatprep.subr.mxu0 0.0
      %718 = vmatpush1.msra.mxu0 0.0
      %719 = vmatprep.subr.mxu0 0.0
      %720 = vmatpush1.msra.mxu0 0.0
      %721 = vmatprep.subr.mxu0 0.0
      %722 = vmatpush1.msra.mxu0 0.0
      %723 = vmatprep.subr.mxu0 0.0
      %724 = vmatpush1.msra.mxu0 0.0
      %725 = vmatprep.subr.mxu0 0.0
      %726 = vmatpush1.msra.mxu0 0.0
      %727 = vmatprep.subr.mxu0 0.0
      %728 = vmatpush1.msra.mxu0 0.0
      %729 = vmatprep.subr.mxu0 0.0
      %730 = vmatpush1.msra.mxu0 0.0
      %731 = vmatprep.subr.mxu0 0.0
      %732 = vmatpush1.msra.mxu0 0.0
      %733 = vmatprep.subr.mxu0 0.0
      %734 = vmatpush1.msra.mxu0 0.0
      %735 = vmatprep.subr.mxu0 0.0
      %736 = vmatpush1.msra.mxu0 0.0
      %737 = vmatprep.subr.mxu0 0.0
      %738 = vmatpush1.msra.mxu0 0.0
      %739 = vmatprep.subr.mxu0 0.0
      %740 = vmatpush1.msra.mxu0 0.0
      %741 = vmatprep.mubr.f32.mxu0 0.0
      %v742 = vand.u32 %v300, 4294901760
      %743 = vmatmul.mubr.f32.gmra.mrb[0].mxu0 %v742
      %v744 = vpop.f32.mrb[0].mxu0
      %v745 = vadd.f32 %v673, %v744
      %v746 = vpop.f32.mrb[0].mxu0
      %747 = vdwg.mxu0
      %v748 = vmul.f32 %v745, %v745
      %vm749 = vcmask 286720
      %v750 = vsel %vm749, %v748, 0.0
      %751 = vadd.xlane.f32.xlu0 %v750
      %v752 = vpop.xlane.xlu0 %751
      %v753 = vrot.slane %v752, 4
      %v754 = vadd.f32 %v752, %v753
      %v755 = vrot.slane %v754, 2
      %v756 = vadd.f32 %v754, %v755
      %v757 = vrot.slane %v756, 1
      %v758 = vadd.f32 %v756, %v757
      %s759 = vtos %v758
      %v760 = vstv %s759
      %v761 = vrsqrt.pop %v760
      %v762 = vmul.f32 %v760, %v761
      %vm763 = vcmp.eq.f32.partialorder %v760, inf
      %v764 = vsel %vm763, %v760, %v762
      %vm765 = vcmp.eq.f32.partialorder %v760, 0.0
      %v766 = vand.u32 %v760, 2147483648
      %v767 = vsel %vm765, %v766, %v764
      %s768 = vtos %v767
      %s769 = sadd.f32 %s768, 1e-12
      %v770 = vstv %s769
      %v771 = vrcp.pop %v770
      %s772 = vtos %v771
      %v773 = vstv %s772
      %v774 = vmul.f32 %v745, %v773
      %vm775 = vcmask 293888
      %v777 = vsel %vm775, %v774, 0
      %v780 = vsel %vm775, %v296, 0
      %782 = vmatprep.subr.mxu0 0.0
      %v783 = vand.u32 %v780, 4294901760
      %784 = vmatpush1.xpose.msra.mxu0 %v783
      %785 = vmatprep.subr.mxu0 0.0
      %786 = vmatpush1.xpose.msra.mxu0 0.0
      %787 = vmatprep.subr.mxu0 0.0
      %788 = vmatpush1.xpose.msra.mxu0 0.0
      %789 = vmatprep.subr.mxu0 0.0
      %790 = vmatpush1.xpose.msra.mxu0 0.0
      %791 = vmatprep.subr.mxu0 0.0
      %792 = vmatpush1.xpose.msra.mxu0 0.0
      %793 = vmatprep.subr.mxu0 0.0
      %794 = vmatpush1.xpose.msra.mxu0 0.0
      %795 = vmatprep.subr.mxu0 0.0
      %796 = vmatpush1.xpose.msra.mxu0 0.0
      %797 = vmatprep.subr.mxu0 0.0
      %798 = vmatpush1.xpose.msra.mxu0 0.0
      %799 = vmatprep.subr.mxu0 0.0
      %800 = vmatpush1.xpose.msra.mxu0 0.0
      %801 = vmatprep.subr.mxu0 0.0
      %802 = vmatpush1.xpose.msra.mxu0 0.0
      %803 = vmatprep.subr.mxu0 0.0
      %804 = vmatpush1.xpose.msra.mxu0 0.0
      %805 = vmatprep.subr.mxu0 0.0
      %806 = vmatpush1.xpose.msra.mxu0 0.0
      %807 = vmatprep.subr.mxu0 0.0
      %808 = vmatpush1.xpose.msra.mxu0 0.0
      %809 = vmatprep.subr.mxu0 0.0
      %810 = vmatpush1.xpose.msra.mxu0 0.0
      %811 = vmatprep.subr.mxu0 0.0
      %812 = vmatpush1.xpose.msra.mxu0 0.0
      %813 = vmatprep.subr.mxu0 0.0
      %814 = vmatpush1.xpose.msra.mxu0 0.0
      %815 = vmatprep.subr.mxu0 0.0
      %816 = vmatpush1.xpose.msra.mxu0 0.0
      %817 = vmatprep.subr.mxu0 0.0
      %818 = vmatpush1.xpose.msra.mxu0 0.0
      %819 = vmatprep.subr.mxu0 0.0
      %820 = vmatpush1.xpose.msra.mxu0 0.0
      %821 = vmatprep.subr.mxu0 0.0
      %822 = vmatpush1.xpose.msra.mxu0 0.0
      %823 = vmatprep.subr.mxu0 0.0
      %824 = vmatpush1.xpose.msra.mxu0 0.0
      %825 = vmatprep.subr.mxu0 0.0
      %826 = vmatpush1.xpose.msra.mxu0 0.0
      %827 = vmatprep.subr.mxu0 0.0
      %828 = vmatpush1.xpose.msra.mxu0 0.0
      %829 = vmatprep.subr.mxu0 0.0
      %830 = vmatpush1.xpose.msra.mxu0 0.0
      %831 = vmatprep.subr.mxu0 0.0
      %832 = vmatpush1.xpose.msra.mxu0 0.0
      %833 = vmatprep.subr.mxu0 0.0
      %834 = vmatpush1.xpose.msra.mxu0 0.0
      %835 = vmatprep.subr.mxu0 0.0
      %836 = vmatpush1.xpose.msra.mxu0 0.0
      %837 = vmatprep.subr.mxu0 0.0
      %838 = vmatpush1.xpose.msra.mxu0 0.0
      %839 = vmatprep.subr.mxu0 0.0
      %840 = vmatpush1.xpose.msra.mxu0 0.0
      %841 = vmatprep.subr.mxu0 0.0
      %842 = vmatpush1.xpose.msra.mxu0 0.0
      %843 = vmatprep.subr.mxu0 0.0
      %844 = vmatpush1.xpose.msra.mxu0 0.0
      %845 = vmatprep.subr.mxu0 0.0
      %846 = vmatpush1.xpose.msra.mxu0 0.0
      %847 = vmatprep.mubr.f32.mxu0 0.0
      %v848 = vand.u32 %v777, 4294901760
      %v849 = vsub.f32 %v777, %v848
      %v850 = vand.u32 %v849, 4294901760
      %v851 = vsub.f32 %v849, %v850
      %v852 = vand.u32 %v851, 4294901760
      %853 = vmatmul.mubr.f32.gmra.mrb[0].mxu0 %v852
      %v854 = vpop.f32.mrb[0].mxu0
      %v855 = vadd.f32 0.0, %v854
      %v856 = vpop.f32.mrb[0].mxu0
      %857 = vdwg.mxu0
      %858 = vmatprep.subr.mxu0 0.0
      %v859 = vand.u32 %v780, 4294901760
      %v860 = vsub.f32 %v780, %v859
      %v861 = vand.u32 %v860, 4294901760
      %v862 = vsub.f32 %v860, %v861
      %v863 = vand.u32 %v862, 4294901760
      %864 = vmatpush1.xpose.msra.mxu0 %v863
      %865 = vmatprep.subr.mxu0 0.0
      %866 = vmatpush1.xpose.msra.mxu0 0.0
      %867 = vmatprep.subr.mxu0 0.0
      %868 = vmatpush1.xpose.msra.mxu0 0.0
      %869 = vmatprep.subr.mxu0 0.0
      %870 = vmatpush1.xpose.msra.mxu0 0.0
      %871 = vmatprep.subr.mxu0 0.0
      %872 = vmatpush1.xpose.msra.mxu0 0.0
      %873 = vmatprep.subr.mxu0 0.0
      %874 = vmatpush1.xpose.msra.mxu0 0.0
      %875 = vmatprep.subr.mxu0 0.0
      %876 = vmatpush1.xpose.msra.mxu0 0.0
      %877 = vmatprep.subr.mxu0 0.0
      %878 = vmatpush1.xpose.msra.mxu0 0.0
      %879 = vmatprep.subr.mxu0 0.0
      %880 = vmatpush1.xpose.msra.mxu0 0.0
      %881 = vmatprep.subr.mxu0 0.0
      %882 = vmatpush1.xpose.msra.mxu0 0.0
      %883 = vmatprep.subr.mxu0 0.0
      %884 = vmatpush1.xpose.msra.mxu0 0.0
      %885 = vmatprep.subr.mxu0 0.0
      %886 = vmatpush1.xpose.msra.mxu0 0.0
      %887 = vmatprep.subr.mxu0 0.0
      %888 = vmatpush1.xpose.msra.mxu0 0.0
      %889 = vmatprep.subr.mxu0 0.0
      %890 = vmatpush1.xpose.msra.mxu0 0.0
      %891 = vmatprep.subr.mxu0 0.0
      %892 = vmatpush1.xpose.msra.mxu0 0.0
      %893 = vmatprep.subr.mxu0 0.0
      %894 = vmatpush1.xpose.msra.mxu0 0.0
      %895 = vmatprep.subr.mxu0 0.0
      %896 = vmatpush1.xpose.msra.mxu0 0.0
      %897 = vmatprep.subr.mxu0 0.0
      %898 = vmatpush1.xpose.msra.mxu0 0.0
      %899 = vmatprep.subr.mxu0 0.0
      %900 = vmatpush1.xpose.msra.mxu0 0.0
      %901 = vmatprep.subr.mxu0 0.0
      %902 = vmatpush1.xpose.msra.mxu0 0.0
      %903 = vmatprep.subr.mxu0 0.0
      %904 = vmatpush1.xpose.msra.mxu0 0.0
      %905 = vmatprep.subr.mxu0 0.0
      %906 = vmatpush1.xpose.msra.mxu0 0.0
      %907 = vmatprep.subr.mxu0 0.0
      %908 = vmatpush1.xpose.msra.mxu0 0.0
      %909 = vmatprep.subr.mxu0 0.0
      %910 = vmatpush1.xpose.msra.mxu0 0.0
      %911 = vmatprep.subr.mxu0 0.0
      %912 = vmatpush1.xpose.msra.mxu0 0.0
      %913 = vmatprep.subr.mxu0 0.0
      %914 = vmatpush1.xpose.msra.mxu0 0.0
      %915 = vmatprep.subr.mxu0 0.0
      %916 = vmatpush1.xpose.msra.mxu0 0.0
      %917 = vmatprep.subr.mxu0 0.0
      %918 = vmatpush1.xpose.msra.mxu0 0.0
      %919 = vmatprep.subr.mxu0 0.0
      %920 = vmatpush1.xpose.msra.mxu0 0.0
      %921 = vmatprep.subr.mxu0 0.0
      %922 = vmatpush1.xpose.msra.mxu0 0.0
      %923 = vmatprep.subr.mxu0 0.0
      %924 = vmatpush1.xpose.msra.mxu0 0.0
      %925 = vmatprep.subr.mxu0 0.0
      %926 = vmatpush1.xpose.msra.mxu0 0.0
      %927 = vmatprep.mubr.f32.mxu0 0.0
      %v928 = vand.u32 %v777, 4294901760
      %929 = vmatmul.mubr.f32.gmra.mrb[0].mxu0 %v928
      %v930 = vpop.f32.mrb[0].mxu0
      %v931 = vadd.f32 %v855, %v930
      %v932 = vpop.f32.mrb[0].mxu0
      %933 = vdwg.mxu0
      %934 = vmatprep.subr.mxu0 0.0
      %v935 = vand.u32 %v780, 4294901760
      %v936 = vsub.f32 %v780, %v935
      %937 = vmatpush1.xpose.msra.mxu0 %v936
      %938 = vmatprep.subr.mxu0 0.0
      %939 = vmatpush1.xpose.msra.mxu0 0.0
      %940 = vmatprep.subr.mxu0 0.0
      %941 = vmatpush1.xpose.msra.mxu0 0.0
      %942 = vmatprep.subr.mxu0 0.0
      %943 = vmatpush1.xpose.msra.mxu0 0.0
      %944 = vmatprep.subr.mxu0 0.0
      %945 = vmatpush1.xpose.msra.mxu0 0.0
      %946 = vmatprep.subr.mxu0 0.0
      %947 = vmatpush1.xpose.msra.mxu0 0.0
      %948 = vmatprep.subr.mxu0 0.0
      %949 = vmatpush1.xpose.msra.mxu0 0.0
      %950 = vmatprep.subr.mxu0 0.0
      %951 = vmatpush1.xpose.msra.mxu0 0.0
      %952 = vmatprep.subr.mxu0 0.0
      %953 = vmatpush1.xpose.msra.mxu0 0.0
      %954 = vmatprep.subr.mxu0 0.0
      %955 = vmatpush1.xpose.msra.mxu0 0.0
      %956 = vmatprep.subr.mxu0 0.0
      %957 = vmatpush1.xpose.msra.mxu0 0.0
      %958 = vmatprep.subr.mxu0 0.0
      %959 = vmatpush1.xpose.msra.mxu0 0.0
      %960 = vmatprep.subr.mxu0 0.0
      %961 = vmatpush1.xpose.msra.mxu0 0.0
      %962 = vmatprep.subr.mxu0 0.0
      %963 = vmatpush1.xpose.msra.mxu0 0.0
      %964 = vmatprep.subr.mxu0 0.0
      %965 = vmatpush1.xpose.msra.mxu0 0.0
      %966 = vmatprep.subr.mxu0 0.0
      %967 = vmatpush1.xpose.msra.mxu0 0.0
      %968 = vmatprep.subr.mxu0 0.0
      %969 = vmatpush1.xpose.msra.mxu0 0.0
      %970 = vmatprep.subr.mxu0 0.0
      %971 = vmatpush1.xpose.msra.mxu0 0.0
      %972 = vmatprep.subr.mxu0 0.0
      %973 = vmatpush1.xpose.msra.mxu0 0.0
      %974 = vmatprep.subr.mxu0 0.0
      %975 = vmatpush1.xpose.msra.mxu0 0.0
      %976 = vmatprep.subr.mxu0 0.0
      %977 = vmatpush1.xpose.msra.mxu0 0.0
      %978 = vmatprep.subr.mxu0 0.0
      %979 = vmatpush1.xpose.msra.mxu0 0.0
      %980 = vmatprep.subr.mxu0 0.0
      %981 = vmatpush1.xpose.msra.mxu0 0.0
      %982 = vmatprep.subr.mxu0 0.0
      %983 = vmatpush1.xpose.msra.mxu0 0.0
      %984 = vmatprep.subr.mxu0 0.0
      %985 = vmatpush1.xpose.msra.mxu0 0.0
      %986 = vmatprep.subr.mxu0 0.0
      %987 = vmatpush1.xpose.msra.mxu0 0.0
      %988 = vmatprep.subr.mxu0 0.0
      %989 = vmatpush1.xpose.msra.mxu0 0.0
      %990 = vmatprep.subr.mxu0 0.0
      %991 = vmatpush1.xpose.msra.mxu0 0.0
      %992 = vmatprep.subr.mxu0 0.0
      %993 = vmatpush1.xpose.msra.mxu0 0.0
      %994 = vmatprep.subr.mxu0 0.0
      %995 = vmatpush1.xpose.msra.mxu0 0.0
      %996 = vmatprep.subr.mxu0 0.0
      %997 = vmatpush1.xpose.msra.mxu0 0.0
      %998 = vmatprep.subr.mxu0 0.0
      %999 = vmatpush1.xpose.msra.mxu0 0.0
      %1000 = vmatprep.mubr.f32.mxu0 0.0
      %v1001 = vand.u32 %v777, 4294901760
      %v1002 = vsub.f32 %v777, %v1001
      %1003 = vmatmul.mubr.f32.gmra.mrb[0].mxu0 %v1002
      %v1004 = vpop.f32.mrb[0].mxu0
      %v1005 = vadd.f32 %v931, %v1004
      %v1006 = vpop.f32.mrb[0].mxu0
      %1007 = vdwg.mxu0
      %1008 = vmatprep.subr.mxu0 0.0
      %v1009 = vand.u32 %v780, 4294901760
      %1010 = vmatpush1.xpose.msra.mxu0 %v1009
      %1011 = vmatprep.subr.mxu0 0.0
      %1012 = vmatpush1.xpose.msra.mxu0 0.0
      %1013 = vmatprep.subr.mxu0 0.0
      %1014 = vmatpush1.xpose.msra.mxu0 0.0
      %1015 = vmatprep.subr.mxu0 0.0
      %1016 = vmatpush1.xpose.msra.mxu0 0.0
      %1017 = vmatprep.subr.mxu0 0.0
      %1018 = vmatpush1.xpose.msra.mxu0 0.0
      %1019 = vmatprep.subr.mxu0 0.0
      %1020 = vmatpush1.xpose.msra.mxu0 0.0
      %1021 = vmatprep.subr.mxu0 0.0
      %1022 = vmatpush1.xpose.msra.mxu0 0.0
      %1023 = vmatprep.subr.mxu0 0.0
      %1024 = vmatpush1.xpose.msra.mxu0 0.0
      %1025 = vmatprep.subr.mxu0 0.0
      %1026 = vmatpush1.xpose.msra.mxu0 0.0
      %1027 = vmatprep.subr.mxu0 0.0
      %1028 = vmatpush1.xpose.msra.mxu0 0.0
      %1029 = vmatprep.subr.mxu0 0.0
      %1030 = vmatpush1.xpose.msra.mxu0 0.0
      %1031 = vmatprep.subr.mxu0 0.0
      %1032 = vmatpush1.xpose.msra.mxu0 0.0
      %1033 = vmatprep.subr.mxu0 0.0
      %1034 = vmatpush1.xpose.msra.mxu0 0.0
      %1035 = vmatprep.subr.mxu0 0.0
      %1036 = vmatpush1.xpose.msra.mxu0 0.0
      %1037 = vmatprep.subr.mxu0 0.0
      %1038 = vmatpush1.xpose.msra.mxu0 0.0
      %1039 = vmatprep.subr.mxu0 0.0
      %1040 = vmatpush1.xpose.msra.mxu0 0.0
      %1041 = vmatprep.subr.mxu0 0.0
      %1042 = vmatpush1.xpose.msra.mxu0 0.0
      %1043 = vmatprep.subr.mxu0 0.0
      %1044 = vmatpush1.xpose.msra.mxu0 0.0
      %1045 = vmatprep.subr.mxu0 0.0
      %1046 = vmatpush1.xpose.msra.mxu0 0.0
      %1047 = vmatprep.subr.mxu0 0.0
      %1048 = vmatpush1.xpose.msra.mxu0 0.0
      %1049 = vmatprep.subr.mxu0 0.0
      %1050 = vmatpush1.xpose.msra.mxu0 0.0
      %1051 = vmatprep.subr.mxu0 0.0
      %1052 = vmatpush1.xpose.msra.mxu0 0.0
      %1053 = vmatprep.subr.mxu0 0.0
      %1054 = vmatpush1.xpose.msra.mxu0 0.0
      %1055 = vmatprep.subr.mxu0 0.0
      %1056 = vmatpush1.xpose.msra.mxu0 0.0
      %1057 = vmatprep.subr.mxu0 0.0
      %1058 = vmatpush1.xpose.msra.mxu0 0.0
      %1059 = vmatprep.subr.mxu0 0.0
      %1060 = vmatpush1.xpose.msra.mxu0 0.0
      %1061 = vmatprep.subr.mxu0 0.0
      %1062 = vmatpush1.xpose.msra.mxu0 0.0
      %1063 = vmatprep.subr.mxu0 0.0
      %1064 = vmatpush1.xpose.msra.mxu0 0.0
      %1065 = vmatprep.subr.mxu0 0.0
      %1066 = vmatpush1.xpose.msra.mxu0 0.0
      %1067 = vmatprep.subr.mxu0 0.0
      %1068 = vmatpush1.xpose.msra.mxu0 0.0
      %1069 = vmatprep.subr.mxu0 0.0
      %1070 = vmatpush1.xpose.msra.mxu0 0.0
      %1071 = vmatprep.subr.mxu0 0.0
      %1072 = vmatpush1.xpose.msra.mxu0 0.0
      %1073 = vmatprep.mubr.f32.mxu0 0.0
      %v1074 = vand.u32 %v777, 4294901760
      %v1075 = vsub.f32 %v777, %v1074
      %v1076 = vand.u32 %v1075, 4294901760
      %1077 = vmatmul.mubr.f32.gmra.mrb[0].mxu0 %v1076
      %v1078 = vpop.f32.mrb[0].mxu0
      %v1079 = vadd.f32 %v1005, %v1078
      %v1080 = vpop.f32.mrb[0].mxu0
      %1081 = vdwg.mxu0
      %1082 = vmatprep.subr.mxu0 0.0
      %v1083 = vand.u32 %v780, 4294901760
      %v1084 = vsub.f32 %v780, %v1083
      %v1085 = vand.u32 %v1084, 4294901760
      %1086 = vmatpush1.xpose.msra.mxu0 %v1085
      %1087 = vmatprep.subr.mxu0 0.0
      %1088 = vmatpush1.xpose.msra.mxu0 0.0
      %1089 = vmatprep.subr.mxu0 0.0
      %1090 = vmatpush1.xpose.msra.mxu0 0.0
      %1091 = vmatprep.subr.mxu0 0.0
      %1092 = vmatpush1.xpose.msra.mxu0 0.0
      %1093 = vmatprep.subr.mxu0 0.0
      %1094 = vmatpush1.xpose.msra.mxu0 0.0
      %1095 = vmatprep.subr.mxu0 0.0
      %1096 = vmatpush1.xpose.msra.mxu0 0.0
      %1097 = vmatprep.subr.mxu0 0.0
      %1098 = vmatpush1.xpose.msra.mxu0 0.0
      %1099 = vmatprep.subr.mxu0 0.0
      %1100 = vmatpush1.xpose.msra.mxu0 0.0
      %1101 = vmatprep.subr.mxu0 0.0
      %1102 = vmatpush1.xpose.msra.mxu0 0.0
      %1103 = vmatprep.subr.mxu0 0.0
      %1104 = vmatpush1.xpose.msra.mxu0 0.0
      %1105 = vmatprep.subr.mxu0 0.0
      %1106 = vmatpush1.xpose.msra.mxu0 0.0
      %1107 = vmatprep.subr.mxu0 0.0
      %1108 = vmatpush1.xpose.msra.mxu0 0.0
      %1109 = vmatprep.subr.mxu0 0.0
      %1110 = vmatpush1.xpose.msra.mxu0 0.0
      %1111 = vmatprep.subr.mxu0 0.0
      %1112 = vmatpush1.xpose.msra.mxu0 0.0
      %1113 = vmatprep.subr.mxu0 0.0
      %1114 = vmatpush1.xpose.msra.mxu0 0.0
      %1115 = vmatprep.subr.mxu0 0.0
      %1116 = vmatpush1.xpose.msra.mxu0 0.0
      %1117 = vmatprep.subr.mxu0 0.0
      %1118 = vmatpush1.xpose.msra.mxu0 0.0
      %1119 = vmatprep.subr.mxu0 0.0
      %1120 = vmatpush1.xpose.msra.mxu0 0.0
      %1121 = vmatprep.subr.mxu0 0.0
      %1122 = vmatpush1.xpose.msra.mxu0 0.0
      %1123 = vmatprep.subr.mxu0 0.0
      %1124 = vmatpush1.xpose.msra.mxu0 0.0
      %1125 = vmatprep.subr.mxu0 0.0
      %1126 = vmatpush1.xpose.msra.mxu0 0.0
      %1127 = vmatprep.subr.mxu0 0.0
      %1128 = vmatpush1.xpose.msra.mxu0 0.0
      %1129 = vmatprep.subr.mxu0 0.0
      %1130 = vmatpush1.xpose.msra.mxu0 0.0
      %1131 = vmatprep.subr.mxu0 0.0
      %1132 = vmatpush1.xpose.msra.mxu0 0.0
      %1133 = vmatprep.subr.mxu0 0.0
      %1134 = vmatpush1.xpose.msra.mxu0 0.0
      %1135 = vmatprep.subr.mxu0 0.0
      %1136 = vmatpush1.xpose.msra.mxu0 0.0
      %1137 = vmatprep.subr.mxu0 0.0
      %1138 = vmatpush1.xpose.msra.mxu0 0.0
      %1139 = vmatprep.subr.mxu0 0.0
      %1140 = vmatpush1.xpose.msra.mxu0 0.0
      %1141 = vmatprep.subr.mxu0 0.0
      %1142 = vmatpush1.xpose.msra.mxu0 0.0
      %1143 = vmatprep.subr.mxu0 0.0
      %1144 = vmatpush1.xpose.msra.mxu0 0.0
      %1145 = vmatprep.subr.mxu0 0.0
      %1146 = vmatpush1.xpose.msra.mxu0 0.0
      %1147 = vmatprep.subr.mxu0 0.0
      %1148 = vmatpush1.xpose.msra.mxu0 0.0
      %1149 = vmatprep.mubr.f32.mxu0 0.0
      %v1150 = vand.u32 %v777, 4294901760
      %1151 = vmatmul.mubr.f32.gmra.mrb[0].mxu0 %v1150
      %v1152 = vpop.f32.mrb[0].mxu0
      %v1153 = vadd.f32 %v1079, %v1152
      %v1154 = vpop.f32.mrb[0].mxu0
      %1155 = vdwg.mxu0
      %1156 = vmatprep.subr.mxu0 0.0
      %v1157 = vand.u32 %v780, 4294901760
      %1158 = vmatpush1.xpose.msra.mxu0 %v1157
      %1159 = vmatprep.subr.mxu0 0.0
      %1160 = vmatpush1.xpose.msra.mxu0 0.0
      %1161 = vmatprep.subr.mxu0 0.0
      %1162 = vmatpush1.xpose.msra.mxu0 0.0
      %1163 = vmatprep.subr.mxu0 0.0
      %1164 = vmatpush1.xpose.msra.mxu0 0.0
      %1165 = vmatprep.subr.mxu0 0.0
      %1166 = vmatpush1.xpose.msra.mxu0 0.0
      %1167 = vmatprep.subr.mxu0 0.0
      %1168 = vmatpush1.xpose.msra.mxu0 0.0
      %1169 = vmatprep.subr.mxu0 0.0
      %1170 = vmatpush1.xpose.msra.mxu0 0.0
      %1171 = vmatprep.subr.mxu0 0.0
      %1172 = vmatpush1.xpose.msra.mxu0 0.0
      %1173 = vmatprep.subr.mxu0 0.0
      %1174 = vmatpush1.xpose.msra.mxu0 0.0
      %1175 = vmatprep.subr.mxu0 0.0
      %1176 = vmatpush1.xpose.msra.mxu0 0.0
      %1177 = vmatprep.subr.mxu0 0.0
      %1178 = vmatpush1.xpose.msra.mxu0 0.0
      %1179 = vmatprep.subr.mxu0 0.0
      %1180 = vmatpush1.xpose.msra.mxu0 0.0
      %1181 = vmatprep.subr.mxu0 0.0
      %1182 = vmatpush1.xpose.msra.mxu0 0.0
      %1183 = vmatprep.subr.mxu0 0.0
      %1184 = vmatpush1.xpose.msra.mxu0 0.0
      %1185 = vmatprep.subr.mxu0 0.0
      %1186 = vmatpush1.xpose.msra.mxu0 0.0
      %1187 = vmatprep.subr.mxu0 0.0
      %1188 = vmatpush1.xpose.msra.mxu0 0.0
      %1189 = vmatprep.subr.mxu0 0.0
      %1190 = vmatpush1.xpose.msra.mxu0 0.0
      %1191 = vmatprep.subr.mxu0 0.0
      %1192 = vmatpush1.xpose.msra.mxu0 0.0
      %1193 = vmatprep.subr.mxu0 0.0
      %1194 = vmatpush1.xpose.msra.mxu0 0.0
      %1195 = vmatprep.subr.mxu0 0.0
      %1196 = vmatpush1.xpose.msra.mxu0 0.0
      %1197 = vmatprep.subr.mxu0 0.0
      %1198 = vmatpush1.xpose.msra.mxu0 0.0
      %1199 = vmatprep.subr.mxu0 0.0
      %1200 = vmatpush1.xpose.msra.mxu0 0.0
      %1201 = vmatprep.subr.mxu0 0.0
      %1202 = vmatpush1.xpose.msra.mxu0 0.0
      %1203 = vmatprep.subr.mxu0 0.0
      %1204 = vmatpush1.xpose.msra.mxu0 0.0
      %1205 = vmatprep.subr.mxu0 0.0
      %1206 = vmatpush1.xpose.msra.mxu0 0.0
      %1207 = vmatprep.subr.mxu0 0.0
      %1208 = vmatpush1.xpose.msra.mxu0 0.0
      %1209 = vmatprep.subr.mxu0 0.0
      %1210 = vmatpush1.xpose.msra.mxu0 0.0
      %1211 = vmatprep.subr.mxu0 0.0
      %1212 = vmatpush1.xpose.msra.mxu0 0.0
      %1213 = vmatprep.subr.mxu0 0.0
      %1214 = vmatpush1.xpose.msra.mxu0 0.0
      %1215 = vmatprep.subr.mxu0 0.0
      %1216 = vmatpush1.xpose.msra.mxu0 0.0
      %1217 = vmatprep.subr.mxu0 0.0
      %1218 = vmatpush1.xpose.msra.mxu0 0.0
      %1219 = vmatprep.subr.mxu0 0.0
      %1220 = vmatpush1.xpose.msra.mxu0 0.0
      %1221 = vmatprep.mubr.f32.mxu0 0.0
      %v1222 = vand.u32 %v777, 4294901760
      %1223 = vmatmul.mubr.f32.gmra.mrb[0].mxu0 %v1222
      %v1224 = vpop.f32.mrb[0].mxu0
      %v1225 = vadd.f32 %v1153, %v1224
      %v1226 = vpop.f32.mrb[0].mxu0
      %1227 = vdwg.mxu0
      %v1228 = vmul.f32 %v1225, %v1225
      %vm1229 = vcmask 57344
      %v1230 = vsel %vm1229, %v1228, 0.0
      %1231 = vadd.xlane.f32.xlu0 %v1230
      %v1232 = vpop.xlane.xlu0 %1231
      %v1233 = vrot.slane %v1232, 4
      %v1234 = vadd.f32 %v1232, %v1233
      %v1235 = vrot.slane %v1234, 2
      %v1236 = vadd.f32 %v1234, %v1235
      %v1237 = vrot.slane %v1236, 1
      %v1238 = vadd.f32 %v1236, %v1237
      %s1239 = vtos %v1238
      %v1240 = vstv %s1239
      %v1241 = vrsqrt.pop %v1240
      %v1242 = vmul.f32 %v1240, %v1241
      %vm1243 = vcmp.eq.f32.partialorder %v1240, inf
      %v1244 = vsel %vm1243, %v1240, %v1242
      %vm1245 = vcmp.eq.f32.partialorder %v1240, 0.0
      %v1246 = vand.u32 %v1240, 2147483648
      %v1247 = vsel %vm1245, %v1246, %v1244
      %s1248 = vtos %v1247
      %s1249 = sadd.f32 %s1248, 1e-12
      %v1250 = vstv %s1249
      %v1251 = vrcp.pop %v1250
      %s1252 = vtos %v1251
      %v1253 = vstv %s1252
      %v1254 = vmul.f32 %v1225, %v1253
      %v1255 = vmul.f32 %v1254, %v1225
      %v1256 = vsel %vm1229, %v1255, 0.0
      %1257 = vadd.xlane.f32.xlu0 %v1256
      %v1258 = vpop.xlane.xlu0 %1257
      %v1259 = vrot.slane %v1258, 4
      %v1260 = vadd.f32 %v1258, %v1259
      %v1261 = vrot.slane %v1260, 2
      %v1262 = vadd.f32 %v1260, %v1261
      %v1263 = vrot.slane %v1262, 1
      %v1264 = vadd.f32 %v1262, %v1263
      %s1265 = vtos %v1264
      %v1266 = vstv %s1265
      %v1267 = vrcp.pop %v1266
      %s1268 = vtos %v1267
      %1269 = vst.msk [vmem:[%s292] sm:$0x1] %vm1229, %v1254
      %1270 = vst.msk [vmem:[%s295] sm:$0x1] %vm749, %v774
      %v1271 = vld [vmem:[%s284] sm:$0xff]
      %v1272 = vld [vmem:[%s284 + $0x8] sm:$0xff]
      %v1273 = vld [vmem:[%s284 + $0x10] sm:$0xff]
      %v1274 = vld [vmem:[%s284 + $0x18] sm:$0xff]
      %v1275 = vld [vmem:[%s284 + $0x20] sm:$0xff]
      %v1276 = vld [vmem:[%s284 + $0x28] sm:$0xff]
      %v1277 = vld [vmem:[%s284 + $0x30] sm:$0xff]
      %v1278 = vld [vmem:[%s284 + $0x38] sm:$0xff]
      %v1279 = vld [vmem:[%s284 + $0x40] sm:$0xff]
      %v1280 = vld [vmem:[%s284 + $0x48] sm:$0xff]
      %v1281 = vld [vmem:[%s284 + $0x50] sm:$0xff]
      %v1282 = vld [vmem:[%s284 + $0x58] sm:$0xff]
      %v1283 = vld [vmem:[%s284 + $0x60] sm:$0xff]
      %v1284 = vld [vmem:[%s284 + $0x68] sm:$0xff]
      %v1285 = vld [vmem:[%s284 + $0x70] sm:$0xff]
      %v1286 = vld [vmem:[%s284 + $0x78] sm:$0xff]
      %v1287 = vld [vmem:[%s284 + $0x80] sm:$0xff]
      %v1288 = vld [vmem:[%s284 + $0x88] sm:$0xff]
      %v1289 = vld [vmem:[%s284 + $0x90] sm:$0xff]
      %v1290 = vld [vmem:[%s284 + $0x98] sm:$0xff]
      %v1291 = vld [vmem:[%s284 + $0xa0] sm:$0xff]
      %v1292 = vld [vmem:[%s284 + $0xa8] sm:$0xff]
      %v1293 = vld [vmem:[%s284 + $0xb0] sm:$0xff]
      %v1294 = vld [vmem:[%s284 + $0xb8] sm:$0xff]
      %v1295 = vld [vmem:[%s284 + $0xc0] sm:$0xff]
      %v1296 = vld [vmem:[%s284 + $0xc8] sm:$0xff]
      %v1297 = vld [vmem:[%s284 + $0xd0] sm:$0xff]
      %v1298 = vld [vmem:[%s284 + $0xd8] sm:$0xff]
      %v1299 = vld [vmem:[%s284 + $0xe0] sm:$0xff]
      %v1300 = vld [vmem:[%s284 + $0xe8] sm:$0xff]
      %v1301 = vld [vmem:[%s284 + $0xf0] sm:$0xff]
      %v1302 = vld [vmem:[%s284 + $0xf8] sm:$0xff]
      %v1303 = vld [vmem:[%s284 + $0x100] sm:$0xff]
      %v1304 = vld [vmem:[%s284 + $0x108] sm:$0xff]
      %v1305 = vld [vmem:[%s284 + $0x110] sm:$0xff]
      %v1306 = vld [vmem:[%s284 + $0x118] sm:$0xff]
      %v1307 = vld [vmem:[%s1] sm:$0xff]
      %v1308 = vld [vmem:[%s284 + $0x1] sm:$0xff]
      %v1309 = vld [vmem:[%s284 + $0x9] sm:$0xff]
      %v1310 = vld [vmem:[%s284 + $0x11] sm:$0xff]
      %v1311 = vld [vmem:[%s284 + $0x19] sm:$0xff]
      %v1312 = vld [vmem:[%s284 + $0x21] sm:$0xff]
      %v1313 = vld [vmem:[%s284 + $0x29] sm:$0xff]
      %v1314 = vld [vmem:[%s284 + $0x31] sm:$0xff]
      %v1315 = vld [vmem:[%s284 + $0x39] sm:$0xff]
      %v1316 = vld [vmem:[%s284 + $0x41] sm:$0xff]
      %v1317 = vld [vmem:[%s284 + $0x49] sm:$0xff]
      %v1318 = vld [vmem:[%s284 + $0x51] sm:$0xff]
      %v1319 = vld [vmem:[%s284 + $0x59] sm:$0xff]
      %v1320 = vld [vmem:[%s284 + $0x61] sm:$0xff]
      %v1321 = vld [vmem:[%s284 + $0x69] sm:$0xff]
      %v1322 = vld [vmem:[%s284 + $0x71] sm:$0xff]
      %v1323 = vld [vmem:[%s284 + $0x79] sm:$0xff]
      %v1324 = vld [vmem:[%s284 + $0x81] sm:$0xff]
      %v1325 = vld [vmem:[%s284 + $0x89] sm:$0xff]
      %v1326 = vld [vmem:[%s284 + $0x91] sm:$0xff]
      %v1327 = vld [vmem:[%s284 + $0x99] sm:$0xff]
      %v1328 = vld [vmem:[%s284 + $0xa1] sm:$0xff]
      %v1329 = vld [vmem:[%s284 + $0xa9] sm:$0xff]
      %v1330 = vld [vmem:[%s284 + $0xb1] sm:$0xff]
      %v1331 = vld [vmem:[%s284 + $0xb9] sm:$0xff]
      %v1332 = vld [vmem:[%s284 + $0xc1] sm:$0xff]
      %v1333 = vld [vmem:[%s284 + $0xc9] sm:$0xff]
      %v1334 = vld [vmem:[%s284 + $0xd1] sm:$0xff]
      %v1335 = vld [vmem:[%s284 + $0xd9] sm:$0xff]
      %v1336 = vld [vmem:[%s284 + $0xe1] sm:$0xff]
      %v1337 = vld [vmem:[%s284 + $0xe9] sm:$0xff]
      %v1338 = vld [vmem:[%s284 + $0xf1] sm:$0xff]
      %v1339 = vld [vmem:[%s284 + $0xf9] sm:$0xff]
      %v1340 = vld [vmem:[%s284 + $0x101] sm:$0xff]
      %v1341 = vld [vmem:[%s284 + $0x109] sm:$0xff]
      %v1342 = vld [vmem:[%s284 + $0x111] sm:$0xff]
      %v1343 = vld [vmem:[%s284 + $0x119] sm:$0xff]
      %s1344 = scalar_lea.vmem %s1, 8
      %v1345 = vld [vmem:[%s1344] sm:$0xff]
      %vm1346 = vcmask 31744
      %v1348 = vsel %vm1346, %v1345, 0
      %v1351 = vsel %vm1346, %v1308, 0
      %v1354 = vsel %vm1346, %v1309, 0
      %v1357 = vsel %vm1346, %v1310, 0
      %v1360 = vsel %vm1346, %v1311, 0
      %v1363 = vsel %vm1346, %v1312, 0
      %v1366 = vsel %vm1346, %v1313, 0
      %v1369 = vsel %vm1346, %v1314, 0
      %v1372 = vsel %vm1346, %v1315, 0
      %v1375 = vsel %vm1346, %v1316, 0
      %v1378 = vsel %vm1346, %v1317, 0
      %v1381 = vsel %vm1346, %v1318, 0
      %v1384 = vsel %vm1346, %v1319, 0
      %v1387 = vsel %vm1346, %v1320, 0
      %v1390 = vsel %vm1346, %v1321, 0
      %v1393 = vsel %vm1346, %v1322, 0
      %v1396 = vsel %vm1346, %v1323, 0
      %v1399 = vsel %vm1346, %v1324, 0
      %v1402 = vsel %vm1346, %v1325, 0
      %v1405 = vsel %vm1346, %v1326, 0
      %v1408 = vsel %vm1346, %v1327, 0
      %v1411 = vsel %vm1346, %v1328, 0
      %v1414 = vsel %vm1346, %v1329, 0
      %v1417 = vsel %vm1346, %v1330, 0
      %v1420 = vsel %vm1346, %v1331, 0
      %v1423 = vsel %vm1346, %v1332, 0
      %v1426 = vsel %vm1346, %v1333, 0
      %v1429 = vsel %vm1346, %v1334, 0
      %v1432 = vsel %vm1346, %v1335, 0
      %v1435 = vsel %vm1346, %v1336, 0
      %v1438 = vsel %vm1346, %v1337, 0
      %v1441 = vsel %vm1346, %v1338, 0
      %v1444 = vsel %vm1346, %v1339, 0
      %v1447 = vsel %vm1346, %v1340, 0
      %v1450 = vsel %vm1346, %v1341, 0
      %v1453 = vsel %vm1346, %v1342, 0
      %v1456 = vsel %vm1346, %v1343, 0
      %1458 = vmatprep.subr.mxu0 0.0
      %1459 = vmatpush1.xpose.msra.mxu0 %v1351
      %1460 = vmatprep.subr.mxu0 0.0
      %1461 = vmatpush1.xpose.msra.mxu0 %v1354
      %1462 = vmatprep.subr.mxu0 0.0
      %1463 = vmatpush1.xpose.msra.mxu0 %v1357
      %1464 = vmatprep.subr.mxu0 0.0
      %1465 = vmatpush1.xpose.msra.mxu0 %v1360
      %1466 = vmatprep.subr.mxu0 0.0
      %1467 = vmatpush1.xpose.msra.mxu0 %v1363
      %1468 = vmatprep.subr.mxu0 0.0
      %1469 = vmatpush1.xpose.msra.mxu0 %v1366
      %1470 = vmatprep.subr.mxu0 0.0
      %1471 = vmatpush1.xpose.msra.mxu0 %v1369
      %1472 = vmatprep.subr.mxu0 0.0
      %1473 = vmatpush1.xpose.msra.mxu0 %v1372
      %1474 = vmatprep.subr.mxu0 0.0
      %1475 = vmatpush1.xpose.msra.mxu0 %v1375
      %1476 = vmatprep.subr.mxu0 0.0
      %1477 = vmatpush1.xpose.msra.mxu0 %v1378
      %1478 = vmatprep.subr.mxu0 0.0
      %1479 = vmatpush1.xpose.msra.mxu0 %v1381
      %1480 = vmatprep.subr.mxu0 0.0
      %1481 = vmatpush1.xpose.msra.mxu0 %v1384
      %1482 = vmatprep.subr.mxu0 0.0
      %1483 = vmatpush1.xpose.msra.mxu0 %v1387
      %1484 = vmatprep.subr.mxu0 0.0
      %1485 = vmatpush1.xpose.msra.mxu0 %v1390
      %1486 = vmatprep.subr.mxu0 0.0
      %1487 = vmatpush1.xpose.msra.mxu0 %v1393
      %1488 = vmatprep.subr.mxu0 0.0
      %1489 = vmatpush1.xpose.msra.mxu0 %v1396
      %1490 = vmatprep.subr.mxu0 0.0
      %1491 = vmatpush1.xpose.msra.mxu0 %v1399
      %1492 = vmatprep.subr.mxu0 0.0
      %1493 = vmatpush1.xpose.msra.mxu0 %v1402
      %1494 = vmatprep.subr.mxu0 0.0
      %1495 = vmatpush1.xpose.msra.mxu0 %v1405
      %1496 = vmatprep.subr.mxu0 0.0
      %1497 = vmatpush1.xpose.msra.mxu0 %v1408
      %1498 = vmatprep.subr.mxu0 0.0
      %1499 = vmatpush1.xpose.msra.mxu0 %v1411
      %1500 = vmatprep.subr.mxu0 0.0
      %1501 = vmatpush1.xpose.msra.mxu0 %v1414
      %1502 = vmatprep.subr.mxu0 0.0
      %1503 = vmatpush1.xpose.msra.mxu0 %v1417
      %1504 = vmatprep.subr.mxu0 0.0
      %1505 = vmatpush1.xpose.msra.mxu0 %v1420
      %1506 = vmatprep.subr.mxu0 0.0
      %1507 = vmatpush1.xpose.msra.mxu0 %v1423
      %1508 = vmatprep.subr.mxu0 0.0
      %1509 = vmatpush1.xpose.msra.mxu0 %v1426
      %1510 = vmatprep.subr.mxu0 0.0
      %1511 = vmatpush1.xpose.msra.mxu0 %v1429
      %1512 = vmatprep.subr.mxu0 0.0
      %1513 = vmatpush1.xpose.msra.mxu0 %v1432
      %1514 = vmatprep.subr.mxu0 0.0
      %1515 = vmatpush1.xpose.msra.mxu0 %v1435
      %1516 = vmatprep.subr.mxu0 0.0
      %1517 = vmatpush1.xpose.msra.mxu0 %v1438
      %1518 = vmatprep.subr.mxu0 0.0
      %1519 = vmatpush1.xpose.msra.mxu0 %v1441
      %1520 = vmatprep.subr.mxu0 0.0
      %1521 = vmatpush1.xpose.msra.mxu0 %v1444
      %1522 = vmatprep.mubr.f32.mxu0 0.0
      %1523 = vmatmul.mubr.f32.gmra.mrb[0].mxu0 %v1348
      %v1524 = vpop.f32.mrb[0].mxu0
      %v1525 = vadd.f32 0.0, %v1524
      %v1526 = vpop.f32.mrb[0].mxu0
      %v1527 = vadd.f32 0.0, %v1526
      %1528 = vdwg.mxu0
      %1529 = vmatprep.subr.mxu0 0.0
      %1530 = vmatpush1.xpose.msra.mxu0 %v1447
      %1531 = vmatprep.subr.mxu0 0.0
      %1532 = vmatpush1.xpose.msra.mxu0 %v1450
      %1533 = vmatprep.subr.mxu0 0.0
      %1534 = vmatpush1.xpose.msra.mxu0 %v1453
      %1535 = vmatprep.subr.mxu0 0.0
      %1536 = vmatpush1.xpose.msra.mxu0 %v1456
      %1537 = vmatprep.subr.mxu0 0.0
      %1538 = vmatpush1.xpose.msra.mxu0 0.0
      %1539 = vmatprep.subr.mxu0 0.0
      %1540 = vmatpush1.xpose.msra.mxu0 0.0
      %1541 = vmatprep.subr.mxu0 0.0
      %1542 = vmatpush1.xpose.msra.mxu0 0.0
      %1543 = vmatprep.subr.mxu0 0.0
      %1544 = vmatpush1.xpose.msra.mxu0 0.0
      %1545 = vmatprep.subr.mxu0 0.0
      %1546 = vmatpush1.xpose.msra.mxu0 0.0
      %1547 = vmatprep.subr.mxu0 0.0
      %1548 = vmatpush1.xpose.msra.mxu0 0.0
      %1549 = vmatprep.subr.mxu0 0.0
      %1550 = vmatpush1.xpose.msra.mxu0 0.0
      %1551 = vmatprep.subr.mxu0 0.0
      %1552 = vmatpush1.xpose.msra.mxu0 0.0
      %1553 = vmatprep.subr.mxu0 0.0
      %1554 = vmatpush1.xpose.msra.mxu0 0.0
      %1555 = vmatprep.subr.mxu0 0.0
      %1556 = vmatpush1.xpose.msra.mxu0 0.0
      %1557 = vmatprep.subr.mxu0 0.0
      %1558 = vmatpush1.xpose.msra.mxu0 0.0
      %1559 = vmatprep.subr.mxu0 0.0
      %1560 = vmatpush1.xpose.msra.mxu0 0.0
      %1561 = vmatprep.subr.mxu0 0.0
      %1562 = vmatpush1.xpose.msra.mxu0 0.0
      %1563 = vmatprep.subr.mxu0 0.0
      %1564 = vmatpush1.xpose.msra.mxu0 0.0
      %1565 = vmatprep.subr.mxu0 0.0
      %1566 = vmatpush1.xpose.msra.mxu0 0.0
      %1567 = vmatprep.subr.mxu0 0.0
      %1568 = vmatpush1.xpose.msra.mxu0 0.0
      %1569 = vmatprep.subr.mxu0 0.0
      %1570 = vmatpush1.xpose.msra.mxu0 0.0
      %1571 = vmatprep.subr.mxu0 0.0
      %1572 = vmatpush1.xpose.msra.mxu0 0.0
      %1573 = vmatprep.subr.mxu0 0.0
      %1574 = vmatpush1.xpose.msra.mxu0 0.0
      %1575 = vmatprep.subr.mxu0 0.0
      %1576 = vmatpush1.xpose.msra.mxu0 0.0
      %1577 = vmatprep.subr.mxu0 0.0
      %1578 = vmatpush1.xpose.msra.mxu0 0.0
      %1579 = vmatprep.subr.mxu0 0.0
      %1580 = vmatpush1.xpose.msra.mxu0 0.0
      %1581 = vmatprep.subr.mxu0 0.0
      %1582 = vmatpush1.xpose.msra.mxu0 0.0
      %1583 = vmatprep.subr.mxu0 0.0
      %1584 = vmatpush1.xpose.msra.mxu0 0.0
      %1585 = vmatprep.subr.mxu0 0.0
      %1586 = vmatpush1.xpose.msra.mxu0 0.0
      %1587 = vmatprep.subr.mxu0 0.0
      %1588 = vmatpush1.xpose.msra.mxu0 0.0
      %1589 = vmatprep.subr.mxu0 0.0
      %1590 = vmatpush1.xpose.msra.mxu0 0.0
      %1591 = vmatprep.subr.mxu0 0.0
      %1592 = vmatpush1.xpose.msra.mxu0 0.0
      %1593 = vmatprep.mubr.f32.mxu0 0.0
      %1594 = vmatmul.mubr.f32.gmra.mrb[0].mxu0 %v1348
      %v1595 = vpop.f32.mrb[0].mxu0
      %v1596 = vadd.f32 0.0, %v1595
      %v1597 = vpop.f32.mrb[0].mxu0
      %1598 = vdwg.mxu0
      %v1600 = vsel %vm1346, %v1307, 0
      %v1603 = vsel %vm1346, %v1271, 0
      %v1606 = vsel %vm1346, %v1272, 0
      %v1609 = vsel %vm1346, %v1273, 0
      %v1612 = vsel %vm1346, %v1274, 0
      %v1615 = vsel %vm1346, %v1275, 0
      %v1618 = vsel %vm1346, %v1276, 0
      %v1621 = vsel %vm1346, %v1277, 0
      %v1624 = vsel %vm1346, %v1278, 0
      %v1627 = vsel %vm1346, %v1279, 0
      %v1630 = vsel %vm1346, %v1280, 0
      %v1633 = vsel %vm1346, %v1281, 0
      %v1636 = vsel %vm1346, %v1282, 0
      %v1639 = vsel %vm1346, %v1283, 0
      %v1642 = vsel %vm1346, %v1284, 0
      %v1645 = vsel %vm1346, %v1285, 0
      %v1648 = vsel %vm1346, %v1286, 0
      %v1651 = vsel %vm1346, %v1287, 0
      %v1654 = vsel %vm1346, %v1288, 0
      %v1657 = vsel %vm1346, %v1289, 0
      %v1660 = vsel %vm1346, %v1290, 0
      %v1663 = vsel %vm1346, %v1291, 0
      %v1666 = vsel %vm1346, %v1292, 0
      %v1669 = vsel %vm1346, %v1293, 0
      %v1672 = vsel %vm1346, %v1294, 0
      %v1675 = vsel %vm1346, %v1295, 0
      %v1678 = vsel %vm1346, %v1296, 0
      %v1681 = vsel %vm1346, %v1297, 0
      %v1684 = vsel %vm1346, %v1298, 0
      %v1687 = vsel %vm1346, %v1299, 0
      %v1690 = vsel %vm1346, %v1300, 0
      %v1693 = vsel %vm1346, %v1301, 0
      %v1696 = vsel %vm1346, %v1302, 0
      %v1699 = vsel %vm1346, %v1303, 0
      %v1702 = vsel %vm1346, %v1304, 0
      %v1705 = vsel %vm1346, %v1305, 0
      %v1708 = vsel %vm1346, %v1306, 0
      %1710 = vmatprep.subr.mxu0 0.0
      %1711 = vmatpush1.xpose.msra.mxu0 %v1603
      %1712 = vmatprep.subr.mxu0 0.0
      %1713 = vmatpush1.xpose.msra.mxu0 %v1606
      %1714 = vmatprep.subr.mxu0 0.0
      %1715 = vmatpush1.xpose.msra.mxu0 %v1609
      %1716 = vmatprep.subr.mxu0 0.0
      %1717 = vmatpush1.xpose.msra.mxu0 %v1612
      %1718 = vmatprep.subr.mxu0 0.0
      %1719 = vmatpush1.xpose.msra.mxu0 %v1615
      %1720 = vmatprep.subr.mxu0 0.0
      %1721 = vmatpush1.xpose.msra.mxu0 %v1618
      %1722 = vmatprep.subr.mxu0 0.0
      %1723 = vmatpush1.xpose.msra.mxu0 %v1621
      %1724 = vmatprep.subr.mxu0 0.0
      %1725 = vmatpush1.xpose.msra.mxu0 %v1624
      %1726 = vmatprep.subr.mxu0 0.0
      %1727 = vmatpush1.xpose.msra.mxu0 %v1627
      %1728 = vmatprep.subr.mxu0 0.0
      %1729 = vmatpush1.xpose.msra.mxu0 %v1630
      %1730 = vmatprep.subr.mxu0 0.0
      %1731 = vmatpush1.xpose.msra.mxu0 %v1633
      %1732 = vmatprep.subr.mxu0 0.0
      %1733 = vmatpush1.xpose.msra.mxu0 %v1636
      %1734 = vmatprep.subr.mxu0 0.0
      %1735 = vmatpush1.xpose.msra.mxu0 %v1639
      %1736 = vmatprep.subr.mxu0 0.0
      %1737 = vmatpush1.xpose.msra.mxu0 %v1642
      %1738 = vmatprep.subr.mxu0 0.0
      %1739 = vmatpush1.xpose.msra.mxu0 %v1645
      %1740 = vmatprep.subr.mxu0 0.0
      %1741 = vmatpush1.xpose.msra.mxu0 %v1648
      %1742 = vmatprep.subr.mxu0 0.0
      %1743 = vmatpush1.xpose.msra.mxu0 %v1651
      %1744 = vmatprep.subr.mxu0 0.0
      %1745 = vmatpush1.xpose.msra.mxu0 %v1654
      %1746 = vmatprep.subr.mxu0 0.0
      %1747 = vmatpush1.xpose.msra.mxu0 %v1657
      %1748 = vmatprep.subr.mxu0 0.0
      %1749 = vmatpush1.xpose.msra.mxu0 %v1660
      %1750 = vmatprep.subr.mxu0 0.0
      %1751 = vmatpush1.xpose.msra.mxu0 %v1663
      %1752 = vmatprep.subr.mxu0 0.0
      %1753 = vmatpush1.xpose.msra.mxu0 %v1666
      %1754 = vmatprep.subr.mxu0 0.0
      %1755 = vmatpush1.xpose.msra.mxu0 %v1669
      %1756 = vmatprep.subr.mxu0 0.0
      %1757 = vmatpush1.xpose.msra.mxu0 %v1672
      %1758 = vmatprep.subr.mxu0 0.0
      %1759 = vmatpush1.xpose.msra.mxu0 %v1675
      %1760 = vmatprep.subr.mxu0 0.0
      %1761 = vmatpush1.xpose.msra.mxu0 %v1678
      %1762 = vmatprep.subr.mxu0 0.0
      %1763 = vmatpush1.xpose.msra.mxu0 %v1681
      %1764 = vmatprep.subr.mxu0 0.0
      %1765 = vmatpush1.xpose.msra.mxu0 %v1684
      %1766 = vmatprep.subr.mxu0 0.0
      %1767 = vmatpush1.xpose.msra.mxu0 %v1687
      %1768 = vmatprep.subr.mxu0 0.0
      %1769 = vmatpush1.xpose.msra.mxu0 %v1690
      %1770 = vmatprep.subr.mxu0 0.0
      %1771 = vmatpush1.xpose.msra.mxu0 %v1693
      %1772 = vmatprep.subr.mxu0 0.0
      %1773 = vmatpush1.xpose.msra.mxu0 %v1696
      %1774 = vmatprep.mubr.f32.mxu0 0.0
      %1775 = vmatmul.mubr.f32.gmra.mrb[0].mxu0 %v1600
      %v1776 = vpop.f32.mrb[0].mxu0
      %v1777 = vadd.f32 %v1525, %v1776
      %v1778 = vpop.f32.mrb[0].mxu0
      %v1779 = vadd.f32 %v1527, %v1778
      %1780 = vdwg.mxu0
      %1781 = vmatprep.subr.mxu0 0.0
      %1782 = vmatpush1.xpose.msra.mxu0 %v1699
      %1783 = vmatprep.subr.mxu0 0.0
      %1784 = vmatpush1.xpose.msra.mxu0 %v1702
      %1785 = vmatprep.subr.mxu0 0.0
      %1786 = vmatpush1.xpose.msra.mxu0 %v1705
      %1787 = vmatprep.subr.mxu0 0.0
      %1788 = vmatpush1.xpose.msra.mxu0 %v1708
      %1789 = vmatprep.subr.mxu0 0.0
      %1790 = vmatpush1.xpose.msra.mxu0 0.0
      %1791 = vmatprep.subr.mxu0 0.0
      %1792 = vmatpush1.xpose.msra.mxu0 0.0
      %1793 = vmatprep.subr.mxu0 0.0
      %1794 = vmatpush1.xpose.msra.mxu0 0.0
      %1795 = vmatprep.subr.mxu0 0.0
      %1796 = vmatpush1.xpose.msra.mxu0 0.0
      %1797 = vmatprep.subr.mxu0 0.0
      %1798 = vmatpush1.xpose.msra.mxu0 0.0
      %1799 = vmatprep.subr.mxu0 0.0
      %1800 = vmatpush1.xpose.msra.mxu0 0.0
      %1801 = vmatprep.subr.mxu0 0.0
      %1802 = vmatpush1.xpose.msra.mxu0 0.0
      %1803 = vmatprep.subr.mxu0 0.0
      %1804 = vmatpush1.xpose.msra.mxu0 0.0
      %1805 = vmatprep.subr.mxu0 0.0
      %1806 = vmatpush1.xpose.msra.mxu0 0.0
      %1807 = vmatprep.subr.mxu0 0.0
      %1808 = vmatpush1.xpose.msra.mxu0 0.0
      %1809 = vmatprep.subr.mxu0 0.0
      %1810 = vmatpush1.xpose.msra.mxu0 0.0
      %1811 = vmatprep.subr.mxu0 0.0
      %1812 = vmatpush1.xpose.msra.mxu0 0.0
      %1813 = vmatprep.subr.mxu0 0.0
      %1814 = vmatpush1.xpose.msra.mxu0 0.0
      %1815 = vmatprep.subr.mxu0 0.0
      %1816 = vmatpush1.xpose.msra.mxu0 0.0
      %1817 = vmatprep.subr.mxu0 0.0
      %1818 = vmatpush1.xpose.msra.mxu0 0.0
      %1819 = vmatprep.subr.mxu0 0.0
      %1820 = vmatpush1.xpose.msra.mxu0 0.0
      %1821 = vmatprep.subr.mxu0 0.0
      %1822 = vmatpush1.xpose.msra.mxu0 0.0
      %1823 = vmatprep.subr.mxu0 0.0
      %1824 = vmatpush1.xpose.msra.mxu0 0.0
      %1825 = vmatprep.subr.mxu0 0.0
      %1826 = vmatpush1.xpose.msra.mxu0 0.0
      %1827 = vmatprep.subr.mxu0 0.0
      %1828 = vmatpush1.xpose.msra.mxu0 0.0
      %1829 = vmatprep.subr.mxu0 0.0
      %1830 = vmatpush1.xpose.msra.mxu0 0.0
      %1831 = vmatprep.subr.mxu0 0.0
      %1832 = vmatpush1.xpose.msra.mxu0 0.0
      %1833 = vmatprep.subr.mxu0 0.0
      %1834 = vmatpush1.xpose.msra.mxu0 0.0
      %1835 = vmatprep.subr.mxu0 0.0
      %1836 = vmatpush1.xpose.msra.mxu0 0.0
      %1837 = vmatprep.subr.mxu0 0.0
      %1838 = vmatpush1.xpose.msra.mxu0 0.0
      %1839 = vmatprep.subr.mxu0 0.0
      %1840 = vmatpush1.xpose.msra.mxu0 0.0
      %1841 = vmatprep.subr.mxu0 0.0
      %1842 = vmatpush1.xpose.msra.mxu0 0.0
      %1843 = vmatprep.subr.mxu0 0.0
      %1844 = vmatpush1.xpose.msra.mxu0 0.0
      %1845 = vmatprep.mubr.f32.mxu0 0.0
      %1846 = vmatmul.mubr.f32.gmra.mrb[0].mxu0 %v1600
      %v1847 = vpop.f32.mrb[0].mxu0
      %v1848 = vadd.f32 %v1596, %v1847
      %v1849 = vpop.f32.mrb[0].mxu0
      %1850 = vdwg.mxu0
      %v1851 = vld [vmem:[%s284 + $0x2] sm:$0xff]
      %v1852 = vld [vmem:[%s284 + $0xa] sm:$0xff]
      %v1853 = vld [vmem:[%s284 + $0x12] sm:$0xff]
      %v1854 = vld [vmem:[%s284 + $0x1a] sm:$0xff]
      %v1855 = vld [vmem:[%s284 + $0x22] sm:$0xff]
      %v1856 = vld [vmem:[%s284 + $0x2a] sm:$0xff]
      %v1857 = vld [vmem:[%s284 + $0x32] sm:$0xff]
      %v1858 = vld [vmem:[%s284 + $0x3a] sm:$0xff]
      %v1859 = vld [vmem:[%s284 + $0x42] sm:$0xff]
      %v1860 = vld [vmem:[%s284 + $0x4a] sm:$0xff]
      %v1861 = vld [vmem:[%s284 + $0x52] sm:$0xff]
      %v1862 = vld [vmem:[%s284 + $0x5a] sm:$0xff]
      %v1863 = vld [vmem:[%s284 + $0x62] sm:$0xff]
      %v1864 = vld [vmem:[%s284 + $0x6a] sm:$0xff]
      %v1865 = vld [vmem:[%s284 + $0x72] sm:$0xff]
      %v1866 = vld [vmem:[%s284 + $0x7a] sm:$0xff]
      %v1867 = vld [vmem:[%s284 + $0x82] sm:$0xff]
      %v1868 = vld [vmem:[%s284 + $0x8a] sm:$0xff]
      %v1869 = vld [vmem:[%s284 + $0x92] sm:$0xff]
      %v1870 = vld [vmem:[%s284 + $0x9a] sm:$0xff]
      %v1871 = vld [vmem:[%s284 + $0xa2] sm:$0xff]
      %v1872 = vld [vmem:[%s284 + $0xaa] sm:$0xff]
      %v1873 = vld [vmem:[%s284 + $0xb2] sm:$0xff]
      %v1874 = vld [vmem:[%s284 + $0xba] sm:$0xff]
      %v1875 = vld [vmem:[%s284 + $0xc2] sm:$0xff]
      %v1876 = vld [vmem:[%s284 + $0xca] sm:$0xff]
      %v1877 = vld [vmem:[%s284 + $0xd2] sm:$0xff]
      %v1878 = vld [vmem:[%s284 + $0xda] sm:$0xff]
      %v1879 = vld [vmem:[%s284 + $0xe2] sm:$0xff]
      %v1880 = vld [vmem:[%s284 + $0xea] sm:$0xff]
      %v1881 = vld [vmem:[%s284 + $0xf2] sm:$0xff]
      %v1882 = vld [vmem:[%s284 + $0xfa] sm:$0xff]
      %v1883 = vld [vmem:[%s284 + $0x102] sm:$0xff]
      %v1884 = vld [vmem:[%s284 + $0x10a] sm:$0xff]
      %v1885 = vld [vmem:[%s284 + $0x112] sm:$0xff]
      %v1886 = vld [vmem:[%s284 + $0x11a] sm:$0xff]
      %s1887 = scalar_lea.vmem %s1, 16
      %v1888 = vld [vmem:[%s1887] sm:$0xff]
      %v1890 = vsel %vm1346, %v1888, 0
      %v1893 = vsel %vm1346, %v1851, 0
      %v1896 = vsel %vm1346, %v1852, 0
      %v1899 = vsel %vm1346, %v1853, 0
      %v1902 = vsel %vm1346, %v1854, 0
      %v1905 = vsel %vm1346, %v1855, 0
      %v1908 = vsel %vm1346, %v1856, 0
      %v1911 = vsel %vm1346, %v1857, 0
      %v1914 = vsel %vm1346, %v1858, 0
      %v1917 = vsel %vm1346, %v1859, 0
      %v1920 = vsel %vm1346, %v1860, 0
      %v1923 = vsel %vm1346, %v1861, 0
      %v1926 = vsel %vm1346, %v1862, 0
      %v1929 = vsel %vm1346, %v1863, 0
      %v1932 = vsel %vm1346, %v1864, 0
      %v1935 = vsel %vm1346, %v1865, 0
      %v1938 = vsel %vm1346, %v1866, 0
      %v1941 = vsel %vm1346, %v1867, 0
      %v1944 = vsel %vm1346, %v1868, 0
      %v1947 = vsel %vm1346, %v1869, 0
      %v1950 = vsel %vm1346, %v1870, 0
      %v1953 = vsel %vm1346, %v1871, 0
      %v1956 = vsel %vm1346, %v1872, 0
      %v1959 = vsel %vm1346, %v1873, 0
      %v1962 = vsel %vm1346, %v1874, 0
      %v1965 = vsel %vm1346, %v1875, 0
      %v1968 = vsel %vm1346, %v1876, 0
      %v1971 = vsel %vm1346, %v1877, 0
      %v1974 = vsel %vm1346, %v1878, 0
      %v1977 = vsel %vm1346, %v1879, 0
      %v1980 = vsel %vm1346, %v1880, 0
      %v1983 = vsel %vm1346, %v1881, 0
      %v1986 = vsel %vm1346, %v1882, 0
      %v1989 = vsel %vm1346, %v1883, 0
      %v1992 = vsel %vm1346, %v1884, 0
      %v1995 = vsel %vm1346, %v1885, 0
      %v1998 = vsel %vm1346, %v1886, 0
      %2000 = vmatprep.subr.mxu0 0.0
      %2001 = vmatpush1.xpose.msra.mxu0 %v1893
      %2002 = vmatprep.subr.mxu0 0.0
      %2003 = vmatpush1.xpose.msra.mxu0 %v1896
      %2004 = vmatprep.subr.mxu0 0.0
      %2005 = vmatpush1.xpose.msra.mxu0 %v1899
      %2006 = vmatprep.subr.mxu0 0.0
      %2007 = vmatpush1.xpose.msra.mxu0 %v1902
      %2008 = vmatprep.subr.mxu0 0.0
      %2009 = vmatpush1.xpose.msra.mxu0 %v1905
      %2010 = vmatprep.subr.mxu0 0.0
      %2011 = vmatpush1.xpose.msra.mxu0 %v1908
      %2012 = vmatprep.subr.mxu0 0.0
      %2013 = vmatpush1.xpose.msra.mxu0 %v1911
      %2014 = vmatprep.subr.mxu0 0.0
      %2015 = vmatpush1.xpose.msra.mxu0 %v1914
      %2016 = vmatprep.subr.mxu0 0.0
      %2017 = vmatpush1.xpose.msra.mxu0 %v1917
      %2018 = vmatprep.subr.mxu0 0.0
      %2019 = vmatpush1.xpose.msra.mxu0 %v1920
      %2020 = vmatprep.subr.mxu0 0.0
      %2021 = vmatpush1.xpose.msra.mxu0 %v1923
      %2022 = vmatprep.subr.mxu0 0.0
      %2023 = vmatpush1.xpose.msra.mxu0 %v1926
      %2024 = vmatprep.subr.mxu0 0.0
      %2025 = vmatpush1.xpose.msra.mxu0 %v1929
      %2026 = vmatprep.subr.mxu0 0.0
      %2027 = vmatpush1.xpose.msra.mxu0 %v1932
      %2028 = vmatprep.subr.mxu0 0.0
      %2029 = vmatpush1.xpose.msra.mxu0 %v1935
      %2030 = vmatprep.subr.mxu0 0.0
      %2031 = vmatpush1.xpose.msra.mxu0 %v1938
      %2032 = vmatprep.subr.mxu0 0.0
      %2033 = vmatpush1.xpose.msra.mxu0 %v1941
      %2034 = vmatprep.subr.mxu0 0.0
      %2035 = vmatpush1.xpose.msra.mxu0 %v1944
      %2036 = vmatprep.subr.mxu0 0.0
      %2037 = vmatpush1.xpose.msra.mxu0 %v1947
      %2038 = vmatprep.subr.mxu0 0.0
      %2039 = vmatpush1.xpose.msra.mxu0 %v1950
      %2040 = vmatprep.subr.mxu0 0.0
      %2041 = vmatpush1.xpose.msra.mxu0 %v1953
      %2042 = vmatprep.subr.mxu0 0.0
      %2043 = vmatpush1.xpose.msra.mxu0 %v1956
      %2044 = vmatprep.subr.mxu0 0.0
      %2045 = vmatpush1.xpose.msra.mxu0 %v1959
      %2046 = vmatprep.subr.mxu0 0.0
      %2047 = vmatpush1.xpose.msra.mxu0 %v1962
      %2048 = vmatprep.subr.mxu0 0.0
      %2049 = vmatpush1.xpose.msra.mxu0 %v1965
      %2050 = vmatprep.subr.mxu0 0.0
      %2051 = vmatpush1.xpose.msra.mxu0 %v1968
      %2052 = vmatprep.subr.mxu0 0.0
      %2053 = vmatpush1.xpose.msra.mxu0 %v1971
      %2054 = vmatprep.subr.mxu0 0.0
      %2055 = vmatpush1.xpose.msra.mxu0 %v1974
      %2056 = vmatprep.subr.mxu0 0.0
      %2057 = vmatpush1.xpose.msra.mxu0 %v1977
      %2058 = vmatprep.subr.mxu0 0.0
      %2059 = vmatpush1.xpose.msra.mxu0 %v1980
      %2060 = vmatprep.subr.mxu0 0.0
      %2061 = vmatpush1.xpose.msra.mxu0 %v1983
      %2062 = vmatprep.subr.mxu0 0.0
      %2063 = vmatpush1.xpose.msra.mxu0 %v1986
      %2064 = vmatprep.mubr.f32.mxu0 0.0
      %2065 = vmatmul.mubr.f32.gmra.mrb[0].mxu0 %v1890
      %v2066 = vpop.f32.mrb[0].mxu0
      %v2067 = vadd.f32 0.0, %v2066
      %v2068 = vpop.f32.mrb[0].mxu0
      %v2069 = vadd.f32 0.0, %v2068
      %2070 = vdwg.mxu0
      %2071 = vmatprep.subr.mxu0 0.0
      %2072 = vmatpush1.xpose.msra.mxu0 %v1989
      %2073 = vmatprep.subr.mxu0 0.0
      %2074 = vmatpush1.xpose.msra.mxu0 %v1992
      %2075 = vmatprep.subr.mxu0 0.0
      %2076 = vmatpush1.xpose.msra.mxu0 %v1995
      %2077 = vmatprep.subr.mxu0 0.0
      %2078 = vmatpush1.xpose.msra.mxu0 %v1998
      %2079 = vmatprep.subr.mxu0 0.0
      %2080 = vmatpush1.xpose.msra.mxu0 0.0
      %2081 = vmatprep.subr.mxu0 0.0
      %2082 = vmatpush1.xpose.msra.mxu0 0.0
      %2083 = vmatprep.subr.mxu0 0.0
      %2084 = vmatpush1.xpose.msra.mxu0 0.0
      %2085 = vmatprep.subr.mxu0 0.0
      %2086 = vmatpush1.xpose.msra.mxu0 0.0
      %2087 = vmatprep.subr.mxu0 0.0
      %2088 = vmatpush1.xpose.msra.mxu0 0.0
      %2089 = vmatprep.subr.mxu0 0.0
      %2090 = vmatpush1.xpose.msra.mxu0 0.0
      %2091 = vmatprep.subr.mxu0 0.0
      %2092 = vmatpush1.xpose.msra.mxu0 0.0
      %2093 = vmatprep.subr.mxu0 0.0
      %2094 = vmatpush1.xpose.msra.mxu0 0.0
      %2095 = vmatprep.subr.mxu0 0.0
      %2096 = vmatpush1.xpose.msra.mxu0 0.0
      %2097 = vmatprep.subr.mxu0 0.0
      %2098 = vmatpush1.xpose.msra.mxu0 0.0
      %2099 = vmatprep.subr.mxu0 0.0
      %2100 = vmatpush1.xpose.msra.mxu0 0.0
      %2101 = vmatprep.subr.mxu0 0.0
      %2102 = vmatpush1.xpose.msra.mxu0 0.0
      %2103 = vmatprep.subr.mxu0 0.0
      %2104 = vmatpush1.xpose.msra.mxu0 0.0
      %2105 = vmatprep.subr.mxu0 0.0
      %2106 = vmatpush1.xpose.msra.mxu0 0.0
      %2107 = vmatprep.subr.mxu0 0.0
      %2108 = vmatpush1.xpose.msra.mxu0 0.0
      %2109 = vmatprep.subr.mxu0 0.0
      %2110 = vmatpush1.xpose.msra.mxu0 0.0
      %2111 = vmatprep.subr.mxu0 0.0
      %2112 = vmatpush1.xpose.msra.mxu0 0.0
      %2113 = vmatprep.subr.mxu0 0.0
      %2114 = vmatpush1.xpose.msra.mxu0 0.0
      %2115 = vmatprep.subr.mxu0 0.0
      %2116 = vmatpush1.xpose.msra.mxu0 0.0
      %2117 = vmatprep.subr.mxu0 0.0
      %2118 = vmatpush1.xpose.msra.mxu0 0.0
      %2119 = vmatprep.subr.mxu0 0.0
      %2120 = vmatpush1.xpose.msra.mxu0 0.0
      %2121 = vmatprep.subr.mxu0 0.0
      %2122 = vmatpush1.xpose.msra.mxu0 0.0
      %2123 = vmatprep.subr.mxu0 0.0
      %2124 = vmatpush1.xpose.msra.mxu0 0.0
      %2125 = vmatprep.subr.mxu0 0.0
      %2126 = vmatpush1.xpose.msra.mxu0 0.0
      %2127 = vmatprep.subr.mxu0 0.0
      %2128 = vmatpush1.xpose.msra.mxu0 0.0
      %2129 = vmatprep.subr.mxu0 0.0
      %2130 = vmatpush1.xpose.msra.mxu0 0.0
      %2131 = vmatprep.subr.mxu0 0.0
      %2132 = vmatpush1.xpose.msra.mxu0 0.0
      %2133 = vmatprep.subr.mxu0 0.0
      %2134 = vmatpush1.xpose.msra.mxu0 0.0
      %2135 = vmatprep.mubr.f32.mxu0 0.0
      %2136 = vmatmul.mubr.f32.gmra.mrb[0].mxu0 %v1890
      %v2137 = vpop.f32.mrb[0].mxu0
      %v2138 = vadd.f32 0.0, %v2137
      %v2139 = vpop.f32.mrb[0].mxu0
      %2140 = vdwg.mxu0
      %v2141 = vadd.f32 %v1777, %v2067
      %v2142 = vadd.f32 %v1779, %v2069
      %v2143 = vadd.f32 %v1848, %v2138
      %v2144 = vld [vmem:[%s284 + $0x12] sm:$0xff]
      %v2145 = vld [vmem:[%s284 + $0x1a] sm:$0xff]
      %v2146 = vld [vmem:[%s284 + $0x22] sm:$0xff]
      %v2147 = vld [vmem:[%s284 + $0x2a] sm:$0xff]
      %v2148 = vld [vmem:[%s284 + $0x32] sm:$0xff]
      %v2149 = vld [vmem:[%s284 + $0x3a] sm:$0xff]
      %v2150 = vld [vmem:[%s284 + $0x42] sm:$0xff]
      %v2151 = vld [vmem:[%s284 + $0x4a] sm:$0xff]
      %v2152 = vld [vmem:[%s284 + $0x52] sm:$0xff]
      %v2153 = vld [vmem:[%s284 + $0x5a] sm:$0xff]
      %v2154 = vld [vmem:[%s284 + $0x62] sm:$0xff]
      %v2155 = vld [vmem:[%s284 + $0x6a] sm:$0xff]
      %v2156 = vld [vmem:[%s284 + $0x72] sm:$0xff]
      %v2157 = vld [vmem:[%s284 + $0x7a] sm:$0xff]
      %v2158 = vld [vmem:[%s284 + $0x82] sm:$0xff]
      %v2159 = vld [vmem:[%s284 + $0x8a] sm:$0xff]
      %v2160 = vld [vmem:[%s284 + $0x92] sm:$0xff]
      %v2161 = vld [vmem:[%s284 + $0x9a] sm:$0xff]
      %v2162 = vld [vmem:[%s284 + $0xa2] sm:$0xff]
      %v2163 = vld [vmem:[%s284 + $0xaa] sm:$0xff]
      %v2164 = vld [vmem:[%s284 + $0xb2] sm:$0xff]
      %v2165 = vld [vmem:[%s284 + $0xba] sm:$0xff]
      %v2166 = vld [vmem:[%s284 + $0xc2] sm:$0xff]
      %v2167 = vld [vmem:[%s284 + $0xca] sm:$0xff]
      %v2168 = vld [vmem:[%s284 + $0xd2] sm:$0xff]
      %v2169 = vld [vmem:[%s284 + $0xda] sm:$0xff]
      %v2170 = vld [vmem:[%s284 + $0xe2] sm:$0xff]
      %v2171 = vld [vmem:[%s284 + $0xea] sm:$0xff]
      %v2172 = vld [vmem:[%s284 + $0xf2] sm:$0xff]
      %v2173 = vld [vmem:[%s284 + $0xfa] sm:$0xff]
      %v2174 = vld [vmem:[%s284 + $0x102] sm:$0xff]
      %v2175 = vld [vmem:[%s284 + $0x10a] sm:$0xff]
      %v2176 = vld [vmem:[%s284 + $0x112] sm:$0xff]
      %v2177 = vld [vmem:[%s284 + $0x11a] sm:$0xff]
      %v2178 = vld [vmem:[%s284 + $0x122] sm:$0xff]
      %v2179 = vld [vmem:[%s284 + $0x12a] sm:$0xff]
      %s2180 = scalar_lea.vmem %s1, 24
      %v2181 = vld [vmem:[%s2180] sm:$0xff]
      %v2183 = vsel %vm1346, %v2181, 0
      %v2186 = vsel %vm1346, %v2144, 0
      %v2189 = vsel %vm1346, %v2145, 0
      %v2192 = vsel %vm1346, %v2146, 0
      %v2195 = vsel %vm1346, %v2147, 0
      %v2198 = vsel %vm1346, %v2148, 0
      %v2201 = vsel %vm1346, %v2149, 0
      %v2204 = vsel %vm1346, %v2150, 0
      %v2207 = vsel %vm1346, %v2151, 0
      %v2210 = vsel %vm1346, %v2152, 0
      %v2213 = vsel %vm1346, %v2153, 0
      %v2216 = vsel %vm1346, %v2154, 0
      %v2219 = vsel %vm1346, %v2155, 0
      %v2222 = vsel %vm1346, %v2156, 0
      %v2225 = vsel %vm1346, %v2157, 0
      %v2228 = vsel %vm1346, %v2158, 0
      %v2231 = vsel %vm1346, %v2159, 0
      %v2234 = vsel %vm1346, %v2160, 0
      %v2237 = vsel %vm1346, %v2161, 0
      %v2240 = vsel %vm1346, %v2162, 0
      %v2243 = vsel %vm1346, %v2163, 0
      %v2246 = vsel %vm1346, %v2164, 0
      %v2249 = vsel %vm1346, %v2165, 0
      %v2252 = vsel %vm1346, %v2166, 0
      %v2255 = vsel %vm1346, %v2167, 0
      %v2258 = vsel %vm1346, %v2168, 0
      %v2261 = vsel %vm1346, %v2169, 0
      %v2264 = vsel %vm1346, %v2170, 0
      %v2267 = vsel %vm1346, %v2171, 0
      %v2270 = vsel %vm1346, %v2172, 0
      %v2273 = vsel %vm1346, %v2173, 0
      %v2276 = vsel %vm1346, %v2174, 0
      %v2279 = vsel %vm1346, %v2175, 0
      %v2282 = vsel %vm1346, %v2176, 0
      %v2285 = vsel %vm1346, %v2177, 0
      %v2288 = vsel %vm1346, %v2178, 0
      %v2291 = vsel %vm1346, %v2179, 0
      %2293 = vmatprep.subr.mxu0 0.0
      %2294 = vmatpush1.xpose.msra.mxu0 %v2186
      %2295 = vmatprep.subr.mxu0 0.0
      %2296 = vmatpush1.xpose.msra.mxu0 %v2189
      %2297 = vmatprep.subr.mxu0 0.0
      %2298 = vmatpush1.xpose.msra.mxu0 %v2192
      %2299 = vmatprep.subr.mxu0 0.0
      %2300 = vmatpush1.xpose.msra.mxu0 %v2195
      %2301 = vmatprep.subr.mxu0 0.0
      %2302 = vmatpush1.xpose.msra.mxu0 %v2198
      %2303 = vmatprep.subr.mxu0 0.0
      %2304 = vmatpush1.xpose.msra.mxu0 %v2201
      %2305 = vmatprep.subr.mxu0 0.0
      %2306 = vmatpush1.xpose.msra.mxu0 %v2204
      %2307 = vmatprep.subr.mxu0 0.0
      %2308 = vmatpush1.xpose.msra.mxu0 %v2207
      %2309 = vmatprep.subr.mxu0 0.0
      %2310 = vmatpush1.xpose.msra.mxu0 %v2210
      %2311 = vmatprep.subr.mxu0 0.0
      %2312 = vmatpush1.xpose.msra.mxu0 %v2213
      %2313 = vmatprep.subr.mxu0 0.0
      %2314 = vmatpush1.xpose.msra.mxu0 %v2216
      %2315 = vmatprep.subr.mxu0 0.0
      %2316 = vmatpush1.xpose.msra.mxu0 %v2219
      %2317 = vmatprep.subr.mxu0 0.0
      %2318 = vmatpush1.xpose.msra.mxu0 %v2222
      %2319 = vmatprep.subr.mxu0 0.0
      %2320 = vmatpush1.xpose.msra.mxu0 %v2225
      %2321 = vmatprep.subr.mxu0 0.0
      %2322 = vmatpush1.xpose.msra.mxu0 %v2228
      %2323 = vmatprep.subr.mxu0 0.0
      %2324 = vmatpush1.xpose.msra.mxu0 %v2231
      %2325 = vmatprep.subr.mxu0 0.0
      %2326 = vmatpush1.xpose.msra.mxu0 %v2234
      %2327 = vmatprep.subr.mxu0 0.0
      %2328 = vmatpush1.xpose.msra.mxu0 %v2237
      %2329 = vmatprep.subr.mxu0 0.0
      %2330 = vmatpush1.xpose.msra.mxu0 %v2240
      %2331 = vmatprep.subr.mxu0 0.0
      %2332 = vmatpush1.xpose.msra.mxu0 %v2243
      %2333 = vmatprep.subr.mxu0 0.0
      %2334 = vmatpush1.xpose.msra.mxu0 %v2246
      %2335 = vmatprep.subr.mxu0 0.0
      %2336 = vmatpush1.xpose.msra.mxu0 %v2249
      %2337 = vmatprep.subr.mxu0 0.0
      %2338 = vmatpush1.xpose.msra.mxu0 %v2252
      %2339 = vmatprep.subr.mxu0 0.0
      %2340 = vmatpush1.xpose.msra.mxu0 %v2255
      %2341 = vmatprep.subr.mxu0 0.0
      %2342 = vmatpush1.xpose.msra.mxu0 %v2258
      %2343 = vmatprep.subr.mxu0 0.0
      %2344 = vmatpush1.xpose.msra.mxu0 %v2261
      %2345 = vmatprep.subr.mxu0 0.0
      %2346 = vmatpush1.xpose.msra.mxu0 %v2264
      %2347 = vmatprep.subr.mxu0 0.0
      %2348 = vmatpush1.xpose.msra.mxu0 %v2267
      %2349 = vmatprep.subr.mxu0 0.0
      %2350 = vmatpush1.xpose.msra.mxu0 %v2270
      %2351 = vmatprep.subr.mxu0 0.0
      %2352 = vmatpush1.xpose.msra.mxu0 %v2273
      %2353 = vmatprep.subr.mxu0 0.0
      %2354 = vmatpush1.xpose.msra.mxu0 %v2276
      %2355 = vmatprep.subr.mxu0 0.0
      %2356 = vmatpush1.xpose.msra.mxu0 %v2279
      %2357 = vmatprep.mubr.f32.mxu0 0.0
      %2358 = vmatmul.mubr.f32.gmra.mrb[0].mxu0 %v2183
      %v2359 = vpop.f32.mrb[0].mxu0
      %v2360 = vadd.f32 0.0, %v2359
      %v2361 = vpop.f32.mrb[0].mxu0
      %v2362 = vadd.f32 0.0, %v2361
      %2363 = vdwg.mxu0
      %2364 = vmatprep.subr.mxu0 0.0
      %2365 = vmatpush1.xpose.msra.mxu0 %v2282
      %2366 = vmatprep.subr.mxu0 0.0
      %2367 = vmatpush1.xpose.msra.mxu0 %v2285
      %2368 = vmatprep.subr.mxu0 0.0
      %2369 = vmatpush1.xpose.msra.mxu0 %v2288
      %2370 = vmatprep.subr.mxu0 0.0
      %2371 = vmatpush1.xpose.msra.mxu0 %v2291
      %2372 = vmatprep.subr.mxu0 0.0
      %2373 = vmatpush1.xpose.msra.mxu0 0.0
      %2374 = vmatprep.subr.mxu0 0.0
      %2375 = vmatpush1.xpose.msra.mxu0 0.0
      %2376 = vmatprep.subr.mxu0 0.0
      %2377 = vmatpush1.xpose.msra.mxu0 0.0
      %2378 = vmatprep.subr.mxu0 0.0
      %2379 = vmatpush1.xpose.msra.mxu0 0.0
      %2380 = vmatprep.subr.mxu0 0.0
      %2381 = vmatpush1.xpose.msra.mxu0 0.0
      %2382 = vmatprep.subr.mxu0 0.0
      %2383 = vmatpush1.xpose.msra.mxu0 0.0
      %2384 = vmatprep.subr.mxu0 0.0
      %2385 = vmatpush1.xpose.msra.mxu0 0.0
      %2386 = vmatprep.subr.mxu0 0.0
      %2387 = vmatpush1.xpose.msra.mxu0 0.0
      %2388 = vmatprep.subr.mxu0 0.0
      %2389 = vmatpush1.xpose.msra.mxu0 0.0
      %2390 = vmatprep.subr.mxu0 0.0
      %2391 = vmatpush1.xpose.msra.mxu0 0.0
      %2392 = vmatprep.subr.mxu0 0.0
      %2393 = vmatpush1.xpose.msra.mxu0 0.0
      %2394 = vmatprep.subr.mxu0 0.0
      %2395 = vmatpush1.xpose.msra.mxu0 0.0
      %2396 = vmatprep.subr.mxu0 0.0
      %2397 = vmatpush1.xpose.msra.mxu0 0.0
      %2398 = vmatprep.subr.mxu0 0.0
      %2399 = vmatpush1.xpose.msra.mxu0 0.0
      %2400 = vmatprep.subr.mxu0 0.0
      %2401 = vmatpush1.xpose.msra.mxu0 0.0
      %2402 = vmatprep.subr.mxu0 0.0
      %2403 = vmatpush1.xpose.msra.mxu0 0.0
      %2404 = vmatprep.subr.mxu0 0.0
      %2405 = vmatpush1.xpose.msra.mxu0 0.0
      %2406 = vmatprep.subr.mxu0 0.0
      %2407 = vmatpush1.xpose.msra.mxu0 0.0
      %2408 = vmatprep.subr.mxu0 0.0
      %2409 = vmatpush1.xpose.msra.mxu0 0.0
      %2410 = vmatprep.subr.mxu0 0.0
      %2411 = vmatpush1.xpose.msra.mxu0 0.0
      %2412 = vmatprep.subr.mxu0 0.0
      %2413 = vmatpush1.xpose.msra.mxu0 0.0
      %2414 = vmatprep.subr.mxu0 0.0
      %2415 = vmatpush1.xpose.msra.mxu0 0.0
      %2416 = vmatprep.subr.mxu0 0.0
      %2417 = vmatpush1.xpose.msra.mxu0 0.0
      %2418 = vmatprep.subr.mxu0 0.0
      %2419 = vmatpush1.xpose.msra.mxu0 0.0
      %2420 = vmatprep.subr.mxu0 0.0
      %2421 = vmatpush1.xpose.msra.mxu0 0.0
      %2422 = vmatprep.subr.mxu0 0.0
      %2423 = vmatpush1.xpose.msra.mxu0 0.0
      %2424 = vmatprep.subr.mxu0 0.0
      %2425 = vmatpush1.xpose.msra.mxu0 0.0
      %2426 = vmatprep.subr.mxu0 0.0
      %2427 = vmatpush1.xpose.msra.mxu0 0.0
      %2428 = vmatprep.mubr.f32.mxu0 0.0
      %2429 = vmatmul.mubr.f32.gmra.mrb[0].mxu0 %v2183
      %v2430 = vpop.f32.mrb[0].mxu0
      %v2431 = vadd.f32 0.0, %v2430
      %v2432 = vpop.f32.mrb[0].mxu0
      %2433 = vdwg.mxu0
      %v2434 = vadd.f32 %v2141, %v2360
      %v2435 = vadd.f32 %v2142, %v2362
      %v2436 = vadd.f32 %v2143, %v2431
      %v2437 = vld [vmem:[%s284 + $0x13] sm:$0xff]
      %v2438 = vld [vmem:[%s284 + $0x1b] sm:$0xff]
      %v2439 = vld [vmem:[%s284 + $0x23] sm:$0xff]
      %v2440 = vld [vmem:[%s284 + $0x2b] sm:$0xff]
      %v2441 = vld [vmem:[%s284 + $0x33] sm:$0xff]
      %v2442 = vld [vmem:[%s284 + $0x3b] sm:$0xff]
      %v2443 = vld [vmem:[%s284 + $0x43] sm:$0xff]
      %v2444 = vld [vmem:[%s284 + $0x4b] sm:$0xff]
      %v2445 = vld [vmem:[%s284 + $0x53] sm:$0xff]
      %v2446 = vld [vmem:[%s284 + $0x5b] sm:$0xff]
      %v2447 = vld [vmem:[%s284 + $0x63] sm:$0xff]
      %v2448 = vld [vmem:[%s284 + $0x6b] sm:$0xff]
      %v2449 = vld [vmem:[%s284 + $0x73] sm:$0xff]
      %v2450 = vld [vmem:[%s284 + $0x7b] sm:$0xff]
      %v2451 = vld [vmem:[%s284 + $0x83] sm:$0xff]
      %v2452 = vld [vmem:[%s284 + $0x8b] sm:$0xff]
      %v2453 = vld [vmem:[%s284 + $0x93] sm:$0xff]
      %v2454 = vld [vmem:[%s284 + $0x9b] sm:$0xff]
      %v2455 = vld [vmem:[%s284 + $0xa3] sm:$0xff]
      %v2456 = vld [vmem:[%s284 + $0xab] sm:$0xff]
      %v2457 = vld [vmem:[%s284 + $0xb3] sm:$0xff]
      %v2458 = vld [vmem:[%s284 + $0xbb] sm:$0xff]
      %v2459 = vld [vmem:[%s284 + $0xc3] sm:$0xff]
      %v2460 = vld [vmem:[%s284 + $0xcb] sm:$0xff]
      %v2461 = vld [vmem:[%s284 + $0xd3] sm:$0xff]
      %v2462 = vld [vmem:[%s284 + $0xdb] sm:$0xff]
      %v2463 = vld [vmem:[%s284 + $0xe3] sm:$0xff]
      %v2464 = vld [vmem:[%s284 + $0xeb] sm:$0xff]
      %v2465 = vld [vmem:[%s284 + $0xf3] sm:$0xff]
      %v2466 = vld [vmem:[%s284 + $0xfb] sm:$0xff]
      %v2467 = vld [vmem:[%s284 + $0x103] sm:$0xff]
      %v2468 = vld [vmem:[%s284 + $0x10b] sm:$0xff]
      %v2469 = vld [vmem:[%s284 + $0x113] sm:$0xff]
      %v2470 = vld [vmem:[%s284 + $0x11b] sm:$0xff]
      %v2471 = vld [vmem:[%s284 + $0x123] sm:$0xff]
      %v2472 = vld [vmem:[%s284 + $0x12b] sm:$0xff]
      %s2473 = scalar_lea.vmem %s1, 32
      %v2474 = vld [vmem:[%s2473] sm:$0xff]
      %v2476 = vsel %vm1346, %v2474, 0
      %v2479 = vsel %vm1346, %v2437, 0
      %v2482 = vsel %vm1346, %v2438, 0
      %v2485 = vsel %vm1346, %v2439, 0
      %v2488 = vsel %vm1346, %v2440, 0
      %v2491 = vsel %vm1346, %v2441, 0
      %v2494 = vsel %vm1346, %v2442, 0
      %v2497 = vsel %vm1346, %v2443, 0
      %v2500 = vsel %vm1346, %v2444, 0
      %v2503 = vsel %vm1346, %v2445, 0
      %v2506 = vsel %vm1346, %v2446, 0
      %v2509 = vsel %vm1346, %v2447, 0
      %v2512 = vsel %vm1346, %v2448, 0
      %v2515 = vsel %vm1346, %v2449, 0
      %v2518 = vsel %vm1346, %v2450, 0
      %v2521 = vsel %vm1346, %v2451, 0
      %v2524 = vsel %vm1346, %v2452, 0
      %v2527 = vsel %vm1346, %v2453, 0
      %v2530 = vsel %vm1346, %v2454, 0
      %v2533 = vsel %vm1346, %v2455, 0
      %v2536 = vsel %vm1346, %v2456, 0
      %v2539 = vsel %vm1346, %v2457, 0
      %v2542 = vsel %vm1346, %v2458, 0
      %v2545 = vsel %vm1346, %v2459, 0
      %v2548 = vsel %vm1346, %v2460, 0
      %v2551 = vsel %vm1346, %v2461, 0
      %v2554 = vsel %vm1346, %v2462, 0
      %v2557 = vsel %vm1346, %v2463, 0
      %v2560 = vsel %vm1346, %v2464, 0
      %v2563 = vsel %vm1346, %v2465, 0
      %v2566 = vsel %vm1346, %v2466, 0
      %v2569 = vsel %vm1346, %v2467, 0
      %v2572 = vsel %vm1346, %v2468, 0
      %v2575 = vsel %vm1346, %v2469, 0
      %v2578 = vsel %vm1346, %v2470, 0
      %v2581 = vsel %vm1346, %v2471, 0
      %v2584 = vsel %vm1346, %v2472, 0
      %2586 = vmatprep.subr.mxu0 0.0
      %2587 = vmatpush1.xpose.msra.mxu0 %v2479
      %2588 = vmatprep.subr.mxu0 0.0
      %2589 = vmatpush1.xpose.msra.mxu0 %v2482
      %2590 = vmatprep.subr.mxu0 0.0
      %2591 = vmatpush1.xpose.msra.mxu0 %v2485
      %2592 = vmatprep.subr.mxu0 0.0
      %2593 = vmatpush1.xpose.msra.mxu0 %v2488
      %2594 = vmatprep.subr.mxu0 0.0
      %2595 = vmatpush1.xpose.msra.mxu0 %v2491
      %2596 = vmatprep.subr.mxu0 0.0
      %2597 = vmatpush1.xpose.msra.mxu0 %v2494
      %2598 = vmatprep.subr.mxu0 0.0
      %2599 = vmatpush1.xpose.msra.mxu0 %v2497
      %2600 = vmatprep.subr.mxu0 0.0
      %2601 = vmatpush1.xpose.msra.mxu0 %v2500
      %2602 = vmatprep.subr.mxu0 0.0
      %2603 = vmatpush1.xpose.msra.mxu0 %v2503
      %2604 = vmatprep.subr.mxu0 0.0
      %2605 = vmatpush1.xpose.msra.mxu0 %v2506
      %2606 = vmatprep.subr.mxu0 0.0
      %2607 = vmatpush1.xpose.msra.mxu0 %v2509
      %2608 = vmatprep.subr.mxu0 0.0
      %2609 = vmatpush1.xpose.msra.mxu0 %v2512
      %2610 = vmatprep.subr.mxu0 0.0
      %2611 = vmatpush1.xpose.msra.mxu0 %v2515
      %2612 = vmatprep.subr.mxu0 0.0
      %2613 = vmatpush1.xpose.msra.mxu0 %v2518
      %2614 = vmatprep.subr.mxu0 0.0
      %2615 = vmatpush1.xpose.msra.mxu0 %v2521
      %2616 = vmatprep.subr.mxu0 0.0
      %2617 = vmatpush1.xpose.msra.mxu0 %v2524
      %2618 = vmatprep.subr.mxu0 0.0
      %2619 = vmatpush1.xpose.msra.mxu0 %v2527
      %2620 = vmatprep.subr.mxu0 0.0
      %2621 = vmatpush1.xpose.msra.mxu0 %v2530
      %2622 = vmatprep.subr.mxu0 0.0
      %2623 = vmatpush1.xpose.msra.mxu0 %v2533
      %2624 = vmatprep.subr.mxu0 0.0
      %2625 = vmatpush1.xpose.msra.mxu0 %v2536
      %2626 = vmatprep.subr.mxu0 0.0
      %2627 = vmatpush1.xpose.msra.mxu0 %v2539
      %2628 = vmatprep.subr.mxu0 0.0
      %2629 = vmatpush1.xpose.msra.mxu0 %v2542
      %2630 = vmatprep.subr.mxu0 0.0
      %2631 = vmatpush1.xpose.msra.mxu0 %v2545
      %2632 = vmatprep.subr.mxu0 0.0
      %2633 = vmatpush1.xpose.msra.mxu0 %v2548
      %2634 = vmatprep.subr.mxu0 0.0
      %2635 = vmatpush1.xpose.msra.mxu0 %v2551
      %2636 = vmatprep.subr.mxu0 0.0
      %2637 = vmatpush1.xpose.msra.mxu0 %v2554
      %2638 = vmatprep.subr.mxu0 0.0
      %2639 = vmatpush1.xpose.msra.mxu0 %v2557
      %2640 = vmatprep.subr.mxu0 0.0
      %2641 = vmatpush1.xpose.msra.mxu0 %v2560
      %2642 = vmatprep.subr.mxu0 0.0
      %2643 = vmatpush1.xpose.msra.mxu0 %v2563
      %2644 = vmatprep.subr.mxu0 0.0
      %2645 = vmatpush1.xpose.msra.mxu0 %v2566
      %2646 = vmatprep.subr.mxu0 0.0
      %2647 = vmatpush1.xpose.msra.mxu0 %v2569
      %2648 = vmatprep.subr.mxu0 0.0
      %2649 = vmatpush1.xpose.msra.mxu0 %v2572
      %2650 = vmatprep.mubr.f32.mxu0 0.0
      %2651 = vmatmul.mubr.f32.gmra.mrb[0].mxu0 %v2476
      %v2652 = vpop.f32.mrb[0].mxu0
      %v2653 = vadd.f32 0.0, %v2652
      %v2654 = vpop.f32.mrb[0].mxu0
      %v2655 = vadd.f32 0.0, %v2654
      %2656 = vdwg.mxu0
      %2657 = vmatprep.subr.mxu0 0.0
      %2658 = vmatpush1.xpose.msra.mxu0 %v2575
      %2659 = vmatprep.subr.mxu0 0.0
      %2660 = vmatpush1.xpose.msra.mxu0 %v2578
      %2661 = vmatprep.subr.mxu0 0.0
      %2662 = vmatpush1.xpose.msra.mxu0 %v2581
      %2663 = vmatprep.subr.mxu0 0.0
      %2664 = vmatpush1.xpose.msra.mxu0 %v2584
      %2665 = vmatprep.subr.mxu0 0.0
      %2666 = vmatpush1.xpose.msra.mxu0 0.0
      %2667 = vmatprep.subr.mxu0 0.0
      %2668 = vmatpush1.xpose.msra.mxu0 0.0
      %2669 = vmatprep.subr.mxu0 0.0
      %2670 = vmatpush1.xpose.msra.mxu0 0.0
      %2671 = vmatprep.subr.mxu0 0.0
      %2672 = vmatpush1.xpose.msra.mxu0 0.0
      %2673 = vmatprep.subr.mxu0 0.0
      %2674 = vmatpush1.xpose.msra.mxu0 0.0
      %2675 = vmatprep.subr.mxu0 0.0
      %2676 = vmatpush1.xpose.msra.mxu0 0.0
      %2677 = vmatprep.subr.mxu0 0.0
      %2678 = vmatpush1.xpose.msra.mxu0 0.0
      %2679 = vmatprep.subr.mxu0 0.0
      %2680 = vmatpush1.xpose.msra.mxu0 0.0
      %2681 = vmatprep.subr.mxu0 0.0
      %2682 = vmatpush1.xpose.msra.mxu0 0.0
      %2683 = vmatprep.subr.mxu0 0.0
      %2684 = vmatpush1.xpose.msra.mxu0 0.0
      %2685 = vmatprep.subr.mxu0 0.0
      %2686 = vmatpush1.xpose.msra.mxu0 0.0
      %2687 = vmatprep.subr.mxu0 0.0
      %2688 = vmatpush1.xpose.msra.mxu0 0.0
      %2689 = vmatprep.subr.mxu0 0.0
      %2690 = vmatpush1.xpose.msra.mxu0 0.0
      %2691 = vmatprep.subr.mxu0 0.0
      %2692 = vmatpush1.xpose.msra.mxu0 0.0
      %2693 = vmatprep.subr.mxu0 0.0
      %2694 = vmatpush1.xpose.msra.mxu0 0.0
      %2695 = vmatprep.subr.mxu0 0.0
      %2696 = vmatpush1.xpose.msra.mxu0 0.0
      %2697 = vmatprep.subr.mxu0 0.0
      %2698 = vmatpush1.xpose.msra.mxu0 0.0
      %2699 = vmatprep.subr.mxu0 0.0
      %2700 = vmatpush1.xpose.msra.mxu0 0.0
      %2701 = vmatprep.subr.mxu0 0.0
      %2702 = vmatpush1.xpose.msra.mxu0 0.0
      %2703 = vmatprep.subr.mxu0 0.0
      %2704 = vmatpush1.xpose.msra.mxu0 0.0
      %2705 = vmatprep.subr.mxu0 0.0
      %2706 = vmatpush1.xpose.msra.mxu0 0.0
      %2707 = vmatprep.subr.mxu0 0.0
      %2708 = vmatpush1.xpose.msra.mxu0 0.0
      %2709 = vmatprep.subr.mxu0 0.0
      %2710 = vmatpush1.xpose.msra.mxu0 0.0
      %2711 = vmatprep.subr.mxu0 0.0
      %2712 = vmatpush1.xpose.msra.mxu0 0.0
      %2713 = vmatprep.subr.mxu0 0.0
      %2714 = vmatpush1.xpose.msra.mxu0 0.0
      %2715 = vmatprep.subr.mxu0 0.0
      %2716 = vmatpush1.xpose.msra.mxu0 0.0
      %2717 = vmatprep.subr.mxu0 0.0
      %2718 = vmatpush1.xpose.msra.mxu0 0.0
      %2719 = vmatprep.subr.mxu0 0.0
      %2720 = vmatpush1.xpose.msra.mxu0 0.0
      %2721 = vmatprep.mubr.f32.mxu0 0.0
      %2722 = vmatmul.mubr.f32.gmra.mrb[0].mxu0 %v2476
      %v2723 = vpop.f32.mrb[0].mxu0
      %v2724 = vadd.f32 0.0, %v2723
      %v2725 = vpop.f32.mrb[0].mxu0
      %2726 = vdwg.mxu0
      %v2727 = vadd.f32 %v2434, %v2653
      %v2728 = vadd.f32 %v2435, %v2655
      %v2729 = vadd.f32 %v2436, %v2724
      %v2730 = vld [vmem:[%s284 + $0x14] sm:$0xff]
      %v2731 = vld [vmem:[%s284 + $0x1c] sm:$0xff]
      %v2732 = vld [vmem:[%s284 + $0x24] sm:$0xff]
      %v2733 = vld [vmem:[%s284 + $0x2c] sm:$0xff]
      %v2734 = vld [vmem:[%s284 + $0x34] sm:$0xff]
      %v2735 = vld [vmem:[%s284 + $0x3c] sm:$0xff]
      %v2736 = vld [vmem:[%s284 + $0x44] sm:$0xff]
      %v2737 = vld [vmem:[%s284 + $0x4c] sm:$0xff]
      %v2738 = vld [vmem:[%s284 + $0x54] sm:$0xff]
      %v2739 = vld [vmem:[%s284 + $0x5c] sm:$0xff]
      %v2740 = vld [vmem:[%s284 + $0x64] sm:$0xff]
      %v2741 = vld [vmem:[%s284 + $0x6c] sm:$0xff]
      %v2742 = vld [vmem:[%s284 + $0x74] sm:$0xff]
      %v2743 = vld [vmem:[%s284 + $0x7c] sm:$0xff]
      %v2744 = vld [vmem:[%s284 + $0x84] sm:$0xff]
      %v2745 = vld [vmem:[%s284 + $0x8c] sm:$0xff]
      %v2746 = vld [vmem:[%s284 + $0x94] sm:$0xff]
      %v2747 = vld [vmem:[%s284 + $0x9c] sm:$0xff]
      %v2748 = vld [vmem:[%s284 + $0xa4] sm:$0xff]
      %v2749 = vld [vmem:[%s284 + $0xac] sm:$0xff]
      %v2750 = vld [vmem:[%s284 + $0xb4] sm:$0xff]
      %v2751 = vld [vmem:[%s284 + $0xbc] sm:$0xff]
      %v2752 = vld [vmem:[%s284 + $0xc4] sm:$0xff]
      %v2753 = vld [vmem:[%s284 + $0xcc] sm:$0xff]
      %v2754 = vld [vmem:[%s284 + $0xd4] sm:$0xff]
      %v2755 = vld [vmem:[%s284 + $0xdc] sm:$0xff]
      %v2756 = vld [vmem:[%s284 + $0xe4] sm:$0xff]
      %v2757 = vld [vmem:[%s284 + $0xec] sm:$0xff]
      %v2758 = vld [vmem:[%s284 + $0xf4] sm:$0xff]
      %v2759 = vld [vmem:[%s284 + $0xfc] sm:$0xff]
      %v2760 = vld [vmem:[%s284 + $0x104] sm:$0xff]
      %v2761 = vld [vmem:[%s284 + $0x10c] sm:$0xff]
      %v2762 = vld [vmem:[%s284 + $0x114] sm:$0xff]
      %v2763 = vld [vmem:[%s284 + $0x11c] sm:$0xff]
      %v2764 = vld [vmem:[%s284 + $0x124] sm:$0xff]
      %v2765 = vld [vmem:[%s284 + $0x12c] sm:$0xff]
      %s2766 = scalar_lea.vmem %s1, 40
      %v2767 = vld [vmem:[%s2766] sm:$0xff]
      %v2769 = vsel %vm1346, %v2767, 0
      %v2772 = vsel %vm1346, %v2730, 0
      %v2775 = vsel %vm1346, %v2731, 0
      %v2778 = vsel %vm1346, %v2732, 0
      %v2781 = vsel %vm1346, %v2733, 0
      %v2784 = vsel %vm1346, %v2734, 0
      %v2787 = vsel %vm1346, %v2735, 0
      %v2790 = vsel %vm1346, %v2736, 0
      %v2793 = vsel %vm1346, %v2737, 0
      %v2796 = vsel %vm1346, %v2738, 0
      %v2799 = vsel %vm1346, %v2739, 0
      %v2802 = vsel %vm1346, %v2740, 0
      %v2805 = vsel %vm1346, %v2741, 0
      %v2808 = vsel %vm1346, %v2742, 0
      %v2811 = vsel %vm1346, %v2743, 0
      %v2814 = vsel %vm1346, %v2744, 0
      %v2817 = vsel %vm1346, %v2745, 0
      %v2820 = vsel %vm1346, %v2746, 0
      %v2823 = vsel %vm1346, %v2747, 0
      %v2826 = vsel %vm1346, %v2748, 0
      %v2829 = vsel %vm1346, %v2749, 0
      %v2832 = vsel %vm1346, %v2750, 0
      %v2835 = vsel %vm1346, %v2751, 0
      %v2838 = vsel %vm1346, %v2752, 0
      %v2841 = vsel %vm1346, %v2753, 0
      %v2844 = vsel %vm1346, %v2754, 0
      %v2847 = vsel %vm1346, %v2755, 0
      %v2850 = vsel %vm1346, %v2756, 0
      %v2853 = vsel %vm1346, %v2757, 0
      %v2856 = vsel %vm1346, %v2758, 0
      %v2859 = vsel %vm1346, %v2759, 0
      %v2862 = vsel %vm1346, %v2760, 0
      %v2865 = vsel %vm1346, %v2761, 0
      %v2868 = vsel %vm1346, %v2762, 0
      %v2871 = vsel %vm1346, %v2763, 0
      %v2874 = vsel %vm1346, %v2764, 0
      %v2877 = vsel %vm1346, %v2765, 0
      %2879 = vmatprep.subr.mxu0 0.0
      %2880 = vmatpush1.xpose.msra.mxu0 %v2772
      %2881 = vmatprep.subr.mxu0 0.0
      %2882 = vmatpush1.xpose.msra.mxu0 %v2775
      %2883 = vmatprep.subr.mxu0 0.0
      %2884 = vmatpush1.xpose.msra.mxu0 %v2778
      %2885 = vmatprep.subr.mxu0 0.0
      %2886 = vmatpush1.xpose.msra.mxu0 %v2781
      %2887 = vmatprep.subr.mxu0 0.0
      %2888 = vmatpush1.xpose.msra.mxu0 %v2784
      %2889 = vmatprep.subr.mxu0 0.0
      %2890 = vmatpush1.xpose.msra.mxu0 %v2787
      %2891 = vmatprep.subr.mxu0 0.0
      %2892 = vmatpush1.xpose.msra.mxu0 %v2790
      %2893 = vmatprep.subr.mxu0 0.0
      %2894 = vmatpush1.xpose.msra.mxu0 %v2793
      %2895 = vmatprep.subr.mxu0 0.0
      %2896 = vmatpush1.xpose.msra.mxu0 %v2796
      %2897 = vmatprep.subr.mxu0 0.0
      %2898 = vmatpush1.xpose.msra.mxu0 %v2799
      %2899 = vmatprep.subr.mxu0 0.0
      %2900 = vmatpush1.xpose.msra.mxu0 %v2802
      %2901 = vmatprep.subr.mxu0 0.0
      %2902 = vmatpush1.xpose.msra.mxu0 %v2805
      %2903 = vmatprep.subr.mxu0 0.0
      %2904 = vmatpush1.xpose.msra.mxu0 %v2808
      %2905 = vmatprep.subr.mxu0 0.0
      %2906 = vmatpush1.xpose.msra.mxu0 %v2811
      %2907 = vmatprep.subr.mxu0 0.0
      %2908 = vmatpush1.xpose.msra.mxu0 %v2814
      %2909 = vmatprep.subr.mxu0 0.0
      %2910 = vmatpush1.xpose.msra.mxu0 %v2817
      %2911 = vmatprep.subr.mxu0 0.0
      %2912 = vmatpush1.xpose.msra.mxu0 %v2820
      %2913 = vmatprep.subr.mxu0 0.0
      %2914 = vmatpush1.xpose.msra.mxu0 %v2823
      %2915 = vmatprep.subr.mxu0 0.0
      %2916 = vmatpush1.xpose.msra.mxu0 %v2826
      %2917 = vmatprep.subr.mxu0 0.0
      %2918 = vmatpush1.xpose.msra.mxu0 %v2829
      %2919 = vmatprep.subr.mxu0 0.0
      %2920 = vmatpush1.xpose.msra.mxu0 %v2832
      %2921 = vmatprep.subr.mxu0 0.0
      %2922 = vmatpush1.xpose.msra.mxu0 %v2835
      %2923 = vmatprep.subr.mxu0 0.0
      %2924 = vmatpush1.xpose.msra.mxu0 %v2838
      %2925 = vmatprep.subr.mxu0 0.0
      %2926 = vmatpush1.xpose.msra.mxu0 %v2841
      %2927 = vmatprep.subr.mxu0 0.0
      %2928 = vmatpush1.xpose.msra.mxu0 %v2844
      %2929 = vmatprep.subr.mxu0 0.0
      %2930 = vmatpush1.xpose.msra.mxu0 %v2847
      %2931 = vmatprep.subr.mxu0 0.0
      %2932 = vmatpush1.xpose.msra.mxu0 %v2850
      %2933 = vmatprep.subr.mxu0 0.0
      %2934 = vmatpush1.xpose.msra.mxu0 %v2853
      %2935 = vmatprep.subr.mxu0 0.0
      %2936 = vmatpush1.xpose.msra.mxu0 %v2856
      %2937 = vmatprep.subr.mxu0 0.0
      %2938 = vmatpush1.xpose.msra.mxu0 %v2859
      %2939 = vmatprep.subr.mxu0 0.0
      %2940 = vmatpush1.xpose.msra.mxu0 %v2862
      %2941 = vmatprep.subr.mxu0 0.0
      %2942 = vmatpush1.xpose.msra.mxu0 %v2865
      %2943 = vmatprep.mubr.f32.mxu0 0.0
      %2944 = vmatmul.mubr.f32.gmra.mrb[0].mxu0 %v2769
      %v2945 = vpop.f32.mrb[0].mxu0
      %v2946 = vadd.f32 0.0, %v2945
      %v2947 = vpop.f32.mrb[0].mxu0
      %v2948 = vadd.f32 0.0, %v2947
      %2949 = vdwg.mxu0
      %2950 = vmatprep.subr.mxu0 0.0
      %2951 = vmatpush1.xpose.msra.mxu0 %v2868
      %2952 = vmatprep.subr.mxu0 0.0
      %2953 = vmatpush1.xpose.msra.mxu0 %v2871
      %2954 = vmatprep.subr.mxu0 0.0
      %2955 = vmatpush1.xpose.msra.mxu0 %v2874
      %2956 = vmatprep.subr.mxu0 0.0
      %2957 = vmatpush1.xpose.msra.mxu0 %v2877
      %2958 = vmatprep.subr.mxu0 0.0
      %2959 = vmatpush1.xpose.msra.mxu0 0.0
      %2960 = vmatprep.subr.mxu0 0.0
      %2961 = vmatpush1.xpose.msra.mxu0 0.0
      %2962 = vmatprep.subr.mxu0 0.0
      %2963 = vmatpush1.xpose.msra.mxu0 0.0
      %2964 = vmatprep.subr.mxu0 0.0
      %2965 = vmatpush1.xpose.msra.mxu0 0.0
      %2966 = vmatprep.subr.mxu0 0.0
      %2967 = vmatpush1.xpose.msra.mxu0 0.0
      %2968 = vmatprep.subr.mxu0 0.0
      %2969 = vmatpush1.xpose.msra.mxu0 0.0
      %2970 = vmatprep.subr.mxu0 0.0
      %2971 = vmatpush1.xpose.msra.mxu0 0.0
      %2972 = vmatprep.subr.mxu0 0.0
      %2973 = vmatpush1.xpose.msra.mxu0 0.0
      %2974 = vmatprep.subr.mxu0 0.0
      %2975 = vmatpush1.xpose.msra.mxu0 0.0
      %2976 = vmatprep.subr.mxu0 0.0
      %2977 = vmatpush1.xpose.msra.mxu0 0.0
      %2978 = vmatprep.subr.mxu0 0.0
      %2979 = vmatpush1.xpose.msra.mxu0 0.0
      %2980 = vmatprep.subr.mxu0 0.0
      %2981 = vmatpush1.xpose.msra.mxu0 0.0
      %2982 = vmatprep.subr.mxu0 0.0
      %2983 = vmatpush1.xpose.msra.mxu0 0.0
      %2984 = vmatprep.subr.mxu0 0.0
      %2985 = vmatpush1.xpose.msra.mxu0 0.0
      %2986 = vmatprep.subr.mxu0 0.0
      %2987 = vmatpush1.xpose.msra.mxu0 0.0
      %2988 = vmatprep.subr.mxu0 0.0
      %2989 = vmatpush1.xpose.msra.mxu0 0.0
      %2990 = vmatprep.subr.mxu0 0.0
      %2991 = vmatpush1.xpose.msra.mxu0 0.0
      %2992 = vmatprep.subr.mxu0 0.0
      %2993 = vmatpush1.xpose.msra.mxu0 0.0
      %2994 = vmatprep.subr.mxu0 0.0
      %2995 = vmatpush1.xpose.msra.mxu0 0.0
      %2996 = vmatprep.subr.mxu0 0.0
      %2997 = vmatpush1.xpose.msra.mxu0 0.0
      %2998 = vmatprep.subr.mxu0 0.0
      %2999 = vmatpush1.xpose.msra.mxu0 0.0
      %3000 = vmatprep.subr.mxu0 0.0
      %3001 = vmatpush1.xpose.msra.mxu0 0.0
      %3002 = vmatprep.subr.mxu0 0.0
      %3003 = vmatpush1.xpose.msra.mxu0 0.0
      %3004 = vmatprep.subr.mxu0 0.0
      %3005 = vmatpush1.xpose.msra.mxu0 0.0
      %3006 = vmatprep.subr.mxu0 0.0
      %3007 = vmatpush1.xpose.msra.mxu0 0.0
      %3008 = vmatprep.subr.mxu0 0.0
      %3009 = vmatpush1.xpose.msra.mxu0 0.0
      %3010 = vmatprep.subr.mxu0 0.0
      %3011 = vmatpush1.xpose.msra.mxu0 0.0
      %3012 = vmatprep.subr.mxu0 0.0
      %3013 = vmatpush1.xpose.msra.mxu0 0.0
      %3014 = vmatprep.mubr.f32.mxu0 0.0
      %3015 = vmatmul.mubr.f32.gmra.mrb[0].mxu0 %v2769
      %v3016 = vpop.f32.mrb[0].mxu0
      %v3017 = vadd.f32 0.0, %v3016
      %v3018 = vpop.f32.mrb[0].mxu0
      %3019 = vdwg.mxu0
      %v3020 = vadd.f32 %v2727, %v2946
      %v3021 = vadd.f32 %v2728, %v2948
      %v3022 = vadd.f32 %v2729, %v3017
      %v3023 = vld [vmem:[%s284 + $0x24] sm:$0xff]
      %v3024 = vld [vmem:[%s284 + $0x2c] sm:$0xff]
      %v3025 = vld [vmem:[%s284 + $0x34] sm:$0xff]
      %v3026 = vld [vmem:[%s284 + $0x3c] sm:$0xff]
      %v3027 = vld [vmem:[%s284 + $0x44] sm:$0xff]
      %v3028 = vld [vmem:[%s284 + $0x4c] sm:$0xff]
      %v3029 = vld [vmem:[%s284 + $0x54] sm:$0xff]
      %v3030 = vld [vmem:[%s284 + $0x5c] sm:$0xff]
      %v3031 = vld [vmem:[%s284 + $0x64] sm:$0xff]
      %v3032 = vld [vmem:[%s284 + $0x6c] sm:$0xff]
      %v3033 = vld [vmem:[%s284 + $0x74] sm:$0xff]
      %v3034 = vld [vmem:[%s284 + $0x7c] sm:$0xff]
      %v3035 = vld [vmem:[%s284 + $0x84] sm:$0xff]
      %v3036 = vld [vmem:[%s284 + $0x8c] sm:$0xff]
      %v3037 = vld [vmem:[%s284 + $0x94] sm:$0xff]
      %v3038 = vld [vmem:[%s284 + $0x9c] sm:$0xff]
      %v3039 = vld [vmem:[%s284 + $0xa4] sm:$0xff]
      %v3040 = vld [vmem:[%s284 + $0xac] sm:$0xff]
      %v3041 = vld [vmem:[%s284 + $0xb4] sm:$0xff]
      %v3042 = vld [vmem:[%s284 + $0xbc] sm:$0xff]
      %v3043 = vld [vmem:[%s284 + $0xc4] sm:$0xff]
      %v3044 = vld [vmem:[%s284 + $0xcc] sm:$0xff]
      %v3045 = vld [vmem:[%s284 + $0xd4] sm:$0xff]
      %v3046 = vld [vmem:[%s284 + $0xdc] sm:$0xff]
      %v3047 = vld [vmem:[%s284 + $0xe4] sm:$0xff]
      %v3048 = vld [vmem:[%s284 + $0xec] sm:$0xff]
      %v3049 = vld [vmem:[%s284 + $0xf4] sm:$0xff]
      %v3050 = vld [vmem:[%s284 + $0xfc] sm:$0xff]
      %v3051 = vld [vmem:[%s284 + $0x104] sm:$0xff]
      %v3052 = vld [vmem:[%s284 + $0x10c] sm:$0xff]
      %v3053 = vld [vmem:[%s284 + $0x114] sm:$0xff]
      %v3054 = vld [vmem:[%s284 + $0x11c] sm:$0xff]
      %v3055 = vld [vmem:[%s284 + $0x124] sm:$0xff]
      %v3056 = vld [vmem:[%s284 + $0x12c] sm:$0xff]
      %v3057 = vld [vmem:[%s284 + $0x134] sm:$0xff]
      %v3058 = vld [vmem:[%s284 + $0x13c] sm:$0xff]
      %s3059 = scalar_lea.vmem %s1, 48
      %v3060 = vld [vmem:[%s3059] sm:$0xff]
      %v3062 = vsel %vm1346, %v3060, 0
      %v3065 = vsel %vm1346, %v3023, 0
      %v3068 = vsel %vm1346, %v3024, 0
      %v3071 = vsel %vm1346, %v3025, 0
      %v3074 = vsel %vm1346, %v3026, 0
      %v3077 = vsel %vm1346, %v3027, 0
      %v3080 = vsel %vm1346, %v3028, 0
      %v3083 = vsel %vm1346, %v3029, 0
      %v3086 = vsel %vm1346, %v3030, 0
      %v3089 = vsel %vm1346, %v3031, 0
      %v3092 = vsel %vm1346, %v3032, 0
      %v3095 = vsel %vm1346, %v3033, 0
      %v3098 = vsel %vm1346, %v3034, 0
      %v3101 = vsel %vm1346, %v3035, 0
      %v3104 = vsel %vm1346, %v3036, 0
      %v3107 = vsel %vm1346, %v3037, 0
      %v3110 = vsel %vm1346, %v3038, 0
      %v3113 = vsel %vm1346, %v3039, 0
      %v3116 = vsel %vm1346, %v3040, 0
      %v3119 = vsel %vm1346, %v3041, 0
      %v3122 = vsel %vm1346, %v3042, 0
      %v3125 = vsel %vm1346, %v3043, 0
      %v3128 = vsel %vm1346, %v3044, 0
      %v3131 = vsel %vm1346, %v3045, 0
      %v3134 = vsel %vm1346, %v3046, 0
      %v3137 = vsel %vm1346, %v3047, 0
      %v3140 = vsel %vm1346, %v3048, 0
      %v3143 = vsel %vm1346, %v3049, 0
      %v3146 = vsel %vm1346, %v3050, 0
      %v3149 = vsel %vm1346, %v3051, 0
      %v3152 = vsel %vm1346, %v3052, 0
      %v3155 = vsel %vm1346, %v3053, 0
      %v3158 = vsel %vm1346, %v3054, 0
      %v3161 = vsel %vm1346, %v3055, 0
      %v3164 = vsel %vm1346, %v3056, 0
      %v3167 = vsel %vm1346, %v3057, 0
      %v3170 = vsel %vm1346, %v3058, 0
      %3172 = vmatprep.subr.mxu0 0.0
      %3173 = vmatpush1.xpose.msra.mxu0 %v3065
      %3174 = vmatprep.subr.mxu0 0.0
      %3175 = vmatpush1.xpose.msra.mxu0 %v3068
      %3176 = vmatprep.subr.mxu0 0.0
      %3177 = vmatpush1.xpose.msra.mxu0 %v3071
      %3178 = vmatprep.subr.mxu0 0.0
      %3179 = vmatpush1.xpose.msra.mxu0 %v3074
      %3180 = vmatprep.subr.mxu0 0.0
      %3181 = vmatpush1.xpose.msra.mxu0 %v3077
      %3182 = vmatprep.subr.mxu0 0.0
      %3183 = vmatpush1.xpose.msra.mxu0 %v3080
      %3184 = vmatprep.subr.mxu0 0.0
      %3185 = vmatpush1.xpose.msra.mxu0 %v3083
      %3186 = vmatprep.subr.mxu0 0.0
      %3187 = vmatpush1.xpose.msra.mxu0 %v3086
      %3188 = vmatprep.subr.mxu0 0.0
      %3189 = vmatpush1.xpose.msra.mxu0 %v3089
      %3190 = vmatprep.subr.mxu0 0.0
      %3191 = vmatpush1.xpose.msra.mxu0 %v3092
      %3192 = vmatprep.subr.mxu0 0.0
      %3193 = vmatpush1.xpose.msra.mxu0 %v3095
      %3194 = vmatprep.subr.mxu0 0.0
      %3195 = vmatpush1.xpose.msra.mxu0 %v3098
      %3196 = vmatprep.subr.mxu0 0.0
      %3197 = vmatpush1.xpose.msra.mxu0 %v3101
      %3198 = vmatprep.subr.mxu0 0.0
      %3199 = vmatpush1.xpose.msra.mxu0 %v3104
      %3200 = vmatprep.subr.mxu0 0.0
      %3201 = vmatpush1.xpose.msra.mxu0 %v3107
      %3202 = vmatprep.subr.mxu0 0.0
      %3203 = vmatpush1.xpose.msra.mxu0 %v3110
      %3204 = vmatprep.subr.mxu0 0.0
      %3205 = vmatpush1.xpose.msra.mxu0 %v3113
      %3206 = vmatprep.subr.mxu0 0.0
      %3207 = vmatpush1.xpose.msra.mxu0 %v3116
      %3208 = vmatprep.subr.mxu0 0.0
      %3209 = vmatpush1.xpose.msra.mxu0 %v3119
      %3210 = vmatprep.subr.mxu0 0.0
      %3211 = vmatpush1.xpose.msra.mxu0 %v3122
      %3212 = vmatprep.subr.mxu0 0.0
      %3213 = vmatpush1.xpose.msra.mxu0 %v3125
      %3214 = vmatprep.subr.mxu0 0.0
      %3215 = vmatpush1.xpose.msra.mxu0 %v3128
      %3216 = vmatprep.subr.mxu0 0.0
      %3217 = vmatpush1.xpose.msra.mxu0 %v3131
      %3218 = vmatprep.subr.mxu0 0.0
      %3219 = vmatpush1.xpose.msra.mxu0 %v3134
      %3220 = vmatprep.subr.mxu0 0.0
      %3221 = vmatpush1.xpose.msra.mxu0 %v3137
      %3222 = vmatprep.subr.mxu0 0.0
      %3223 = vmatpush1.xpose.msra.mxu0 %v3140
      %3224 = vmatprep.subr.mxu0 0.0
      %3225 = vmatpush1.xpose.msra.mxu0 %v3143
      %3226 = vmatprep.subr.mxu0 0.0
      %3227 = vmatpush1.xpose.msra.mxu0 %v3146
      %3228 = vmatprep.subr.mxu0 0.0
      %3229 = vmatpush1.xpose.msra.mxu0 %v3149
      %3230 = vmatprep.subr.mxu0 0.0
      %3231 = vmatpush1.xpose.msra.mxu0 %v3152
      %3232 = vmatprep.subr.mxu0 0.0
      %3233 = vmatpush1.xpose.msra.mxu0 %v3155
      %3234 = vmatprep.subr.mxu0 0.0
      %3235 = vmatpush1.xpose.msra.mxu0 %v3158
      %3236 = vmatprep.mubr.f32.mxu0 0.0
      %3237 = vmatmul.mubr.f32.gmra.mrb[0].mxu0 %v3062
      %v3238 = vpop.f32.mrb[0].mxu0
      %v3239 = vadd.f32 0.0, %v3238
      %v3240 = vpop.f32.mrb[0].mxu0
      %v3241 = vadd.f32 0.0, %v3240
      %3242 = vdwg.mxu0
      %3243 = vmatprep.subr.mxu0 0.0
      %3244 = vmatpush1.xpose.msra.mxu0 %v3161
      %3245 = vmatprep.subr.mxu0 0.0
      %3246 = vmatpush1.xpose.msra.mxu0 %v3164
      %3247 = vmatprep.subr.mxu0 0.0
      %3248 = vmatpush1.xpose.msra.mxu0 %v3167
      %3249 = vmatprep.subr.mxu0 0.0
      %3250 = vmatpush1.xpose.msra.mxu0 %v3170
      %3251 = vmatprep.subr.mxu0 0.0
      %3252 = vmatpush1.xpose.msra.mxu0 0.0
      %3253 = vmatprep.subr.mxu0 0.0
      %3254 = vmatpush1.xpose.msra.mxu0 0.0
      %3255 = vmatprep.subr.mxu0 0.0
      %3256 = vmatpush1.xpose.msra.mxu0 0.0
      %3257 = vmatprep.subr.mxu0 0.0
      %3258 = vmatpush1.xpose.msra.mxu0 0.0
      %3259 = vmatprep.subr.mxu0 0.0
      %3260 = vmatpush1.xpose.msra.mxu0 0.0
      %3261 = vmatprep.subr.mxu0 0.0
      %3262 = vmatpush1.xpose.msra.mxu0 0.0
      %3263 = vmatprep.subr.mxu0 0.0
      %3264 = vmatpush1.xpose.msra.mxu0 0.0
      %3265 = vmatprep.subr.mxu0 0.0
      %3266 = vmatpush1.xpose.msra.mxu0 0.0
      %3267 = vmatprep.subr.mxu0 0.0
      %3268 = vmatpush1.xpose.msra.mxu0 0.0
      %3269 = vmatprep.subr.mxu0 0.0
      %3270 = vmatpush1.xpose.msra.mxu0 0.0
      %3271 = vmatprep.subr.mxu0 0.0
      %3272 = vmatpush1.xpose.msra.mxu0 0.0
      %3273 = vmatprep.subr.mxu0 0.0
      %3274 = vmatpush1.xpose.msra.mxu0 0.0
      %3275 = vmatprep.subr.mxu0 0.0
      %3276 = vmatpush1.xpose.msra.mxu0 0.0
      %3277 = vmatprep.subr.mxu0 0.0
      %3278 = vmatpush1.xpose.msra.mxu0 0.0
      %3279 = vmatprep.subr.mxu0 0.0
      %3280 = vmatpush1.xpose.msra.mxu0 0.0
      %3281 = vmatprep.subr.mxu0 0.0
      %3282 = vmatpush1.xpose.msra.mxu0 0.0
      %3283 = vmatprep.subr.mxu0 0.0
      %3284 = vmatpush1.xpose.msra.mxu0 0.0
      %3285 = vmatprep.subr.mxu0 0.0
      %3286 = vmatpush1.xpose.msra.mxu0 0.0
      %3287 = vmatprep.subr.mxu0 0.0
      %3288 = vmatpush1.xpose.msra.mxu0 0.0
      %3289 = vmatprep.subr.mxu0 0.0
      %3290 = vmatpush1.xpose.msra.mxu0 0.0
      %3291 = vmatprep.subr.mxu0 0.0
      %3292 = vmatpush1.xpose.msra.mxu0 0.0
      %3293 = vmatprep.subr.mxu0 0.0
      %3294 = vmatpush1.xpose.msra.mxu0 0.0
      %3295 = vmatprep.subr.mxu0 0.0
      %3296 = vmatpush1.xpose.msra.mxu0 0.0
      %3297 = vmatprep.subr.mxu0 0.0
      %3298 = vmatpush1.xpose.msra.mxu0 0.0
      %3299 = vmatprep.subr.mxu0 0.0
      %3300 = vmatpush1.xpose.msra.mxu0 0.0
      %3301 = vmatprep.subr.mxu0 0.0
      %3302 = vmatpush1.xpose.msra.mxu0 0.0
      %3303 = vmatprep.subr.mxu0 0.0
      %3304 = vmatpush1.xpose.msra.mxu0 0.0
      %3305 = vmatprep.subr.mxu0 0.0
      %3306 = vmatpush1.xpose.msra.mxu0 0.0
      %3307 = vmatprep.mubr.f32.mxu0 0.0
      %3308 = vmatmul.mubr.f32.gmra.mrb[0].mxu0 %v3062
      %v3309 = vpop.f32.mrb[0].mxu0
      %v3310 = vadd.f32 0.0, %v3309
      %v3311 = vpop.f32.mrb[0].mxu0
      %3312 = vdwg.mxu0
      %v3313 = vadd.f32 %v3020, %v3239
      %v3314 = vadd.f32 %v3021, %v3241
      %v3315 = vadd.f32 %v3022, %v3310
      %v3316 = vld [vmem:[%s284 + $0x25] sm:$0xff]
      %v3317 = vld [vmem:[%s284 + $0x2d] sm:$0xff]
      %v3318 = vld [vmem:[%s284 + $0x35] sm:$0xff]
      %v3319 = vld [vmem:[%s284 + $0x3d] sm:$0xff]
      %v3320 = vld [vmem:[%s284 + $0x45] sm:$0xff]
      %v3321 = vld [vmem:[%s284 + $0x4d] sm:$0xff]
      %v3322 = vld [vmem:[%s284 + $0x55] sm:$0xff]
      %v3323 = vld [vmem:[%s284 + $0x5d] sm:$0xff]
      %v3324 = vld [vmem:[%s284 + $0x65] sm:$0xff]
      %v3325 = vld [vmem:[%s284 + $0x6d] sm:$0xff]
      %v3326 = vld [vmem:[%s284 + $0x75] sm:$0xff]
      %v3327 = vld [vmem:[%s284 + $0x7d] sm:$0xff]
      %v3328 = vld [vmem:[%s284 + $0x85] sm:$0xff]
      %v3329 = vld [vmem:[%s284 + $0x8d] sm:$0xff]
      %v3330 = vld [vmem:[%s284 + $0x95] sm:$0xff]
      %v3331 = vld [vmem:[%s284 + $0x9d] sm:$0xff]
      %v3332 = vld [vmem:[%s284 + $0xa5] sm:$0xff]
      %v3333 = vld [vmem:[%s284 + $0xad] sm:$0xff]
      %v3334 = vld [vmem:[%s284 + $0xb5] sm:$0xff]
      %v3335 = vld [vmem:[%s284 + $0xbd] sm:$0xff]
      %v3336 = vld [vmem:[%s284 + $0xc5] sm:$0xff]
      %v3337 = vld [vmem:[%s284 + $0xcd] sm:$0xff]
      %v3338 = vld [vmem:[%s284 + $0xd5] sm:$0xff]
      %v3339 = vld [vmem:[%s284 + $0xdd] sm:$0xff]
      %v3340 = vld [vmem:[%s284 + $0xe5] sm:$0xff]
      %v3341 = vld [vmem:[%s284 + $0xed] sm:$0xff]
      %v3342 = vld [vmem:[%s284 + $0xf5] sm:$0xff]
      %v3343 = vld [vmem:[%s284 + $0xfd] sm:$0xff]
      %v3344 = vld [vmem:[%s284 + $0x105] sm:$0xff]
      %v3345 = vld [vmem:[%s284 + $0x10d] sm:$0xff]
      %v3346 = vld [vmem:[%s284 + $0x115] sm:$0xff]
      %v3347 = vld [vmem:[%s284 + $0x11d] sm:$0xff]
      %v3348 = vld [vmem:[%s284 + $0x125] sm:$0xff]
      %v3349 = vld [vmem:[%s284 + $0x12d] sm:$0xff]
      %v3350 = vld [vmem:[%s284 + $0x135] sm:$0xff]
      %v3351 = vld [vmem:[%s284 + $0x13d] sm:$0xff]
      %s3352 = scalar_lea.vmem %s1, 56
      %v3353 = vld [vmem:[%s3352] sm:$0xff]
      %v3355 = vsel %vm1346, %v3353, 0
      %v3358 = vsel %vm1346, %v3316, 0
      %v3361 = vsel %vm1346, %v3317, 0
      %v3364 = vsel %vm1346, %v3318, 0
      %v3367 = vsel %vm1346, %v3319, 0
      %v3370 = vsel %vm1346, %v3320, 0
      %v3373 = vsel %vm1346, %v3321, 0
      %v3376 = vsel %vm1346, %v3322, 0
      %v3379 = vsel %vm1346, %v3323, 0
      %v3382 = vsel %vm1346, %v3324, 0
      %v3385 = vsel %vm1346, %v3325, 0
      %v3388 = vsel %vm1346, %v3326, 0
      %v3391 = vsel %vm1346, %v3327, 0
      %v3394 = vsel %vm1346, %v3328, 0
      %v3397 = vsel %vm1346, %v3329, 0
      %v3400 = vsel %vm1346, %v3330, 0
      %v3403 = vsel %vm1346, %v3331, 0
      %v3406 = vsel %vm1346, %v3332, 0
      %v3409 = vsel %vm1346, %v3333, 0
      %v3412 = vsel %vm1346, %v3334, 0
      %v3415 = vsel %vm1346, %v3335, 0
      %v3418 = vsel %vm1346, %v3336, 0
      %v3421 = vsel %vm1346, %v3337, 0
      %v3424 = vsel %vm1346, %v3338, 0
      %v3427 = vsel %vm1346, %v3339, 0
      %v3430 = vsel %vm1346, %v3340, 0
      %v3433 = vsel %vm1346, %v3341, 0
      %v3436 = vsel %vm1346, %v3342, 0
      %v3439 = vsel %vm1346, %v3343, 0
      %v3442 = vsel %vm1346, %v3344, 0
      %v3445 = vsel %vm1346, %v3345, 0
      %v3448 = vsel %vm1346, %v3346, 0
      %v3451 = vsel %vm1346, %v3347, 0
      %v3454 = vsel %vm1346, %v3348, 0
      %v3457 = vsel %vm1346, %v3349, 0
      %v3460 = vsel %vm1346, %v3350, 0
      %v3463 = vsel %vm1346, %v3351, 0
      %3465 = vmatprep.subr.mxu0 0.0
      %3466 = vmatpush1.xpose.msra.mxu0 %v3358
      %3467 = vmatprep.subr.mxu0 0.0
      %3468 = vmatpush1.xpose.msra.mxu0 %v3361
      %3469 = vmatprep.subr.mxu0 0.0
      %3470 = vmatpush1.xpose.msra.mxu0 %v3364
      %3471 = vmatprep.subr.mxu0 0.0
      %3472 = vmatpush1.xpose.msra.mxu0 %v3367
      %3473 = vmatprep.subr.mxu0 0.0
      %3474 = vmatpush1.xpose.msra.mxu0 %v3370
      %3475 = vmatprep.subr.mxu0 0.0
      %3476 = vmatpush1.xpose.msra.mxu0 %v3373
      %3477 = vmatprep.subr.mxu0 0.0
      %3478 = vmatpush1.xpose.msra.mxu0 %v3376
      %3479 = vmatprep.subr.mxu0 0.0
      %3480 = vmatpush1.xpose.msra.mxu0 %v3379
      %3481 = vmatprep.subr.mxu0 0.0
      %3482 = vmatpush1.xpose.msra.mxu0 %v3382
      %3483 = vmatprep.subr.mxu0 0.0
      %3484 = vmatpush1.xpose.msra.mxu0 %v3385
      %3485 = vmatprep.subr.mxu0 0.0
      %3486 = vmatpush1.xpose.msra.mxu0 %v3388
      %3487 = vmatprep.subr.mxu0 0.0
      %3488 = vmatpush1.xpose.msra.mxu0 %v3391
      %3489 = vmatprep.subr.mxu0 0.0
      %3490 = vmatpush1.xpose.msra.mxu0 %v3394
      %3491 = vmatprep.subr.mxu0 0.0
      %3492 = vmatpush1.xpose.msra.mxu0 %v3397
      %3493 = vmatprep.subr.mxu0 0.0
      %3494 = vmatpush1.xpose.msra.mxu0 %v3400
      %3495 = vmatprep.subr.mxu0 0.0
      %3496 = vmatpush1.xpose.msra.mxu0 %v3403
      %3497 = vmatprep.subr.mxu0 0.0
      %3498 = vmatpush1.xpose.msra.mxu0 %v3406
      %3499 = vmatprep.subr.mxu0 0.0
      %3500 = vmatpush1.xpose.msra.mxu0 %v3409
      %3501 = vmatprep.subr.mxu0 0.0
      %3502 = vmatpush1.xpose.msra.mxu0 %v3412
      %3503 = vmatprep.subr.mxu0 0.0
      %3504 = vmatpush1.xpose.msra.mxu0 %v3415
      %3505 = vmatprep.subr.mxu0 0.0
      %3506 = vmatpush1.xpose.msra.mxu0 %v3418
      %3507 = vmatprep.subr.mxu0 0.0
      %3508 = vmatpush1.xpose.msra.mxu0 %v3421
      %3509 = vmatprep.subr.mxu0 0.0
      %3510 = vmatpush1.xpose.msra.mxu0 %v3424
      %3511 = vmatprep.subr.mxu0 0.0
      %3512 = vmatpush1.xpose.msra.mxu0 %v3427
      %3513 = vmatprep.subr.mxu0 0.0
      %3514 = vmatpush1.xpose.msra.mxu0 %v3430
      %3515 = vmatprep.subr.mxu0 0.0
      %3516 = vmatpush1.xpose.msra.mxu0 %v3433
      %3517 = vmatprep.subr.mxu0 0.0
      %3518 = vmatpush1.xpose.msra.mxu0 %v3436
      %3519 = vmatprep.subr.mxu0 0.0
      %3520 = vmatpush1.xpose.msra.mxu0 %v3439
      %3521 = vmatprep.subr.mxu0 0.0
      %3522 = vmatpush1.xpose.msra.mxu0 %v3442
      %3523 = vmatprep.subr.mxu0 0.0
      %3524 = vmatpush1.xpose.msra.mxu0 %v3445
      %3525 = vmatprep.subr.mxu0 0.0
      %3526 = vmatpush1.xpose.msra.mxu0 %v3448
      %3527 = vmatprep.subr.mxu0 0.0
      %3528 = vmatpush1.xpose.msra.mxu0 %v3451
      %3529 = vmatprep.mubr.f32.mxu0 0.0
      %3530 = vmatmul.mubr.f32.gmra.mrb[0].mxu0 %v3355
      %v3531 = vpop.f32.mrb[0].mxu0
      %v3532 = vadd.f32 0.0, %v3531
      %v3533 = vpop.f32.mrb[0].mxu0
      %v3534 = vadd.f32 0.0, %v3533
      %3535 = vdwg.mxu0
      %3536 = vmatprep.subr.mxu0 0.0
      %3537 = vmatpush1.xpose.msra.mxu0 %v3454
      %3538 = vmatprep.subr.mxu0 0.0
      %3539 = vmatpush1.xpose.msra.mxu0 %v3457
      %3540 = vmatprep.subr.mxu0 0.0
      %3541 = vmatpush1.xpose.msra.mxu0 %v3460
      %3542 = vmatprep.subr.mxu0 0.0
      %3543 = vmatpush1.xpose.msra.mxu0 %v3463
      %3544 = vmatprep.subr.mxu0 0.0
      %3545 = vmatpush1.xpose.msra.mxu0 0.0
      %3546 = vmatprep.subr.mxu0 0.0
      %3547 = vmatpush1.xpose.msra.mxu0 0.0
      %3548 = vmatprep.subr.mxu0 0.0
      %3549 = vmatpush1.xpose.msra.mxu0 0.0
      %3550 = vmatprep.subr.mxu0 0.0
      %3551 = vmatpush1.xpose.msra.mxu0 0.0
      %3552 = vmatprep.subr.mxu0 0.0
      %3553 = vmatpush1.xpose.msra.mxu0 0.0
      %3554 = vmatprep.subr.mxu0 0.0
      %3555 = vmatpush1.xpose.msra.mxu0 0.0
      %3556 = vmatprep.subr.mxu0 0.0
      %3557 = vmatpush1.xpose.msra.mxu0 0.0
      %3558 = vmatprep.subr.mxu0 0.0
      %3559 = vmatpush1.xpose.msra.mxu0 0.0
      %3560 = vmatprep.subr.mxu0 0.0
      %3561 = vmatpush1.xpose.msra.mxu0 0.0
      %3562 = vmatprep.subr.mxu0 0.0
      %3563 = vmatpush1.xpose.msra.mxu0 0.0
      %3564 = vmatprep.subr.mxu0 0.0
      %3565 = vmatpush1.xpose.msra.mxu0 0.0
      %3566 = vmatprep.subr.mxu0 0.0
      %3567 = vmatpush1.xpose.msra.mxu0 0.0
      %3568 = vmatprep.subr.mxu0 0.0
      %3569 = vmatpush1.xpose.msra.mxu0 0.0
      %3570 = vmatprep.subr.mxu0 0.0
      %3571 = vmatpush1.xpose.msra.mxu0 0.0
      %3572 = vmatprep.subr.mxu0 0.0
      %3573 = vmatpush1.xpose.msra.mxu0 0.0
      %3574 = vmatprep.subr.mxu0 0.0
      %3575 = vmatpush1.xpose.msra.mxu0 0.0
      %3576 = vmatprep.subr.mxu0 0.0
      %3577 = vmatpush1.xpose.msra.mxu0 0.0
      %3578 = vmatprep.subr.mxu0 0.0
      %3579 = vmatpush1.xpose.msra.mxu0 0.0
      %3580 = vmatprep.subr.mxu0 0.0
      %3581 = vmatpush1.xpose.msra.mxu0 0.0
      %3582 = vmatprep.subr.mxu0 0.0
      %3583 = vmatpush1.xpose.msra.mxu0 0.0
      %3584 = vmatprep.subr.mxu0 0.0
      %3585 = vmatpush1.xpose.msra.mxu0 0.0
      %3586 = vmatprep.subr.mxu0 0.0
      %3587 = vmatpush1.xpose.msra.mxu0 0.0
      %3588 = vmatprep.subr.mxu0 0.0
      %3589 = vmatpush1.xpose.msra.mxu0 0.0
      %3590 = vmatprep.subr.mxu0 0.0
      %3591 = vmatpush1.xpose.msra.mxu0 0.0
      %3592 = vmatprep.subr.mxu0 0.0
      %3593 = vmatpush1.xpose.msra.mxu0 0.0
      %3594 = vmatprep.subr.mxu0 0.0
      %3595 = vmatpush1.xpose.msra.mxu0 0.0
      %3596 = vmatprep.subr.mxu0 0.0
      %3597 = vmatpush1.xpose.msra.mxu0 0.0
      %3598 = vmatprep.subr.mxu0 0.0
      %3599 = vmatpush1.xpose.msra.mxu0 0.0
      %3600 = vmatprep.mubr.f32.mxu0 0.0
      %3601 = vmatmul.mubr.f32.gmra.mrb[0].mxu0 %v3355
      %v3602 = vpop.f32.mrb[0].mxu0
      %v3603 = vadd.f32 0.0, %v3602
      %v3604 = vpop.f32.mrb[0].mxu0
      %3605 = vdwg.mxu0
      %v3606 = vadd.f32 %v3313, %v3532
      %v3607 = vadd.f32 %v3314, %v3534
      %v3608 = vadd.f32 %v3315, %v3603
      %v3609 = vld [vmem:[%s284 + $0x26] sm:$0xff]
      %v3610 = vld [vmem:[%s284 + $0x2e] sm:$0xff]
      %v3611 = vld [vmem:[%s284 + $0x36] sm:$0xff]
      %v3612 = vld [vmem:[%s284 + $0x3e] sm:$0xff]
      %v3613 = vld [vmem:[%s284 + $0x46] sm:$0xff]
      %v3614 = vld [vmem:[%s284 + $0x4e] sm:$0xff]
      %v3615 = vld [vmem:[%s284 + $0x56] sm:$0xff]
      %v3616 = vld [vmem:[%s284 + $0x5e] sm:$0xff]
      %v3617 = vld [vmem:[%s284 + $0x66] sm:$0xff]
      %v3618 = vld [vmem:[%s284 + $0x6e] sm:$0xff]
      %v3619 = vld [vmem:[%s284 + $0x76] sm:$0xff]
      %v3620 = vld [vmem:[%s284 + $0x7e] sm:$0xff]
      %v3621 = vld [vmem:[%s284 + $0x86] sm:$0xff]
      %v3622 = vld [vmem:[%s284 + $0x8e] sm:$0xff]
      %v3623 = vld [vmem:[%s284 + $0x96] sm:$0xff]
      %v3624 = vld [vmem:[%s284 + $0x9e] sm:$0xff]
      %v3625 = vld [vmem:[%s284 + $0xa6] sm:$0xff]
      %v3626 = vld [vmem:[%s284 + $0xae] sm:$0xff]
      %v3627 = vld [vmem:[%s284 + $0xb6] sm:$0xff]
      %v3628 = vld [vmem:[%s284 + $0xbe] sm:$0xff]
      %v3629 = vld [vmem:[%s284 + $0xc6] sm:$0xff]
      %v3630 = vld [vmem:[%s284 + $0xce] sm:$0xff]
      %v3631 = vld [vmem:[%s284 + $0xd6] sm:$0xff]
      %v3632 = vld [vmem:[%s284 + $0xde] sm:$0xff]
      %v3633 = vld [vmem:[%s284 + $0xe6] sm:$0xff]
      %v3634 = vld [vmem:[%s284 + $0xee] sm:$0xff]
      %v3635 = vld [vmem:[%s284 + $0xf6] sm:$0xff]
      %v3636 = vld [vmem:[%s284 + $0xfe] sm:$0xff]
      %v3637 = vld [vmem:[%s284 + $0x106] sm:$0xff]
      %v3638 = vld [vmem:[%s284 + $0x10e] sm:$0xff]
      %v3639 = vld [vmem:[%s284 + $0x116] sm:$0xff]
      %v3640 = vld [vmem:[%s284 + $0x11e] sm:$0xff]
      %v3641 = vld [vmem:[%s284 + $0x126] sm:$0xff]
      %v3642 = vld [vmem:[%s284 + $0x12e] sm:$0xff]
      %v3643 = vld [vmem:[%s284 + $0x136] sm:$0xff]
      %v3644 = vld [vmem:[%s284 + $0x13e] sm:$0xff]
      %s3645 = scalar_lea.vmem %s1, 64
      %v3646 = vld [vmem:[%s3645] sm:$0xff]
      %v3648 = vsel %vm1346, %v3646, 0
      %v3651 = vsel %vm1346, %v3609, 0
      %v3654 = vsel %vm1346, %v3610, 0
      %v3657 = vsel %vm1346, %v3611, 0
      %v3660 = vsel %vm1346, %v3612, 0
      %v3663 = vsel %vm1346, %v3613, 0
      %v3666 = vsel %vm1346, %v3614, 0
      %v3669 = vsel %vm1346, %v3615, 0
      %v3672 = vsel %vm1346, %v3616, 0
      %v3675 = vsel %vm1346, %v3617, 0
      %v3678 = vsel %vm1346, %v3618, 0
      %v3681 = vsel %vm1346, %v3619, 0
      %v3684 = vsel %vm1346, %v3620, 0
      %v3687 = vsel %vm1346, %v3621, 0
      %v3690 = vsel %vm1346, %v3622, 0
      %v3693 = vsel %vm1346, %v3623, 0
      %v3696 = vsel %vm1346, %v3624, 0
      %v3699 = vsel %vm1346, %v3625, 0
      %v3702 = vsel %vm1346, %v3626, 0
      %v3705 = vsel %vm1346, %v3627, 0
      %v3708 = vsel %vm1346, %v3628, 0
      %v3711 = vsel %vm1346, %v3629, 0
      %v3714 = vsel %vm1346, %v3630, 0
      %v3717 = vsel %vm1346, %v3631, 0
      %v3720 = vsel %vm1346, %v3632, 0
      %v3723 = vsel %vm1346, %v3633, 0
      %v3726 = vsel %vm1346, %v3634, 0
      %v3729 = vsel %vm1346, %v3635, 0
      %v3732 = vsel %vm1346, %v3636, 0
      %v3735 = vsel %vm1346, %v3637, 0
      %v3738 = vsel %vm1346, %v3638, 0
      %v3741 = vsel %vm1346, %v3639, 0
      %v3744 = vsel %vm1346, %v3640, 0
      %v3747 = vsel %vm1346, %v3641, 0
      %v3750 = vsel %vm1346, %v3642, 0
      %v3753 = vsel %vm1346, %v3643, 0
      %v3756 = vsel %vm1346, %v3644, 0
      %3758 = vmatprep.subr.mxu0 0.0
      %3759 = vmatpush1.xpose.msra.mxu0 %v3651
      %3760 = vmatprep.subr.mxu0 0.0
      %3761 = vmatpush1.xpose.msra.mxu0 %v3654
      %3762 = vmatprep.subr.mxu0 0.0
      %3763 = vmatpush1.xpose.msra.mxu0 %v3657
      %3764 = vmatprep.subr.mxu0 0.0
      %3765 = vmatpush1.xpose.msra.mxu0 %v3660
      %3766 = vmatprep.subr.mxu0 0.0
      %3767 = vmatpush1.xpose.msra.mxu0 %v3663
      %3768 = vmatprep.subr.mxu0 0.0
      %3769 = vmatpush1.xpose.msra.mxu0 %v3666
      %3770 = vmatprep.subr.mxu0 0.0
      %3771 = vmatpush1.xpose.msra.mxu0 %v3669
      %3772 = vmatprep.subr.mxu0 0.0
      %3773 = vmatpush1.xpose.msra.mxu0 %v3672
      %3774 = vmatprep.subr.mxu0 0.0
      %3775 = vmatpush1.xpose.msra.mxu0 %v3675
      %3776 = vmatprep.subr.mxu0 0.0
      %3777 = vmatpush1.xpose.msra.mxu0 %v3678
      %3778 = vmatprep.subr.mxu0 0.0
      %3779 = vmatpush1.xpose.msra.mxu0 %v3681
      %3780 = vmatprep.subr.mxu0 0.0
      %3781 = vmatpush1.xpose.msra.mxu0 %v3684
      %3782 = vmatprep.subr.mxu0 0.0
      %3783 = vmatpush1.xpose.msra.mxu0 %v3687
      %3784 = vmatprep.subr.mxu0 0.0
      %3785 = vmatpush1.xpose.msra.mxu0 %v3690
      %3786 = vmatprep.subr.mxu0 0.0
      %3787 = vmatpush1.xpose.msra.mxu0 %v3693
      %3788 = vmatprep.subr.mxu0 0.0
      %3789 = vmatpush1.xpose.msra.mxu0 %v3696
      %3790 = vmatprep.subr.mxu0 0.0
      %3791 = vmatpush1.xpose.msra.mxu0 %v3699
      %3792 = vmatprep.subr.mxu0 0.0
      %3793 = vmatpush1.xpose.msra.mxu0 %v3702
      %3794 = vmatprep.subr.mxu0 0.0
      %3795 = vmatpush1.xpose.msra.mxu0 %v3705
      %3796 = vmatprep.subr.mxu0 0.0
      %3797 = vmatpush1.xpose.msra.mxu0 %v3708
      %3798 = vmatprep.subr.mxu0 0.0
      %3799 = vmatpush1.xpose.msra.mxu0 %v3711
      %3800 = vmatprep.subr.mxu0 0.0
      %3801 = vmatpush1.xpose.msra.mxu0 %v3714
      %3802 = vmatprep.subr.mxu0 0.0
      %3803 = vmatpush1.xpose.msra.mxu0 %v3717
      %3804 = vmatprep.subr.mxu0 0.0
      %3805 = vmatpush1.xpose.msra.mxu0 %v3720
      %3806 = vmatprep.subr.mxu0 0.0
      %3807 = vmatpush1.xpose.msra.mxu0 %v3723
      %3808 = vmatprep.subr.mxu0 0.0
      %3809 = vmatpush1.xpose.msra.mxu0 %v3726
      %3810 = vmatprep.subr.mxu0 0.0
      %3811 = vmatpush1.xpose.msra.mxu0 %v3729
      %3812 = vmatprep.subr.mxu0 0.0
      %3813 = vmatpush1.xpose.msra.mxu0 %v3732
      %3814 = vmatprep.subr.mxu0 0.0
      %3815 = vmatpush1.xpose.msra.mxu0 %v3735
      %3816 = vmatprep.subr.mxu0 0.0
      %3817 = vmatpush1.xpose.msra.mxu0 %v3738
      %3818 = vmatprep.subr.mxu0 0.0
      %3819 = vmatpush1.xpose.msra.mxu0 %v3741
      %3820 = vmatprep.subr.mxu0 0.0
      %3821 = vmatpush1.xpose.msra.mxu0 %v3744
      %3822 = vmatprep.mubr.f32.mxu0 0.0
      %3823 = vmatmul.mubr.f32.gmra.mrb[0].mxu0 %v3648
      %v3824 = vpop.f32.mrb[0].mxu0
      %v3825 = vadd.f32 0.0, %v3824
      %v3826 = vpop.f32.mrb[0].mxu0
      %v3827 = vadd.f32 0.0, %v3826
      %3828 = vdwg.mxu0
      %3829 = vmatprep.subr.mxu0 0.0
      %3830 = vmatpush1.xpose.msra.mxu0 %v3747
      %3831 = vmatprep.subr.mxu0 0.0
      %3832 = vmatpush1.xpose.msra.mxu0 %v3750
      %3833 = vmatprep.subr.mxu0 0.0
      %3834 = vmatpush1.xpose.msra.mxu0 %v3753
      %3835 = vmatprep.subr.mxu0 0.0
      %3836 = vmatpush1.xpose.msra.mxu0 %v3756
      %3837 = vmatprep.subr.mxu0 0.0
      %3838 = vmatpush1.xpose.msra.mxu0 0.0
      %3839 = vmatprep.subr.mxu0 0.0
      %3840 = vmatpush1.xpose.msra.mxu0 0.0
      %3841 = vmatprep.subr.mxu0 0.0
      %3842 = vmatpush1.xpose.msra.mxu0 0.0
      %3843 = vmatprep.subr.mxu0 0.0
      %3844 = vmatpush1.xpose.msra.mxu0 0.0
      %3845 = vmatprep.subr.mxu0 0.0
      %3846 = vmatpush1.xpose.msra.mxu0 0.0
      %3847 = vmatprep.subr.mxu0 0.0
      %3848 = vmatpush1.xpose.msra.mxu0 0.0
      %3849 = vmatprep.subr.mxu0 0.0
      %3850 = vmatpush1.xpose.msra.mxu0 0.0
      %3851 = vmatprep.subr.mxu0 0.0
      %3852 = vmatpush1.xpose.msra.mxu0 0.0
      %3853 = vmatprep.subr.mxu0 0.0
      %3854 = vmatpush1.xpose.msra.mxu0 0.0
      %3855 = vmatprep.subr.mxu0 0.0
      %3856 = vmatpush1.xpose.msra.mxu0 0.0
      %3857 = vmatprep.subr.mxu0 0.0
      %3858 = vmatpush1.xpose.msra.mxu0 0.0
      %3859 = vmatprep.subr.mxu0 0.0
      %3860 = vmatpush1.xpose.msra.mxu0 0.0
      %3861 = vmatprep.subr.mxu0 0.0
      %3862 = vmatpush1.xpose.msra.mxu0 0.0
      %3863 = vmatprep.subr.mxu0 0.0
      %3864 = vmatpush1.xpose.msra.mxu0 0.0
      %3865 = vmatprep.subr.mxu0 0.0
      %3866 = vmatpush1.xpose.msra.mxu0 0.0
      %3867 = vmatprep.subr.mxu0 0.0
      %3868 = vmatpush1.xpose.msra.mxu0 0.0
      %3869 = vmatprep.subr.mxu0 0.0
      %3870 = vmatpush1.xpose.msra.mxu0 0.0
      %3871 = vmatprep.subr.mxu0 0.0
      %3872 = vmatpush1.xpose.msra.mxu0 0.0
      %3873 = vmatprep.subr.mxu0 0.0
      %3874 = vmatpush1.xpose.msra.mxu0 0.0
      %3875 = vmatprep.subr.mxu0 0.0
      %3876 = vmatpush1.xpose.msra.mxu0 0.0
      %3877 = vmatprep.subr.mxu0 0.0
      %3878 = vmatpush1.xpose.msra.mxu0 0.0
      %3879 = vmatprep.subr.mxu0 0.0
      %3880 = vmatpush1.xpose.msra.mxu0 0.0
      %3881 = vmatprep.subr.mxu0 0.0
      %3882 = vmatpush1.xpose.msra.mxu0 0.0
      %3883 = vmatprep.subr.mxu0 0.0
      %3884 = vmatpush1.xpose.msra.mxu0 0.0
      %3885 = vmatprep.subr.mxu0 0.0
      %3886 = vmatpush1.xpose.msra.mxu0 0.0
      %3887 = vmatprep.subr.mxu0 0.0
      %3888 = vmatpush1.xpose.msra.mxu0 0.0
      %3889 = vmatprep.subr.mxu0 0.0
      %3890 = vmatpush1.xpose.msra.mxu0 0.0
      %3891 = vmatprep.subr.mxu0 0.0
      %3892 = vmatpush1.xpose.msra.mxu0 0.0
      %3893 = vmatprep.mubr.f32.mxu0 0.0
      %3894 = vmatmul.mubr.f32.gmra.mrb[0].mxu0 %v3648
      %v3895 = vpop.f32.mrb[0].mxu0
      %v3896 = vadd.f32 0.0, %v3895
      %v3897 = vpop.f32.mrb[0].mxu0
      %3898 = vdwg.mxu0
      %v3899 = vadd.f32 %v3606, %v3825
      %v3900 = vadd.f32 %v3607, %v3827
      %v3901 = vadd.f32 %v3608, %v3896
      %v3902 = vstv %s1268
      %v3903 = vmul.f32 %v3899, %v3902
      %v3904 = vmul.f32 %v3900, %v3902
      %v3905 = vmul.f32 %v3901, %v3902
      %v3906 = vld [vmem:[%s3] sm:$0xff]
      %3908 = vset.pattern.permute.xlu0 0
      %3909 = vperm.xlu0 %3908, %v3906
      %v3910 = vpop.permute.xlu0 %3909
      %v3912 = vadd.f32 %v3903, %v3910
      %v3913 = vadd.f32 %v3904, %v3910
      %v3914 = vadd.f32 %v3905, %v3910
      %3915 = vst [vmem:[%s289] sm:$0xff] %v3912
      %3916 = vst [vmem:[%s289 + $0x8] sm:$0xff] %v3913
      %vm3917 = vcmask 261120
      %3918 = vst.msk [vmem:[%s289 + $0x10] sm:$0xff] %vm3917, %v3914
      %p3919 = scmp.lt.s32.totalorder %s19, 1
      %s3920 = scalar_select %p3919, %s19, 1
      %s3921 = smul.addr %s3920, 3
      %s3922 = smul.addr %s3921, 8
      %s3923 = scalar_lea.vmem %s5, %s3922
      %p3924 = scmp.lt.s32.totalorder %s19, 1
      %s3925 = scalar_select %p3924, %s19, 1
      %s3926 = scalar_lea.vmem %s6, %s3925
      %p3927 = scmp.lt.s32.totalorder %s19, 1
      %s3928 = scalar_select %p3927, %s19, 1
      %s3929 = scalar_lea.vmem %s7, %s3928
      // Predicated region
      $region41: #{spectral_norm_conv2d.1} parent=39 // pred_check
        %p3930 = pneg %p147
      $region42: #{spectral_norm_conv2d.1} parent=39 // pred_check_branch
        %3932 = sbr.rel (%p3930) target = $region44
      $region43: #{spectral_norm_conv2d.1} parent=39 // pred_region
        _
      $region44: #{spectral_norm_conv2d.1} parent=39 // pred_fallthru
        _
      // Predicated region
      $region45: #{spectral_norm_conv2d.1} parent=39 // pred_check
        %p3933 = pneg %p173
      $region46: #{spectral_norm_conv2d.1} parent=39 // pred_check_branch
        %3935 = sbr.rel (%p3933) target = $region48
      $region47: #{spectral_norm_conv2d.1} parent=39 // pred_region
        _
      $region48: #{spectral_norm_conv2d.1} parent=39 // pred_fallthru
        _
      // Predicated region
      $region49: #{spectral_norm_conv2d.1} parent=39 // pred_check
        %p3936 = pneg %p199
      $region50: #{spectral_norm_conv2d.1} parent=39 // pred_check_branch
        %3938 = sbr.rel (%p3936) target = $region52
      $region51: #{spectral_norm_conv2d.1} parent=39 // pred_region
        _
      $region52: #{spectral_norm_conv2d.1} parent=39 // pred_fallthru
        _
    $region40: #{spectral_norm_conv2d.1} parent=5 // pred_fallthru
      _
    %p3939 = scmp.le.s32.totalorder 2, %s14
    // Predicated region
    $region53: #{spectral_norm_conv2d.1} parent=5 // pred_check
      %p3940 = pneg %p3939
    $region54: #{spectral_norm_conv2d.1} parent=5 // pred_check_branch
      %3942 = sbr.rel (%p3940) target = $region56
    $region55: #{spectral_norm_conv2d.1} parent=5 // pred_region
      %s3943 = ssub.s32 %s14, 2
      // Predicated region
      $region57: #{spectral_norm_conv2d.1} parent=55 // pred_check
        %p3944 = pneg %p153
      $region58: #{spectral_norm_conv2d.1} parent=55 // pred_check_branch
        %3946 = sbr.rel (%p3944) target = $region60
      $region59: #{spectral_norm_conv2d.1} parent=55 // pred_region
        %p3947 = scmp.lt.s32.totalorder %s20, 1
        %s3948 = scalar_select %p3947, %s20, 1
        %s3949 = smul.addr %s3948, 3
        %s3950 = smul.addr %s3949, 8
        %s3951 = scalar_lea.vmem %s5, %s3950
      $region60: #{spectral_norm_conv2d.1} parent=55 // pred_fallthru
        _
      // Predicated region
      $region61: #{spectral_norm_conv2d.1} parent=55 // pred_check
        %p3952 = pneg %p179
      $region62: #{spectral_norm_conv2d.1} parent=55 // pred_check_branch
        %3954 = sbr.rel (%p3952) target = $region64
      $region63: #{spectral_norm_conv2d.1} parent=55 // pred_region
        %p3955 = scmp.lt.s32.totalorder %s20, 1
        %s3956 = scalar_select %p3955, %s20, 1
        %s3957 = scalar_lea.vmem %s6, %s3956
      $region64: #{spectral_norm_conv2d.1} parent=55 // pred_fallthru
        _
      // Predicated region
      $region65: #{spectral_norm_conv2d.1} parent=55 // pred_check
        %p3958 = pneg %p205
      $region66: #{spectral_norm_conv2d.1} parent=55 // pred_check_branch
        %3960 = sbr.rel (%p3958) target = $region68
      $region67: #{spectral_norm_conv2d.1} parent=55 // pred_region
        %p3961 = scmp.lt.s32.totalorder %s20, 1
        %s3962 = scalar_select %p3961, %s20, 1
        %s3963 = scalar_lea.vmem %s7, %s3962
      $region68: #{spectral_norm_conv2d.1} parent=55 // pred_fallthru
        _
    $region56: #{spectral_norm_conv2d.1} parent=5 // pred_fallthru
      _
  $region6: #{spectral_norm_conv2d.1} parent=0 // loop_footer
    %s18 = sadd.s32 1, %s14
  $region7: #{spectral_norm_conv2d.1} parent=0 // loop_footer_branch
    %13 = sbr.rel target = $region3
  $region8: #{spectral_norm_conv2d.1} parent=0 // loop_exit
    _

</llo_original>
